<compile_context>
chip_gen: v6e
topology: v6e:2x2x1
jax: 0.10.0
libtpu: 0.0.40
codegen_flags: <defaults>
</compile_context>

<pallas_src>
import functools

import jax
import jax.numpy as jnp
import numpy as np
from jax.experimental import pallas as pl
from jax.experimental.pallas import tpu as pltpu


def _round_up(x, m):
    return (x + m - 1) // m * m


def bottleneck_kernel(x_ref, w1_ref, s1_ref, b1_ref,
                      w2_ref, s2_ref, b2_ref,
                      w3_ref, s3_ref, b3_ref,
                      o_ref, pad_ref,
                      *, TH, H, W, Cin, Cout, Cp, LPAD):
    t = pl.program_id(1)
    n_t = pl.num_programs(1)
    row0 = pl.multiple_of(t * TH, TH)

    # Rows needed for conv2's 1-row halo: row0-1 .. row0+TH (clamped; out-of-
    # image rows are zero-masked AFTER conv1+bn1+relu, matching zero padding
    # of the conv1 output at the true image boundary).
    top_src = jnp.maximum(row0 - 1, 0)
    bot_src = jnp.minimum(row0 + TH, H - 1)
    x_top = x_ref[0, pl.ds(top_src, 1), :, :]      # (1, W, Cin)  f32
    x_mid = x_ref[0, pl.ds(row0, TH), :, :]        # (TH, W, Cin) f32
    x_bot = x_ref[0, pl.ds(bot_src, 1), :, :]      # (1, W, Cin)  f32

    def conv1_bn_relu(x2d):                        # (rows, Cin) f32 -> (rows, Cp) f32
        xb = x2d.astype(jnp.bfloat16)
        xb = jnp.pad(xb, ((0, 0), (0, Cp - Cin)))  # lane-pad in-kernel (cheap, VMEM only)
        h = jnp.dot(xb, w1_ref[...], preferred_element_type=jnp.float32)
        return jnp.maximum(h * s1_ref[...] + b1_ref[...], 0.0)

    top_keep = (t > 0).astype(jnp.float32)
    bot_keep = (t < n_t - 1).astype(jnp.float32)
    h1_top = (conv1_bn_relu(x_top.reshape(W, Cin)) * top_keep).astype(jnp.bfloat16)
    h1_mid = conv1_bn_relu(x_mid.reshape(TH * W, Cin)).astype(jnp.bfloat16)
    h1_bot = (conv1_bn_relu(x_bot.reshape(W, Cin)) * bot_keep).astype(jnp.bfloat16)

    # Build the zero-padded halo slab and store it flat (one contiguous store).
    h1 = jnp.concatenate([h1_top, h1_mid, h1_bot], axis=0)       # ((TH+2)*W, Cp)
    h1 = h1.reshape(TH + 2, W, Cp)
    h1 = jnp.pad(h1, ((0, 0), (1, 1), (0, 0)))                   # zero left/right cols
    SLAB = (TH + 2) * (W + 2)
    pad_ref[pl.ds(0, SLAB), :] = h1.reshape(SLAB, Cp)
    pad_ref[pl.ds(SLAB, LPAD - SLAB), :] = jnp.zeros((LPAD - SLAB, Cp), jnp.bfloat16)

    # conv2 (3x3) as 9 contiguous flat-slab taps; acc starts from the first dot.
    L = TH * (W + 2)
    acc = None
    for dy in range(3):
        for dx in range(3):
            win = pad_ref[pl.ds(dy * (W + 2) + dx, L), :]        # contiguous window
            d = jnp.dot(win, w2_ref[dy, dx], preferred_element_type=jnp.float32)
            acc = d if acc is None else acc + d
    h2 = jnp.maximum(acc * s2_ref[...] + b2_ref[...], 0.0).astype(jnp.bfloat16)
    h2 = h2.reshape(TH, W + 2, Cp)[:, :W, :].reshape(TH * W, Cp)  # drop 2 junk cols once

    # conv3 (1x1) + bn3 + residual add + relu; emit exactly Cout lanes.
    h3 = jnp.dot(h2, w3_ref[...], preferred_element_type=jnp.float32)   # (TH*W, Cout)
    h3 = h3 * s3_ref[...] + b3_ref[...]
    res = x_mid.reshape(TH * W, Cin)                                     # f32 residual
    out = jnp.maximum(h3 + res, 0.0)
    o_ref[...] = out.reshape(1, TH, W, Cout).astype(o_ref.dtype)


def bottleneck(x_nhwc, w1, s1, b1, w2, s2, b2, w3, s3, b3, *, tile_h=8):
    N, H, W, Cin = x_nhwc.shape
    Cmid = w1.shape[1]
    Cout = w3.shape[1]
    # TODO(synk): stride>1 / downsample not supported; identity residual only.
    assert Cout == Cin, "identity residual requires inplanes == planes * expansion"

    Cp = _round_up(max(Cin, Cmid), 128)            # lane-dense width for MXU operands
    TH = tile_h if (H % tile_h == 0 and H >= tile_h) else H
    nT = H // TH
    SLAB = (TH + 2) * (W + 2)
    LPAD = _round_up(SLAB + 2, 8)                  # +2: last taps read 2 rows past SLAB

    x = x_nhwc.astype(jnp.float32)                 # NO channel padding of x (saves HBM passes)
    w1p = jnp.pad(w1, ((0, Cp - Cin), (0, Cp - Cmid))).astype(jnp.bfloat16)
    w2p = jnp.pad(w2, ((0, 0), (0, 0),
                       (0, Cp - Cmid), (0, Cp - Cmid))).astype(jnp.bfloat16)
    w3p = jnp.pad(w3, ((0, Cp - Cmid), (0, 0))).astype(jnp.bfloat16)   # (Cp, Cout)
    pad_c = lambda a: jnp.pad(a, ((0, 0), (0, Cp - a.shape[-1])))
    s1p, b1p = pad_c(s1), pad_c(b1)
    s2p, b2p = pad_c(s2), pad_c(b2)
    s3p, b3p = s3, b3                              # kept at true Cout width

    def const_spec(shape):
        nd = len(shape)
        return pl.BlockSpec(shape, lambda n, t, nd=nd: (0,) * nd)

    kernel = functools.partial(bottleneck_kernel, TH=TH, H=H, W=W,
                               Cin=Cin, Cout=Cout, Cp=Cp, LPAD=LPAD)

    return pl.pallas_call(
        kernel,
        out_shape=jax.ShapeDtypeStruct((N, H, W, Cout), x_nhwc.dtype),
        grid_spec=pltpu.PrefetchScalarGridSpec(
            num_scalar_prefetch=0,
            grid=(N, nT),
            in_specs=[
                # Full image resident across the h-tile axis (no re-fetch per t).
                pl.BlockSpec((1, H, W, Cin), lambda n, t: (n, 0, 0, 0)),
                const_spec(w1p.shape), const_spec(s1p.shape), const_spec(b1p.shape),
                const_spec(w2p.shape), const_spec(s2p.shape), const_spec(b2p.shape),
                const_spec(w3p.shape), const_spec(s3p.shape), const_spec(b3p.shape),
            ],
            out_specs=pl.BlockSpec((1, TH, W, Cout), lambda n, t: (n, t, 0, 0)),
            # Flat bf16 zero-padded halo slab for the 3x3 conv.
            scratch_shapes=[pltpu.VMEM((LPAD, Cp), jnp.bfloat16)],
        ),
        compiler_params=pltpu.CompilerParams(
            dimension_semantics=("parallel", "parallel"),
            vmem_limit_bytes=32 * 1024 * 1024),
    )(x, w1p, s1p, b1p, w2p, s2p, b2p, w3p, s3p, b3p)


def ref_bottleneck(x, w1, s1, b1, w2, s2, b2, w3, s3, b3):
    """Pure-JAX reference with the same precision policy as the kernel
    (bf16 matmul operands, f32 accumulation, f32 BN/ReLU/residual)."""
    xf = x.astype(jnp.float32)

    def mm(a, w):
        return jax.lax.dot_general(
            a.astype(jnp.bfloat16), w.astype(jnp.bfloat16),
            (((a.ndim - 1,), (0,)), ((), ())),
            preferred_element_type=jnp.float32)

    h = mm(xf, w1)
    h = jnp.maximum(h * s1 + b1, 0.0)
    h = jax.lax.conv_general_dilated(
        h.astype(jnp.bfloat16), w2.astype(jnp.bfloat16),
        window_strides=(1, 1), padding='SAME',
        dimension_numbers=('NHWC', 'HWIO', 'NHWC'),
        preferred_element_type=jnp.float32)
    h = jnp.maximum(h * s2 + b2, 0.0)
    h = mm(h, w3)
    h = h * s3 + b3
    return jnp.maximum(h + xf, 0.0)


def fold_bn(key, c, eps=1e-5):
    k1, k2, k3, k4 = jax.random.split(key, 4)
    gamma = 1.0 + 0.1 * jax.random.normal(k1, (c,), jnp.float32)
    beta = 0.1 * jax.random.normal(k2, (c,), jnp.float32)
    mean = 0.1 * jax.random.normal(k3, (c,), jnp.float32)
    var = 1.0 + 0.1 * jnp.abs(jax.random.normal(k4, (c,), jnp.float32))
    scale = gamma / jnp.sqrt(var + eps)
    bias = beta - mean * scale
    return scale.reshape(1, c), bias.reshape(1, c)


def _make_case(key, N, H, W, inplanes, planes):
    cout = planes * 4
    kx, kw1, kw2, kw3, kb1, kb2, kb3 = jax.random.split(key, 7)
    x = jax.random.normal(kx, (N, H, W, inplanes), jnp.float32)          # NHWC
    w1 = 0.2 * jax.random.normal(kw1, (inplanes, planes), jnp.float32)   # conv1 1x1
    w2 = 0.2 * jax.random.normal(kw2, (3, 3, planes, planes), jnp.float32)  # 3x3 HWIO
    w3 = 0.2 * jax.random.normal(kw3, (planes, cout), jnp.float32)       # conv3 1x1
    s1, b1 = fold_bn(kb1, planes)
    s2, b2 = fold_bn(kb2, planes)
    s3, b3 = fold_bn(kb3, cout)
    return (x, w1, s1, b1, w2, s2, b2, w3, s3, b3)


if __name__ == "__main__":
    key = jax.random.PRNGKey(0)
    k1, k2 = jax.random.split(key, 2)

    # Case 1: module config inplanes=16, planes=4 (expansion=4 -> out 16).
    args1 = _make_case(k1, N=2, H=16, W=16, inplanes=16, planes=4)
    # Case 2: lane-dense channels (multiple of 128) to exercise unpadded path.
    args2 = _make_case(k2, N=1, H=16, W=16, inplanes=128, planes=32)

    for args in (args1, args2):
        out = jax.block_until_ready(bottleneck(*args))
        ref = ref_bottleneck(*args)
        np.testing.assert_allclose(np.asarray(out), np.asarray(ref),
                                   rtol=1e-3, atol=1e-3)

    print("KERNEL_OK")
</pallas_src>

<mosaic_0001>
module attributes {stable_mosaic.version = 11 : i64} {
  func.func @bottleneck_kernel(%arg0: i32, %arg1: i32, %arg2: memref<1x16x16x16xf32, #tpu.memory_space<vmem>>, %arg3: memref<128x128xbf16, #tpu.memory_space<vmem>>, %arg4: memref<1x128xf32, #tpu.memory_space<vmem>>, %arg5: memref<1x128xf32, #tpu.memory_space<vmem>>, %arg6: memref<3x3x128x128xbf16, #tpu.memory_space<vmem>>, %arg7: memref<1x128xf32, #tpu.memory_space<vmem>>, %arg8: memref<1x128xf32, #tpu.memory_space<vmem>>, %arg9: memref<128x16xbf16, #tpu.memory_space<vmem>>, %arg10: memref<1x16xf32, #tpu.memory_space<vmem>>, %arg11: memref<1x16xf32, #tpu.memory_space<vmem>>, %arg12: memref<1x8x16x16xf32, #tpu.memory_space<vmem>>, %arg13: memref<184x128xbf16, #tpu.memory_space<vmem>>) attributes {dimension_semantics = [#tpu.dimension_semantics<parallel>, #tpu.dimension_semantics<parallel>], iteration_bounds = array<i64: 2, 2>, scalar_prefetch = 0 : i64, scratch_operands = 1 : i64, tpu.core_type = #tpu.core_type<tc>, window_params = [{transform_indices = @transform_0, window_bounds = array<i64: 1, 16, 16, 16>}, {pipeline_mode = #tpu.pipeline_mode<synchronous>, transform_indices = @transform_1, window_bounds = array<i64: 128, 128>}, {pipeline_mode = #tpu.pipeline_mode<synchronous>, transform_indices = @transform_2, window_bounds = array<i64: 1, 128>}, {pipeline_mode = #tpu.pipeline_mode<synchronous>, transform_indices = @transform_3, window_bounds = array<i64: 1, 128>}, {pipeline_mode = #tpu.pipeline_mode<synchronous>, transform_indices = @transform_4, window_bounds = array<i64: 3, 3, 128, 128>}, {pipeline_mode = #tpu.pipeline_mode<synchronous>, transform_indices = @transform_5, window_bounds = array<i64: 1, 128>}, {pipeline_mode = #tpu.pipeline_mode<synchronous>, transform_indices = @transform_6, window_bounds = array<i64: 1, 128>}, {pipeline_mode = #tpu.pipeline_mode<synchronous>, transform_indices = @transform_7, window_bounds = array<i64: 128, 16>}, {pipeline_mode = #tpu.pipeline_mode<synchronous>, transform_indices = @transform_8, window_bounds = array<i64: 1, 16>}, {pipeline_mode = #tpu.pipeline_mode<synchronous>, transform_indices = @transform_9, window_bounds = array<i64: 1, 16>}, {transform_indices = @transform_10, window_bounds = array<i64: 1, 8, 16, 16>}]} {
    %c8_i32 = arith.constant 8 : i32
    %0 = arith.muli %arg1, %c8_i32 : i32
    %1 = tpu.assume_multiple %0, 8 : i32
    %c1_i32 = arith.constant 1 : i32
    %2 = arith.subi %1, %c1_i32 : i32
    %c0_i32 = arith.constant 0 : i32
    %3 = arith.maxsi %2, %c0_i32 : i32
    %c8_i32_0 = arith.constant 8 : i32
    %4 = arith.addi %1, %c8_i32_0 : i32
    %c15_i32 = arith.constant 15 : i32
    %5 = arith.minsi %4, %c15_i32 : i32
    %c0 = arith.constant 0 : index
    %6 = arith.index_cast %3 : i32 to index
    %c0_1 = arith.constant 0 : index
    %c0_2 = arith.constant 0 : index
    %7 = vector.load %arg2[%c0, %6, %c0_1, %c0_2] : memref<1x16x16x16xf32, #tpu.memory_space<vmem>>, vector<1x1x16x16xf32>
    %8 = vector.shape_cast %7 : vector<1x1x16x16xf32> to vector<1x16x16xf32>
    %c0_3 = arith.constant 0 : index
    %9 = arith.index_cast %1 : i32 to index
    %c0_4 = arith.constant 0 : index
    %c0_5 = arith.constant 0 : index
    %10 = vector.load %arg2[%c0_3, %9, %c0_4, %c0_5] : memref<1x16x16x16xf32, #tpu.memory_space<vmem>>, vector<1x8x16x16xf32>
    %11 = vector.shape_cast %10 : vector<1x8x16x16xf32> to vector<8x16x16xf32>
    %c0_6 = arith.constant 0 : index
    %12 = arith.index_cast %5 : i32 to index
    %c0_7 = arith.constant 0 : index
    %c0_8 = arith.constant 0 : index
    %13 = vector.load %arg2[%c0_6, %12, %c0_7, %c0_8] : memref<1x16x16x16xf32, #tpu.memory_space<vmem>>, vector<1x1x16x16xf32>
    %14 = vector.shape_cast %13 : vector<1x1x16x16xf32> to vector<1x16x16xf32>
    %c0_i32_9 = arith.constant 0 : i32
    %15 = arith.cmpi sgt, %arg1, %c0_i32_9 : i32
    %16 = arith.extui %15 : i1 to i32
    %17 = arith.sitofp %16 : i32 to f32
    %c1_i32_10 = arith.constant 1 : i32
    %18 = arith.cmpi slt, %arg1, %c1_i32_10 : i32
    %19 = arith.extui %18 : i1 to i32
    %20 = arith.sitofp %19 : i32 to f32
    %21 = vector.shape_cast %8 : vector<1x16x16xf32> to vector<16x16xf32>
    %22 = arith.truncf %21 : vector<16x16xf32> to vector<16x16xbf16>
    %c0_i32_11 = arith.constant 0 : i32
    %23 = arith.sitofp %c0_i32_11 : i32 to bf16
    %24 = vector.broadcast %23 : bf16 to vector<16x112xbf16>
    %25 = tpu.concatenate %22, %24 in 1 : vector<16x16xbf16>, vector<16x112xbf16> -> vector<16x128xbf16>
    %c0_12 = arith.constant 0 : index
    %c0_13 = arith.constant 0 : index
    %26 = vector.load %arg3[%c0_12, %c0_13] : memref<128x128xbf16, #tpu.memory_space<vmem>>, vector<128x128xbf16>
    %cst = arith.constant dense<0.000000e+00> : vector<16x128xf32>
    %27 = tpu.matmul %25, %26, %cst {dimension_numbers = #tpu.dot_dimension_numbers<[1], [0], [0], [1], [0, 0, 1, 1], [], []>} : vector<16x128xbf16>, vector<128x128xbf16>, vector<16x128xf32> -> vector<16x128xf32>
    %c0_14 = arith.constant 0 : index
    %c0_15 = arith.constant 0 : index
    %28 = vector.load %arg4[%c0_14, %c0_15] : memref<1x128xf32, #tpu.memory_space<vmem>>, vector<1x128xf32>
    %29 = vector.broadcast %28 : vector<1x128xf32> to vector<16x128xf32>
    %30 = arith.mulf %27, %29 : vector<16x128xf32>
    %c0_16 = arith.constant 0 : index
    %c0_17 = arith.constant 0 : index
    %31 = vector.load %arg5[%c0_16, %c0_17] : memref<1x128xf32, #tpu.memory_space<vmem>>, vector<1x128xf32>
    %32 = vector.broadcast %31 : vector<1x128xf32> to vector<16x128xf32>
    %33 = arith.addf %30, %32 : vector<16x128xf32>
    %cst_18 = arith.constant 0.000000e+00 : f32
    %34 = vector.broadcast %cst_18 : f32 to vector<16x128xf32>
    %35 = arith.maximumf %33, %34 : vector<16x128xf32>
    %36 = vector.broadcast %17 : f32 to vector<16x128xf32>
    %37 = arith.mulf %35, %36 : vector<16x128xf32>
    %38 = arith.truncf %37 : vector<16x128xf32> to vector<16x128xbf16>
    %39 = vector.shape_cast %11 : vector<8x16x16xf32> to vector<128x16xf32>
    %40 = arith.truncf %39 : vector<128x16xf32> to vector<128x16xbf16>
    %c0_i32_19 = arith.constant 0 : i32
    %41 = arith.sitofp %c0_i32_19 : i32 to bf16
    %42 = vector.broadcast %41 : bf16 to vector<128x112xbf16>
    %43 = tpu.concatenate %40, %42 in 1 : vector<128x16xbf16>, vector<128x112xbf16> -> vector<128x128xbf16>
    %c0_20 = arith.constant 0 : index
    %c0_21 = arith.constant 0 : index
    %44 = vector.load %arg3[%c0_20, %c0_21] : memref<128x128xbf16, #tpu.memory_space<vmem>>, vector<128x128xbf16>
    %cst_22 = arith.constant dense<0.000000e+00> : vector<128x128xf32>
    %45 = tpu.matmul %43, %44, %cst_22 {dimension_numbers = #tpu.dot_dimension_numbers<[1], [0], [0], [1], [0, 0, 1, 1], [], []>} : vector<128x128xbf16>, vector<128x128xbf16>, vector<128x128xf32> -> vector<128x128xf32>
    %c0_23 = arith.constant 0 : index
    %c0_24 = arith.constant 0 : index
    %46 = vector.load %arg4[%c0_23, %c0_24] : memref<1x128xf32, #tpu.memory_space<vmem>>, vector<1x128xf32>
    %47 = vector.broadcast %46 : vector<1x128xf32> to vector<128x128xf32>
    %48 = arith.mulf %45, %47 : vector<128x128xf32>
    %c0_25 = arith.constant 0 : index
    %c0_26 = arith.constant 0 : index
    %49 = vector.load %arg5[%c0_25, %c0_26] : memref<1x128xf32, #tpu.memory_space<vmem>>, vector<1x128xf32>
    %50 = vector.broadcast %49 : vector<1x128xf32> to vector<128x128xf32>
    %51 = arith.addf %48, %50 : vector<128x128xf32>
    %cst_27 = arith.constant 0.000000e+00 : f32
    %52 = vector.broadcast %cst_27 : f32 to vector<128x128xf32>
    %53 = arith.maximumf %51, %52 : vector<128x128xf32>
    %54 = arith.truncf %53 : vector<128x128xf32> to vector<128x128xbf16>
    %55 = vector.shape_cast %14 : vector<1x16x16xf32> to vector<16x16xf32>
    %56 = arith.truncf %55 : vector<16x16xf32> to vector<16x16xbf16>
    %c0_i32_28 = arith.constant 0 : i32
    %57 = arith.sitofp %c0_i32_28 : i32 to bf16
    %58 = vector.broadcast %57 : bf16 to vector<16x112xbf16>
    %59 = tpu.concatenate %56, %58 in 1 : vector<16x16xbf16>, vector<16x112xbf16> -> vector<16x128xbf16>
    %c0_29 = arith.constant 0 : index
    %c0_30 = arith.constant 0 : index
    %60 = vector.load %arg3[%c0_29, %c0_30] : memref<128x128xbf16, #tpu.memory_space<vmem>>, vector<128x128xbf16>
    %cst_31 = arith.constant dense<0.000000e+00> : vector<16x128xf32>
    %61 = tpu.matmul %59, %60, %cst_31 {dimension_numbers = #tpu.dot_dimension_numbers<[1], [0], [0], [1], [0, 0, 1, 1], [], []>} : vector<16x128xbf16>, vector<128x128xbf16>, vector<16x128xf32> -> vector<16x128xf32>
    %c0_32 = arith.constant 0 : index
    %c0_33 = arith.constant 0 : index
    %62 = vector.load %arg4[%c0_32, %c0_33] : memref<1x128xf32, #tpu.memory_space<vmem>>, vector<1x128xf32>
    %63 = vector.broadcast %62 : vector<1x128xf32> to vector<16x128xf32>
    %64 = arith.mulf %61, %63 : vector<16x128xf32>
    %c0_34 = arith.constant 0 : index
    %c0_35 = arith.constant 0 : index
    %65 = vector.load %arg5[%c0_34, %c0_35] : memref<1x128xf32, #tpu.memory_space<vmem>>, vector<1x128xf32>
    %66 = vector.broadcast %65 : vector<1x128xf32> to vector<16x128xf32>
    %67 = arith.addf %64, %66 : vector<16x128xf32>
    %cst_36 = arith.constant 0.000000e+00 : f32
    %68 = vector.broadcast %cst_36 : f32 to vector<16x128xf32>
    %69 = arith.maximumf %67, %68 : vector<16x128xf32>
    %70 = vector.broadcast %20 : f32 to vector<16x128xf32>
    %71 = arith.mulf %69, %70 : vector<16x128xf32>
    %72 = arith.truncf %71 : vector<16x128xf32> to vector<16x128xbf16>
    %73 = tpu.concatenate %38, %54, %72 in 0 : vector<16x128xbf16>, vector<128x128xbf16>, vector<16x128xbf16> -> vector<160x128xbf16>
    %74 = vector.shape_cast %73 : vector<160x128xbf16> to vector<10x16x128xbf16>
    %c0_i32_37 = arith.constant 0 : i32
    %75 = arith.sitofp %c0_i32_37 : i32 to bf16
    %76 = vector.broadcast %75 : bf16 to vector<10x1x128xbf16>
    %77 = tpu.concatenate %76, %74 in 1 : vector<10x1x128xbf16>, vector<10x16x128xbf16> -> vector<10x17x128xbf16>
    %78 = vector.broadcast %75 : bf16 to vector<10x1x128xbf16>
    %79 = tpu.concatenate %77, %78 in 1 : vector<10x17x128xbf16>, vector<10x1x128xbf16> -> vector<10x18x128xbf16>
    %80 = vector.shape_cast %79 : vector<10x18x128xbf16> to vector<180x128xbf16>
    %c0_38 = arith.constant 0 : index
    %c0_39 = arith.constant 0 : index
    %81 = vector.load %arg13[%c0_38, %c0_39] : memref<184x128xbf16, #tpu.memory_space<vmem>>, vector<180x128xbf16>
    tpu.vector_store %arg13[%c0_38, %c0_39], %80 {strides = array<i32>} : memref<184x128xbf16, #tpu.memory_space<vmem>>, vector<180x128xbf16>,
    %cst_40 = arith.constant 0.000000e+00 : bf16
    %82 = vector.broadcast %cst_40 : bf16 to vector<4x128xbf16>
    %c180 = arith.constant 180 : index
    %c0_41 = arith.constant 0 : index
    %83 = vector.load %arg13[%c180, %c0_41] : memref<184x128xbf16, #tpu.memory_space<vmem>>, vector<4x128xbf16>
    tpu.vector_store %arg13[%c180, %c0_41], %82 {strides = array<i32>} : memref<184x128xbf16, #tpu.memory_space<vmem>>, vector<4x128xbf16>,
    %c0_42 = arith.constant 0 : index
    %c0_43 = arith.constant 0 : index
    %84 = vector.load %arg13[%c0_42, %c0_43] : memref<184x128xbf16, #tpu.memory_space<vmem>>, vector<144x128xbf16>
    %c0_44 = arith.constant 0 : index
    %c0_45 = arith.constant 0 : index
    %c0_46 = arith.constant 0 : index
    %c0_47 = arith.constant 0 : index
    %85 = vector.load %arg6[%c0_44, %c0_45, %c0_46, %c0_47] : memref<3x3x128x128xbf16, #tpu.memory_space<vmem>>, vector<1x1x128x128xbf16>
    %86 = vector.shape_cast %85 : vector<1x1x128x128xbf16> to vector<128x128xbf16>
    %cst_48 = arith.constant dense<0.000000e+00> : vector<144x128xf32>
    %87 = tpu.matmul %84, %86, %cst_48 {dimension_numbers = #tpu.dot_dimension_numbers<[1], [0], [0], [1], [0, 0, 1, 1], [], []>} : vector<144x128xbf16>, vector<128x128xbf16>, vector<144x128xf32> -> vector<144x128xf32>
    %c1 = arith.constant 1 : index
    %c0_49 = arith.constant 0 : index
    %88 = vector.load %arg13[%c1, %c0_49] : memref<184x128xbf16, #tpu.memory_space<vmem>>, vector<144x128xbf16>
    %c0_50 = arith.constant 0 : index
    %c1_51 = arith.constant 1 : index
    %c0_52 = arith.constant 0 : index
    %c0_53 = arith.constant 0 : index
    %89 = vector.load %arg6[%c0_50, %c1_51, %c0_52, %c0_53] : memref<3x3x128x128xbf16, #tpu.memory_space<vmem>>, vector<1x1x128x128xbf16>
    %90 = vector.shape_cast %89 : vector<1x1x128x128xbf16> to vector<128x128xbf16>
    %cst_54 = arith.constant dense<0.000000e+00> : vector<144x128xf32>
    %91 = tpu.matmul %88, %90, %cst_54 {dimension_numbers = #tpu.dot_dimension_numbers<[1], [0], [0], [1], [0, 0, 1, 1], [], []>} : vector<144x128xbf16>, vector<128x128xbf16>, vector<144x128xf32> -> vector<144x128xf32>
    %92 = arith.addf %87, %91 : vector<144x128xf32>
    %c2 = arith.constant 2 : index
    %c0_55 = arith.constant 0 : index
    %93 = vector.load %arg13[%c2, %c0_55] : memref<184x128xbf16, #tpu.memory_space<vmem>>, vector<144x128xbf16>
    %c0_56 = arith.constant 0 : index
    %c2_57 = arith.constant 2 : index
    %c0_58 = arith.constant 0 : index
    %c0_59 = arith.constant 0 : index
    %94 = vector.load %arg6[%c0_56, %c2_57, %c0_58, %c0_59] : memref<3x3x128x128xbf16, #tpu.memory_space<vmem>>, vector<1x1x128x128xbf16>
    %95 = vector.shape_cast %94 : vector<1x1x128x128xbf16> to vector<128x128xbf16>
    %cst_60 = arith.constant dense<0.000000e+00> : vector<144x128xf32>
    %96 = tpu.matmul %93, %95, %cst_60 {dimension_numbers = #tpu.dot_dimension_numbers<[1], [0], [0], [1], [0, 0, 1, 1], [], []>} : vector<144x128xbf16>, vector<128x128xbf16>, vector<144x128xf32> -> vector<144x128xf32>
    %97 = arith.addf %92, %96 : vector<144x128xf32>
    %c18 = arith.constant 18 : index
    %c0_61 = arith.constant 0 : index
    %98 = vector.load %arg13[%c18, %c0_61] : memref<184x128xbf16, #tpu.memory_space<vmem>>, vector<144x128xbf16>
    %c1_62 = arith.constant 1 : index
    %c0_63 = arith.constant 0 : index
    %c0_64 = arith.constant 0 : index
    %c0_65 = arith.constant 0 : index
    %99 = vector.load %arg6[%c1_62, %c0_63, %c0_64, %c0_65] : memref<3x3x128x128xbf16, #tpu.memory_space<vmem>>, vector<1x1x128x128xbf16>
    %100 = vector.shape_cast %99 : vector<1x1x128x128xbf16> to vector<128x128xbf16>
    %cst_66 = arith.constant dense<0.000000e+00> : vector<144x128xf32>
    %101 = tpu.matmul %98, %100, %cst_66 {dimension_numbers = #tpu.dot_dimension_numbers<[1], [0], [0], [1], [0, 0, 1, 1], [], []>} : vector<144x128xbf16>, vector<128x128xbf16>, vector<144x128xf32> -> vector<144x128xf32>
    %102 = arith.addf %97, %101 : vector<144x128xf32>
    %c19 = arith.constant 19 : index
    %c0_67 = arith.constant 0 : index
    %103 = vector.load %arg13[%c19, %c0_67] : memref<184x128xbf16, #tpu.memory_space<vmem>>, vector<144x128xbf16>
    %c1_68 = arith.constant 1 : index
    %c1_69 = arith.constant 1 : index
    %c0_70 = arith.constant 0 : index
    %c0_71 = arith.constant 0 : index
    %104 = vector.load %arg6[%c1_68, %c1_69, %c0_70, %c0_71] : memref<3x3x128x128xbf16, #tpu.memory_space<vmem>>, vector<1x1x128x128xbf16>
    %105 = vector.shape_cast %104 : vector<1x1x128x128xbf16> to vector<128x128xbf16>
    %cst_72 = arith.constant dense<0.000000e+00> : vector<144x128xf32>
    %106 = tpu.matmul %103, %105, %cst_72 {dimension_numbers = #tpu.dot_dimension_numbers<[1], [0], [0], [1], [0, 0, 1, 1], [], []>} : vector<144x128xbf16>, vector<128x128xbf16>, vector<144x128xf32> -> vector<144x128xf32>
    %107 = arith.addf %102, %106 : vector<144x128xf32>
    %c20 = arith.constant 20 : index
    %c0_73 = arith.constant 0 : index
    %108 = vector.load %arg13[%c20, %c0_73] : memref<184x128xbf16, #tpu.memory_space<vmem>>, vector<144x128xbf16>
    %c1_74 = arith.constant 1 : index
    %c2_75 = arith.constant 2 : index
    %c0_76 = arith.constant 0 : index
    %c0_77 = arith.constant 0 : index
    %109 = vector.load %arg6[%c1_74, %c2_75, %c0_76, %c0_77] : memref<3x3x128x128xbf16, #tpu.memory_space<vmem>>, vector<1x1x128x128xbf16>
    %110 = vector.shape_cast %109 : vector<1x1x128x128xbf16> to vector<128x128xbf16>
    %cst_78 = arith.constant dense<0.000000e+00> : vector<144x128xf32>
    %111 = tpu.matmul %108, %110, %cst_78 {dimension_numbers = #tpu.dot_dimension_numbers<[1], [0], [0], [1], [0, 0, 1, 1], [], []>} : vector<144x128xbf16>, vector<128x128xbf16>, vector<144x128xf32> -> vector<144x128xf32>
    %112 = arith.addf %107, %111 : vector<144x128xf32>
    %c36 = arith.constant 36 : index
    %c0_79 = arith.constant 0 : index
    %113 = vector.load %arg13[%c36, %c0_79] : memref<184x128xbf16, #tpu.memory_space<vmem>>, vector<144x128xbf16>
    %c2_80 = arith.constant 2 : index
    %c0_81 = arith.constant 0 : index
    %c0_82 = arith.constant 0 : index
    %c0_83 = arith.constant 0 : index
    %114 = vector.load %arg6[%c2_80, %c0_81, %c0_82, %c0_83] : memref<3x3x128x128xbf16, #tpu.memory_space<vmem>>, vector<1x1x128x128xbf16>
    %115 = vector.shape_cast %114 : vector<1x1x128x128xbf16> to vector<128x128xbf16>
    %cst_84 = arith.constant dense<0.000000e+00> : vector<144x128xf32>
    %116 = tpu.matmul %113, %115, %cst_84 {dimension_numbers = #tpu.dot_dimension_numbers<[1], [0], [0], [1], [0, 0, 1, 1], [], []>} : vector<144x128xbf16>, vector<128x128xbf16>, vector<144x128xf32> -> vector<144x128xf32>
    %117 = arith.addf %112, %116 : vector<144x128xf32>
    %c37 = arith.constant 37 : index
    %c0_85 = arith.constant 0 : index
    %118 = vector.load %arg13[%c37, %c0_85] : memref<184x128xbf16, #tpu.memory_space<vmem>>, vector<144x128xbf16>
    %c2_86 = arith.constant 2 : index
    %c1_87 = arith.constant 1 : index
    %c0_88 = arith.constant 0 : index
    %c0_89 = arith.constant 0 : index
    %119 = vector.load %arg6[%c2_86, %c1_87, %c0_88, %c0_89] : memref<3x3x128x128xbf16, #tpu.memory_space<vmem>>, vector<1x1x128x128xbf16>
    %120 = vector.shape_cast %119 : vector<1x1x128x128xbf16> to vector<128x128xbf16>
    %cst_90 = arith.constant dense<0.000000e+00> : vector<144x128xf32>
    %121 = tpu.matmul %118, %120, %cst_90 {dimension_numbers = #tpu.dot_dimension_numbers<[1], [0], [0], [1], [0, 0, 1, 1], [], []>} : vector<144x128xbf16>, vector<128x128xbf16>, vector<144x128xf32> -> vector<144x128xf32>
    %122 = arith.addf %117, %121 : vector<144x128xf32>
    %c38 = arith.constant 38 : index
    %c0_91 = arith.constant 0 : index
    %123 = vector.load %arg13[%c38, %c0_91] : memref<184x128xbf16, #tpu.memory_space<vmem>>, vector<144x128xbf16>
    %c2_92 = arith.constant 2 : index
    %c2_93 = arith.constant 2 : index
    %c0_94 = arith.constant 0 : index
    %c0_95 = arith.constant 0 : index
    %124 = vector.load %arg6[%c2_92, %c2_93, %c0_94, %c0_95] : memref<3x3x128x128xbf16, #tpu.memory_space<vmem>>, vector<1x1x128x128xbf16>
    %125 = vector.shape_cast %124 : vector<1x1x128x128xbf16> to vector<128x128xbf16>
    %cst_96 = arith.constant dense<0.000000e+00> : vector<144x128xf32>
    %126 = tpu.matmul %123, %125, %cst_96 {dimension_numbers = #tpu.dot_dimension_numbers<[1], [0], [0], [1], [0, 0, 1, 1], [], []>} : vector<144x128xbf16>, vector<128x128xbf16>, vector<144x128xf32> -> vector<144x128xf32>
    %127 = arith.addf %122, %126 : vector<144x128xf32>
    %c0_97 = arith.constant 0 : index
    %c0_98 = arith.constant 0 : index
    %128 = vector.load %arg7[%c0_97, %c0_98] : memref<1x128xf32, #tpu.memory_space<vmem>>, vector<1x128xf32>
    %129 = vector.broadcast %128 : vector<1x128xf32> to vector<144x128xf32>
    %130 = arith.mulf %127, %129 : vector<144x128xf32>
    %c0_99 = arith.constant 0 : index
    %c0_100 = arith.constant 0 : index
    %131 = vector.load %arg8[%c0_99, %c0_100] : memref<1x128xf32, #tpu.memory_space<vmem>>, vector<1x128xf32>
    %132 = vector.broadcast %131 : vector<1x128xf32> to vector<144x128xf32>
    %133 = arith.addf %130, %132 : vector<144x128xf32>
    %cst_101 = arith.constant 0.000000e+00 : f32
    %134 = vector.broadcast %cst_101 : f32 to vector<144x128xf32>
    %135 = arith.maximumf %133, %134 : vector<144x128xf32>
    %136 = arith.truncf %135 : vector<144x128xf32> to vector<144x128xbf16>
    %137 = vector.shape_cast %136 : vector<144x128xbf16> to vector<8x18x128xbf16>
    %138 = vector.extract_strided_slice %137 {offsets = [0, 0, 0], sizes = [8, 16, 128], strides = [1, 1, 1]} : vector<8x18x128xbf16> to vector<8x16x128xbf16>
    %139 = vector.shape_cast %138 : vector<8x16x128xbf16> to vector<128x128xbf16>
    %c0_102 = arith.constant 0 : index
    %c0_103 = arith.constant 0 : index
    %140 = vector.load %arg9[%c0_102, %c0_103] : memref<128x16xbf16, #tpu.memory_space<vmem>>, vector<128x16xbf16>
    %cst_104 = arith.constant dense<0.000000e+00> : vector<128x16xf32>
    %141 = tpu.matmul %139, %140, %cst_104 {dimension_numbers = #tpu.dot_dimension_numbers<[1], [0], [0], [1], [0, 0, 1, 1], [], []>} : vector<128x128xbf16>, vector<128x16xbf16>, vector<128x16xf32> -> vector<128x16xf32>
    %c0_105 = arith.constant 0 : index
    %c0_106 = arith.constant 0 : index
    %142 = vector.load %arg10[%c0_105, %c0_106] : memref<1x16xf32, #tpu.memory_space<vmem>>, vector<1x16xf32>
    %143 = vector.broadcast %142 : vector<1x16xf32> to vector<128x16xf32>
    %144 = arith.mulf %141, %143 : vector<128x16xf32>
    %c0_107 = arith.constant 0 : index
    %c0_108 = arith.constant 0 : index
    %145 = vector.load %arg11[%c0_107, %c0_108] : memref<1x16xf32, #tpu.memory_space<vmem>>, vector<1x16xf32>
    %146 = vector.broadcast %145 : vector<1x16xf32> to vector<128x16xf32>
    %147 = arith.addf %144, %146 : vector<128x16xf32>
    %148 = vector.shape_cast %11 : vector<8x16x16xf32> to vector<128x16xf32>
    %149 = arith.addf %147, %148 : vector<128x16xf32>
    %cst_109 = arith.constant 0.000000e+00 : f32
    %150 = vector.broadcast %cst_109 : f32 to vector<128x16xf32>
    %151 = arith.maximumf %149, %150 : vector<128x16xf32>
    %152 = vector.shape_cast %151 : vector<128x16xf32> to vector<1x8x16x16xf32>
    %c0_110 = arith.constant 0 : index
    %c0_111 = arith.constant 0 : index
    %c0_112 = arith.constant 0 : index
    %c0_113 = arith.constant 0 : index
    %153 = vector.load %arg12[%c0_110, %c0_111, %c0_112, %c0_113] : memref<1x8x16x16xf32, #tpu.memory_space<vmem>>, vector<1x8x16x16xf32>
    tpu.vector_store %arg12[%c0_110, %c0_111, %c0_112, %c0_113], %152 {strides = array<i32>} : memref<1x8x16x16xf32, #tpu.memory_space<vmem>>, vector<1x8x16x16xf32>,
    return
  }
  func.func @transform_0(%arg0: i32, %arg1: i32) -> (i32, i32, i32, i32) {
    %c0_i32 = arith.constant 0 : i32
    %c0_i32_0 = arith.constant 0 : i32
    %c0_i32_1 = arith.constant 0 : i32
    %c0_i32_2 = arith.constant 0 : i32
    return %arg0, %c0_i32, %c0_i32_0, %c0_i32_1 : i32, i32, i32, i32
  }
  func.func @transform_1(%arg0: i32, %arg1: i32) -> (i32, i32) {
    %c0_i32 = arith.constant 0 : i32
    %c0_i32_0 = arith.constant 0 : i32
    %c0_i32_1 = arith.constant 0 : i32
    return %c0_i32, %c0_i32_0 : i32, i32
  }
  func.func @transform_2(%arg0: i32, %arg1: i32) -> (i32, i32) {
    %c0_i32 = arith.constant 0 : i32
    %c0_i32_0 = arith.constant 0 : i32
    %c0_i32_1 = arith.constant 0 : i32
    return %c0_i32, %c0_i32_0 : i32, i32
  }
  func.func @transform_3(%arg0: i32, %arg1: i32) -> (i32, i32) {
    %c0_i32 = arith.constant 0 : i32
    %c0_i32_0 = arith.constant 0 : i32
    %c0_i32_1 = arith.constant 0 : i32
    return %c0_i32, %c0_i32_0 : i32, i32
  }
  func.func @transform_4(%arg0: i32, %arg1: i32) -> (i32, i32, i32, i32) {
    %c0_i32 = arith.constant 0 : i32
    %c0_i32_0 = arith.constant 0 : i32
    %c0_i32_1 = arith.constant 0 : i32
    %c0_i32_2 = arith.constant 0 : i32
    %c0_i32_3 = arith.constant 0 : i32
    return %c0_i32, %c0_i32_0, %c0_i32_1, %c0_i32_2 : i32, i32, i32, i32
  }
  func.func @transform_5(%arg0: i32, %arg1: i32) -> (i32, i32) {
    %c0_i32 = arith.constant 0 : i32
    %c0_i32_0 = arith.constant 0 : i32
    %c0_i32_1 = arith.constant 0 : i32
    return %c0_i32, %c0_i32_0 : i32, i32
  }
  func.func @transform_6(%arg0: i32, %arg1: i32) -> (i32, i32) {
    %c0_i32 = arith.constant 0 : i32
    %c0_i32_0 = arith.constant 0 : i32
    %c0_i32_1 = arith.constant 0 : i32
    return %c0_i32, %c0_i32_0 : i32, i32
  }
  func.func @transform_7(%arg0: i32, %arg1: i32) -> (i32, i32) {
    %c0_i32 = arith.constant 0 : i32
    %c0_i32_0 = arith.constant 0 : i32
    %c0_i32_1 = arith.constant 0 : i32
    return %c0_i32, %c0_i32_0 : i32, i32
  }
  func.func @transform_8(%arg0: i32, %arg1: i32) -> (i32, i32) {
    %c0_i32 = arith.constant 0 : i32
    %c0_i32_0 = arith.constant 0 : i32
    %c0_i32_1 = arith.constant 0 : i32
    return %c0_i32, %c0_i32_0 : i32, i32
  }
  func.func @transform_9(%arg0: i32, %arg1: i32) -> (i32, i32) {
    %c0_i32 = arith.constant 0 : i32
    %c0_i32_0 = arith.constant 0 : i32
    %c0_i32_1 = arith.constant 0 : i32
    return %c0_i32, %c0_i32_0 : i32, i32
  }
  func.func @transform_10(%arg0: i32, %arg1: i32) -> (i32, i32, i32, i32) {
    %c0_i32 = arith.constant 0 : i32
    %c0_i32_0 = arith.constant 0 : i32
    %c0_i32_1 = arith.constant 0 : i32
    return %arg0, %arg1, %c0_i32, %c0_i32_0 : i32, i32, i32, i32
  }
}

</mosaic_0001>

<llo_original>
// kernel: tpu_custom_call.1
$region0: #{tpu_custom_call.1}
  #allocation0 [shape = 'u32[]', space=smem, size = 0x4, offset = 0x4, fixed_abs, tag = 'smem constant byte address 0x4 - core index']
  #allocation1 [shape = 'u32[144,128]{1,0:T(1,128)}', space=vmem, size = 0x12000, scoped, tag = 'internal scratch']
  #allocation2 [shape = 'bf16[184,128]{1,0:T(8,128)(2,1)}', space=vmem, size = 0xb800, scoped, tag = 'scratch operand']
  %s0 = inlined_call_operand.hbm [shape: f32[2,16,16,16], index: 0, kind: input, shape index: {}]
  %s1 = inlined_call_operand.vmem [shape: bf16[128,128], index: 1, kind: input, shape index: {}]
  %s2 = inlined_call_operand.vmem [shape: f32[1,128], index: 2, kind: input, shape index: {}]
  %s3 = inlined_call_operand.vmem [shape: f32[1,128], index: 3, kind: input, shape index: {}]
  %s4 = inlined_call_operand.hbm [shape: bf16[3,3,128,128], index: 4, kind: input, shape index: {}]
  %s5 = inlined_call_operand.vmem [shape: f32[1,128], index: 5, kind: input, shape index: {}]
  %s6 = inlined_call_operand.vmem [shape: f32[1,128], index: 6, kind: input, shape index: {}]
  %s7 = inlined_call_operand.vmem [shape: bf16[128,16], index: 7, kind: input, shape index: {}]
  %s8 = inlined_call_operand.vmem [shape: f32[1,16], index: 8, kind: input, shape index: {}]
  %s9 = inlined_call_operand.vmem [shape: f32[1,16], index: 9, kind: input, shape index: {}]
  %s10 = inlined_call_operand.hbm [shape: f32[2,16,16,16], index: 10, kind: output, shape index: {}]
  %s11 = sld [smem:[#allocation0]]
  $region81: #{tpu_custom_call.1} parent=0
    _
  %s13 = ssub.s32 1, %s11
  %s14 = scalar_select 0, %s13, %s11
  $region1: #{tpu_custom_call.1} parent=0
    #allocation3 [shape = 'u8[262144]{0}', space=vmem, size = 0x40000, scoped, tag = 'input window, operand 0']
    #allocation4 [shape = 's32[2]{0}', space=sflag, size = 0x8, scoped, tag = 'scoped memory for tpu_custom_call.1']
    #allocation5 [shape = 's32[2]{0}', space=sflag, size = 0x8, scoped, tag = 'scoped memory for tpu_custom_call.1']
    #allocation6 [shape = 'u8[294912]{0}', space=vmem, size = 0x48000, scoped, tag = 'input window, operand 4, single buffered']
    #allocation7 [shape = 's32[1]{0}', space=sflag, size = 0x4, scoped, tag = 'scoped memory for tpu_custom_call.1']
    #allocation8 [shape = 'u8[131072]{0}', space=vmem, size = 0x20000, scoped, tag = 'output window, operand 0']
    %15 = vsyncpa [#allocation4], 0
    %s16 = scalar_lea.sflag [#allocation4], 1
    %17 = vsyncpa %s16, 0
    %18 = vsyncpa [#allocation7], 0
    %19 = vsyncpa [#allocation5], 0
    %s20 = scalar_lea.sflag [#allocation5], 1
    %21 = vsyncpa %s20, 0
    loop: start=0, step=1, limit=6
    $region2: #{tpu_custom_call.1} parent=1 // loop_pre_header
      _
    $region3: #{tpu_custom_call.1} parent=1 // loop_header
      %s23 = sphi 0, %s27
      %p24 = scmp.ge.s32.totalorder %s23, 6
      %s30 = sphi 0, %s42
      %s31 = sphi 0, %s38
      %s32 = sphi 0, %s30
      %s33 = sphi 0, %s31
      %s34 = sphi 0, %s32
      %s35 = sphi 0, %s33
      %s45 = sphi 0, %s47
      %s48 = sphi 0, %s45
      %s49 = sphi 0, %s48
      %s65 = sphi 0, %s49
      %s69 = sphi 0, %s69
      %s71 = sphi 0, %s69
      %s72 = sphi 0, %s71
      %s86 = sphi 0, %s72
      %s90 = sphi 0, %s90
      %s92 = sphi 0, %s90
      %s93 = sphi 0, %s92
      %s107 = sphi 0, %s93
      %s111 = sphi 0, %s111
      %s113 = sphi 0, %s111
      %s114 = sphi 0, %s113
      %s128 = sphi 0, %s114
      %s132 = sphi 0, %s132
      %s134 = sphi 0, %s132
      %s135 = sphi 0, %s134
      %s149 = sphi 0, %s135
      %s153 = sphi 0, %s153
      %s155 = sphi 0, %s153
      %s156 = sphi 0, %s155
      %s170 = sphi 0, %s156
      %s174 = sphi 0, %s174
      %s176 = sphi 0, %s174
      %s177 = sphi 0, %s176
      %s191 = sphi 0, %s177
      %s195 = sphi 0, %s195
      %s197 = sphi 0, %s195
      %s198 = sphi 0, %s197
      %s212 = sphi 0, %s198
      %s216 = sphi 0, %s216
      %s218 = sphi 0, %s216
      %s219 = sphi 0, %s218
      %s233 = sphi 0, %s219
      %s237 = sphi 0, %s237
      %s239 = sphi 0, %s237
      %s240 = sphi 0, %s239
      %s254 = sphi 0, %s240
      %s262 = sphi 0, %s264
      %s265 = sphi 0, %s262
      %s266 = sphi 0, %s265
      %s282 = sphi 0, %s266
    $region4: #{tpu_custom_call.1} parent=1 // loop_header_branch
      %26 = sbr.rel (%p24) target = $region8
    $region5: #{tpu_custom_call.1} parent=1 // loop_body
      %s28 = ssub.s32 %s23, 1
      %s29 = ssub.s32 %s23, 2
      %s36 = sadd.s32 1, %s31
      %p37 = scmp.ge.s32.totalorder %s36, 2
      %s38 = scalar_select %p37, 0, %s36
      %s39 = sadd.s32 1, %s30
      %s40 = scalar_select %p37, %s39, %s30
      %p41 = scmp.ge.s32.totalorder %s40, 2
      %s42 = scalar_select %p41, 0, %s40
      %s43 = ssub.s32 %s30, %s42
      %p44 = scmp.eq.s32.totalorder %s43, 0
      %s46 = sadd.s32 %s45, 1
      %s47 = scalar_select %p44, %s45, %s46
      %p50 = pneg %p44
      %p51 = scmp.eq.s32.totalorder %s23, 3
      %p52 = por %p50, %p51
      %p53 = scmp.ne.s32.totalorder %s45, %s48
      %p54 = scmp.eq.s32.totalorder %s23, 0
      %p55 = por %p53, %p54
      %p56 = scmp.ne.s32.totalorder %s45, %s48
      %p57 = scmp.eq.s32.totalorder %s28, 3
      %p58 = por %p56, %p57
      %p59 = scmp.ne.s32.totalorder %s48, %s49
      %p60 = scmp.eq.s32.totalorder %s28, 0
      %p61 = por %p59, %p60
      %p62 = scmp.ne.s32.totalorder %s48, %s49
      %p63 = scmp.eq.s32.totalorder %s29, 3
      %p64 = por %p62, %p63
      %p66 = scmp.ne.s32.totalorder %s49, %s65
      %p67 = scmp.eq.s32.totalorder %s29, 0
      %p68 = por %p66, %p67
      %s70 = sadd.s32 %s69, 1
      %p73 = scmp.eq.s32.totalorder %s23, 3
      %p74 = scmp.ne.s32.totalorder %s69, %s71
      %p75 = scmp.eq.s32.totalorder %s23, 0
      %p76 = por %p74, %p75
      %p77 = scmp.ne.s32.totalorder %s69, %s71
      %p78 = scmp.eq.s32.totalorder %s28, 3
      %p79 = por %p77, %p78
      %p80 = scmp.ne.s32.totalorder %s71, %s72
      %p81 = scmp.eq.s32.totalorder %s28, 0
      %p82 = por %p80, %p81
      %p83 = scmp.ne.s32.totalorder %s71, %s72
      %p84 = scmp.eq.s32.totalorder %s29, 3
      %p85 = por %p83, %p84
      %p87 = scmp.ne.s32.totalorder %s72, %s86
      %p88 = scmp.eq.s32.totalorder %s29, 0
      %p89 = por %p87, %p88
      %s91 = sadd.s32 %s90, 1
      %p94 = scmp.eq.s32.totalorder %s23, 3
      %p95 = scmp.ne.s32.totalorder %s90, %s92
      %p96 = scmp.eq.s32.totalorder %s23, 0
      %p97 = por %p95, %p96
      %p98 = scmp.ne.s32.totalorder %s90, %s92
      %p99 = scmp.eq.s32.totalorder %s28, 3
      %p100 = por %p98, %p99
      %p101 = scmp.ne.s32.totalorder %s92, %s93
      %p102 = scmp.eq.s32.totalorder %s28, 0
      %p103 = por %p101, %p102
      %p104 = scmp.ne.s32.totalorder %s92, %s93
      %p105 = scmp.eq.s32.totalorder %s29, 3
      %p106 = por %p104, %p105
      %p108 = scmp.ne.s32.totalorder %s93, %s107
      %p109 = scmp.eq.s32.totalorder %s29, 0
      %p110 = por %p108, %p109
      %s112 = sadd.s32 %s111, 1
      %p115 = scmp.eq.s32.totalorder %s23, 3
      %p116 = scmp.ne.s32.totalorder %s111, %s113
      %p117 = scmp.eq.s32.totalorder %s23, 0
      %p118 = por %p116, %p117
      %p119 = scmp.ne.s32.totalorder %s111, %s113
      %p120 = scmp.eq.s32.totalorder %s28, 3
      %p121 = por %p119, %p120
      %p122 = scmp.ne.s32.totalorder %s113, %s114
      %p123 = scmp.eq.s32.totalorder %s28, 0
      %p124 = por %p122, %p123
      %p125 = scmp.ne.s32.totalorder %s113, %s114
      %p126 = scmp.eq.s32.totalorder %s29, 3
      %p127 = por %p125, %p126
      %p129 = scmp.ne.s32.totalorder %s114, %s128
      %p130 = scmp.eq.s32.totalorder %s29, 0
      %p131 = por %p129, %p130
      %s133 = sadd.s32 %s132, 1
      %p136 = scmp.eq.s32.totalorder %s23, 3
      %p137 = scmp.ne.s32.totalorder %s132, %s134
      %p138 = scmp.eq.s32.totalorder %s23, 0
      %p139 = por %p137, %p138
      %p140 = scmp.ne.s32.totalorder %s132, %s134
      %p141 = scmp.eq.s32.totalorder %s28, 3
      %p142 = por %p140, %p141
      %p143 = scmp.ne.s32.totalorder %s134, %s135
      %p144 = scmp.eq.s32.totalorder %s28, 0
      %p145 = por %p143, %p144
      %p146 = scmp.ne.s32.totalorder %s134, %s135
      %p147 = scmp.eq.s32.totalorder %s29, 3
      %p148 = por %p146, %p147
      %p150 = scmp.ne.s32.totalorder %s135, %s149
      %p151 = scmp.eq.s32.totalorder %s29, 0
      %p152 = por %p150, %p151
      %s154 = sadd.s32 %s153, 1
      %p157 = scmp.eq.s32.totalorder %s23, 3
      %p158 = scmp.ne.s32.totalorder %s153, %s155
      %p159 = scmp.eq.s32.totalorder %s23, 0
      %p160 = por %p158, %p159
      %p161 = scmp.ne.s32.totalorder %s153, %s155
      %p162 = scmp.eq.s32.totalorder %s28, 3
      %p163 = por %p161, %p162
      %p164 = scmp.ne.s32.totalorder %s155, %s156
      %p165 = scmp.eq.s32.totalorder %s28, 0
      %p166 = por %p164, %p165
      %p167 = scmp.ne.s32.totalorder %s155, %s156
      %p168 = scmp.eq.s32.totalorder %s29, 3
      %p169 = por %p167, %p168
      %p171 = scmp.ne.s32.totalorder %s156, %s170
      %p172 = scmp.eq.s32.totalorder %s29, 0
      %p173 = por %p171, %p172
      %s175 = sadd.s32 %s174, 1
      %p178 = scmp.eq.s32.totalorder %s23, 3
      %p179 = scmp.ne.s32.totalorder %s174, %s176
      %p180 = scmp.eq.s32.totalorder %s23, 0
      %p181 = por %p179, %p180
      %p182 = scmp.ne.s32.totalorder %s174, %s176
      %p183 = scmp.eq.s32.totalorder %s28, 3
      %p184 = por %p182, %p183
      %p185 = scmp.ne.s32.totalorder %s176, %s177
      %p186 = scmp.eq.s32.totalorder %s28, 0
      %p187 = por %p185, %p186
      %p188 = scmp.ne.s32.totalorder %s176, %s177
      %p189 = scmp.eq.s32.totalorder %s29, 3
      %p190 = por %p188, %p189
      %p192 = scmp.ne.s32.totalorder %s177, %s191
      %p193 = scmp.eq.s32.totalorder %s29, 0
      %p194 = por %p192, %p193
      %s196 = sadd.s32 %s195, 1
      %p199 = scmp.eq.s32.totalorder %s23, 3
      %p200 = scmp.ne.s32.totalorder %s195, %s197
      %p201 = scmp.eq.s32.totalorder %s23, 0
      %p202 = por %p200, %p201
      %p203 = scmp.ne.s32.totalorder %s195, %s197
      %p204 = scmp.eq.s32.totalorder %s28, 3
      %p205 = por %p203, %p204
      %p206 = scmp.ne.s32.totalorder %s197, %s198
      %p207 = scmp.eq.s32.totalorder %s28, 0
      %p208 = por %p206, %p207
      %p209 = scmp.ne.s32.totalorder %s197, %s198
      %p210 = scmp.eq.s32.totalorder %s29, 3
      %p211 = por %p209, %p210
      %p213 = scmp.ne.s32.totalorder %s198, %s212
      %p214 = scmp.eq.s32.totalorder %s29, 0
      %p215 = por %p213, %p214
      %s217 = sadd.s32 %s216, 1
      %p220 = scmp.eq.s32.totalorder %s23, 3
      %p221 = scmp.ne.s32.totalorder %s216, %s218
      %p222 = scmp.eq.s32.totalorder %s23, 0
      %p223 = por %p221, %p222
      %p224 = scmp.ne.s32.totalorder %s216, %s218
      %p225 = scmp.eq.s32.totalorder %s28, 3
      %p226 = por %p224, %p225
      %p227 = scmp.ne.s32.totalorder %s218, %s219
      %p228 = scmp.eq.s32.totalorder %s28, 0
      %p229 = por %p227, %p228
      %p230 = scmp.ne.s32.totalorder %s218, %s219
      %p231 = scmp.eq.s32.totalorder %s29, 3
      %p232 = por %p230, %p231
      %p234 = scmp.ne.s32.totalorder %s219, %s233
      %p235 = scmp.eq.s32.totalorder %s29, 0
      %p236 = por %p234, %p235
      %s238 = sadd.s32 %s237, 1
      %p241 = scmp.eq.s32.totalorder %s23, 3
      %p242 = scmp.ne.s32.totalorder %s237, %s239
      %p243 = scmp.eq.s32.totalorder %s23, 0
      %p244 = por %p242, %p243
      %p245 = scmp.ne.s32.totalorder %s237, %s239
      %p246 = scmp.eq.s32.totalorder %s28, 3
      %p247 = por %p245, %p246
      %p248 = scmp.ne.s32.totalorder %s239, %s240
      %p249 = scmp.eq.s32.totalorder %s28, 0
      %p250 = por %p248, %p249
      %p251 = scmp.ne.s32.totalorder %s239, %s240
      %p252 = scmp.eq.s32.totalorder %s29, 3
      %p253 = por %p251, %p252
      %p255 = scmp.ne.s32.totalorder %s240, %s254
      %p256 = scmp.eq.s32.totalorder %s29, 0
      %p257 = por %p255, %p256
      %s258 = ssub.s32 %s30, %s42
      %s259 = ssub.s32 %s31, %s38
      %s260 = sor.u32 %s258, %s259
      %p261 = scmp.eq.s32.totalorder %s260, 0
      %s263 = sadd.s32 %s262, 1
      %s264 = scalar_select %p261, %s262, %s263
      %p267 = pneg %p261
      %p268 = scmp.eq.s32.totalorder %s23, 3
      %p269 = por %p267, %p268
      %p270 = scmp.ne.s32.totalorder %s262, %s265
      %p271 = scmp.eq.s32.totalorder %s23, 0
      %p272 = por %p270, %p271
      %p273 = scmp.ne.s32.totalorder %s262, %s265
      %p274 = scmp.eq.s32.totalorder %s28, 3
      %p275 = por %p273, %p274
      %p276 = scmp.ne.s32.totalorder %s265, %s266
      %p277 = scmp.eq.s32.totalorder %s28, 0
      %p278 = por %p276, %p277
      %p279 = scmp.ne.s32.totalorder %s265, %s266
      %p280 = scmp.eq.s32.totalorder %s29, 3
      %p281 = por %p279, %p280
      %p283 = scmp.ne.s32.totalorder %s266, %s282
      %p284 = scmp.eq.s32.totalorder %s29, 0
      %p285 = por %p283, %p284
      %p286 = scmp.le.s32.totalorder 1, %s23
      %p287 = scmp.lt.s32.totalorder %s23, 5
      %p288 = pnand %p286, %p287
      %p289 = pneg %p288
      // Predicated region
      $region9: #{tpu_custom_call.1} parent=5 // pred_check
        _
      $region10: #{tpu_custom_call.1} parent=5 // pred_check_branch
        %291 = sbr.rel (%p288) target = $region12
      $region11: #{tpu_custom_call.1} parent=5 // pred_region
        %s292 = ssub.s32 %s23, 1
        // Predicated region
        $region13: #{tpu_custom_call.1} parent=11 // pred_check
          %p293 = pneg %p82
        $region14: #{tpu_custom_call.1} parent=11 // pred_check_branch
          %295 = sbr.rel (%p293) target = $region16
        $region15: #{tpu_custom_call.1} parent=11 // pred_region
          _
        $region16: #{tpu_custom_call.1} parent=11 // pred_fallthru
          _
        // Predicated region
        $region17: #{tpu_custom_call.1} parent=11 // pred_check
          %p296 = pneg %p103
        $region18: #{tpu_custom_call.1} parent=11 // pred_check_branch
          %298 = sbr.rel (%p296) target = $region20
        $region19: #{tpu_custom_call.1} parent=11 // pred_region
          _
        $region20: #{tpu_custom_call.1} parent=11 // pred_fallthru
          _
        // Predicated region
        $region21: #{tpu_custom_call.1} parent=11 // pred_check
          %p299 = pneg %p124
        $region22: #{tpu_custom_call.1} parent=11 // pred_check_branch
          %301 = sbr.rel (%p299) target = $region24
        $region23: #{tpu_custom_call.1} parent=11 // pred_region
          _
        $region24: #{tpu_custom_call.1} parent=11 // pred_fallthru
          _
        // Predicated region
        $region25: #{tpu_custom_call.1} parent=11 // pred_check
          %p302 = pneg %p145
        $region26: #{tpu_custom_call.1} parent=11 // pred_check_branch
          %304 = sbr.rel (%p302) target = $region28
        $region27: #{tpu_custom_call.1} parent=11 // pred_region
          %s306 = ssub.s32 9216, 9216
          %307 = vsyncadd [#allocation7], %s306
          %s308 = sshll.u32 [#allocation6], 4
          %s309 = int_to_ptr.vmem [resolvable:$true] %s308
          %314 = dma.hbm_to_vmem [thread:$0]  %s4, 9216, %s309, [#allocation7], 64, 64, 4
        $region28: #{tpu_custom_call.1} parent=11 // pred_fallthru
          _
        // Predicated region
        $region29: #{tpu_custom_call.1} parent=11 // pred_check
          %p315 = pneg %p166
        $region30: #{tpu_custom_call.1} parent=11 // pred_check_branch
          %317 = sbr.rel (%p315) target = $region32
        $region31: #{tpu_custom_call.1} parent=11 // pred_region
          _
        $region32: #{tpu_custom_call.1} parent=11 // pred_fallthru
          _
        // Predicated region
        $region33: #{tpu_custom_call.1} parent=11 // pred_check
          %p318 = pneg %p187
        $region34: #{tpu_custom_call.1} parent=11 // pred_check_branch
          %320 = sbr.rel (%p318) target = $region36
        $region35: #{tpu_custom_call.1} parent=11 // pred_region
          _
        $region36: #{tpu_custom_call.1} parent=11 // pred_fallthru
          _
        // Predicated region
        $region37: #{tpu_custom_call.1} parent=11 // pred_check
          %p321 = pneg %p208
        $region38: #{tpu_custom_call.1} parent=11 // pred_check_branch
          %323 = sbr.rel (%p321) target = $region40
        $region39: #{tpu_custom_call.1} parent=11 // pred_region
          _
        $region40: #{tpu_custom_call.1} parent=11 // pred_fallthru
          _
        // Predicated region
        $region41: #{tpu_custom_call.1} parent=11 // pred_check
          %p324 = pneg %p229
        $region42: #{tpu_custom_call.1} parent=11 // pred_check_branch
          %326 = sbr.rel (%p324) target = $region44
        $region43: #{tpu_custom_call.1} parent=11 // pred_region
          _
        $region44: #{tpu_custom_call.1} parent=11 // pred_fallthru
          _
        // Predicated region
        $region45: #{tpu_custom_call.1} parent=11 // pred_check
          %p327 = pneg %p250
        $region46: #{tpu_custom_call.1} parent=11 // pred_check_branch
          %329 = sbr.rel (%p327) target = $region48
        $region47: #{tpu_custom_call.1} parent=11 // pred_region
          _
        $region48: #{tpu_custom_call.1} parent=11 // pred_fallthru
          _
      $region12: #{tpu_custom_call.1} parent=5 // pred_fallthru
        _
      %p330 = scmp.lt.s32.totalorder %s23, 4
      // Predicated region
      $region49: #{tpu_custom_call.1} parent=5 // pred_check
        %p331 = pneg %p330
      $region50: #{tpu_custom_call.1} parent=5 // pred_check_branch
        %333 = sbr.rel (%p331) target = $region52
      $region51: #{tpu_custom_call.1} parent=5 // pred_region
        // Predicated region
        $region53: #{tpu_custom_call.1} parent=51 // pred_check
          %p334 = pneg %p55
        $region54: #{tpu_custom_call.1} parent=51 // pred_check_branch
          %336 = sbr.rel (%p334) target = $region56
        $region55: #{tpu_custom_call.1} parent=51 // pred_region
          %s337 = sand.u32 %s45, 1
          %s338 = scalar_lea.sflag [#allocation4], %s337
          %s339 = sand.u32 %s45, 1
          %s340 = smul.addr %s339, 256
          %s341 = scalar_lea.vmem [#allocation3], %s340
          %s343 = ssub.s32 4096, 4096
          %344 = vsyncadd %s338, %s343
          %s345 = smul.addr %s30, 32
          %s346 = smul.addr %s345, 128
          %s347 = scalar_lea.hbm %s0, %s346
          %s348 = sshll.u32 %s341, 4
          %s349 = int_to_ptr.vmem [resolvable:$true] %s348
          %354 = dma.hbm_to_vmem [thread:$0]  %s347, 4096, %s349, %s338, 128, 128, 8
        $region56: #{tpu_custom_call.1} parent=51 // pred_fallthru
          _
      $region52: #{tpu_custom_call.1} parent=5 // pred_fallthru
        _
      %p355 = scmp.le.s32.totalorder 1, %s23
      %p356 = scmp.lt.s32.totalorder %s23, 5
      %p357 = pnand %p355, %p356
      %p358 = pneg %p357
      // Predicated region
      $region57: #{tpu_custom_call.1} parent=5 // pred_check
        _
      $region58: #{tpu_custom_call.1} parent=5 // pred_check_branch
        %360 = sbr.rel (%p357) target = $region60
      $region59: #{tpu_custom_call.1} parent=5 // pred_region
        %s361 = ssub.s32 %s23, 1
        %s362 = sand.u32 %s48, 1
        %s363 = scalar_lea.sflag [#allocation4], %s362
        %s364 = sand.u32 %s48, 1
        %s365 = smul.addr %s364, 256
        %s366 = scalar_lea.vmem [#allocation3], %s365
        // Predicated region
        $region61: #{tpu_custom_call.1} parent=59 // pred_check
          %p367 = pneg %p61
        $region62: #{tpu_custom_call.1} parent=59 // pred_check_branch
          %369 = sbr.rel (%p367) target = $region64
        $region63: #{tpu_custom_call.1} parent=59 // pred_region
          %370 = dma.done %s363, 4096
        $region64: #{tpu_custom_call.1} parent=59 // pred_fallthru
          _
        // Predicated region
        $region65: #{tpu_custom_call.1} parent=59 // pred_check
          %p371 = pneg %p145
        $region66: #{tpu_custom_call.1} parent=59 // pred_check_branch
          %373 = sbr.rel (%p371) target = $region68
        $region67: #{tpu_custom_call.1} parent=59 // pred_region
          %374 = dma.done [#allocation7], 9216
        $region68: #{tpu_custom_call.1} parent=59 // pred_fallthru
          _
        %s375 = sand.u32 %s48, 1
        %s376 = scalar_lea.sflag [#allocation4], %s375
        %s377 = sand.u32 %s48, 1
        %s378 = smul.addr %s377, 256
        %s379 = scalar_lea.vmem [#allocation3], %s378
        %p380 = pneg %p61
        %p381 = pneg %p58
        %p382 = pneg %p82
        %p383 = pneg %p79
        %p384 = pneg %p103
        %p385 = pneg %p100
        %p386 = pneg %p124
        %p387 = pneg %p121
        %p388 = pneg %p145
        %p389 = pneg %p142
        %p390 = pneg %p166
        %p391 = pneg %p163
        %p392 = pneg %p187
        %p393 = pneg %p184
        %p394 = pneg %p208
        %p395 = pneg %p205
        %p396 = pneg %p229
        %p397 = pneg %p226
        %p398 = pneg %p250
        %p399 = pneg %p247
        %p400 = pneg %p278
        %p401 = pneg %p275
        %s402 = sand.u32 %s265, 1
        %s403 = scalar_lea.sflag [#allocation5], %s402
        %s404 = sand.u32 %s265, 1
        %s405 = smul.addr %s404, 128
        %s406 = scalar_lea.vmem [#allocation8], %s405
        %s407 = smul.u32 8, %s33
        %s409 = smul.u32 %s33, 8
        %s410 = ssub.s32 %s409, 1
        %p411 = scmp.gt.s32.totalorder %s410, 0
        %s412 = scalar_select %p411, %s410, 0
        %s413 = sadd.s32 %s409, 8
        %p414 = scmp.lt.s32.totalorder %s413, 15
        %s415 = scalar_select %p414, %s413, 15
        %s416 = smul.u32 %s412, 16
        %s417 = scalar_lea.vmem %s366, %s416 [#allocation3]
        %v418 = vld [vmem:[%s417] sm:$0xff]
        %v419 = vld [vmem:[%s417 + $0x8] sm:$0xff]
        %s420 = smul.u32 %s409, 16
        %s421 = scalar_lea.vmem %s366, %s420 [#allocation3]
        %v422 = vld [vmem:[%s421] sm:$0xff]
        %v423 = vld [vmem:[%s421 + $0x8] sm:$0xff]
        %v424 = vld [vmem:[%s421 + $0x10] sm:$0xff]
        %v425 = vld [vmem:[%s421 + $0x18] sm:$0xff]
        %v426 = vld [vmem:[%s421 + $0x20] sm:$0xff]
        %v427 = vld [vmem:[%s421 + $0x28] sm:$0xff]
        %v428 = vld [vmem:[%s421 + $0x30] sm:$0xff]
        %v429 = vld [vmem:[%s421 + $0x38] sm:$0xff]
        %v430 = vld [vmem:[%s421 + $0x40] sm:$0xff]
        %v431 = vld [vmem:[%s421 + $0x48] sm:$0xff]
        %v432 = vld [vmem:[%s421 + $0x50] sm:$0xff]
        %v433 = vld [vmem:[%s421 + $0x58] sm:$0xff]
        %v434 = vld [vmem:[%s421 + $0x60] sm:$0xff]
        %v435 = vld [vmem:[%s421 + $0x68] sm:$0xff]
        %v436 = vld [vmem:[%s421 + $0x70] sm:$0xff]
        %v437 = vld [vmem:[%s421 + $0x78] sm:$0xff]
        %s438 = smul.u32 %s415, 16
        %s439 = scalar_lea.vmem %s366, %s438 [#allocation3]
        %v440 = vld [vmem:[%s439] sm:$0xff]
        %v441 = vld [vmem:[%s439 + $0x8] sm:$0xff]
        %p442 = scmp.gt.s32.totalorder %s33, 0
        %s443 = scalar_select %p442, 1, 0
        %s444 = scvt.s32.f32 %s443
        %p445 = scmp.lt.s32.totalorder %s33, 1
        %s446 = scalar_select %p445, 1, 0
        %s447 = scvt.s32.f32 %s446
        %v448 = vpack.c.bf16 %v419, %v418
        %vm449 = vcmask 130048
        %v452 = vsel %vm449, %v448, 0
        %v454 = vld [vmem:[%s1] sm:$0xf]
        %v455 = vld [vmem:[%s1 + $0x4] sm:$0xf]
        %v456 = vld [vmem:[%s1 + $0x8] sm:$0xf]
        %v457 = vld [vmem:[%s1 + $0xc] sm:$0xf]
        %v458 = vld [vmem:[%s1 + $0x10] sm:$0xf]
        %v459 = vld [vmem:[%s1 + $0x14] sm:$0xf]
        %v460 = vld [vmem:[%s1 + $0x18] sm:$0xf]
        %v461 = vld [vmem:[%s1 + $0x1c] sm:$0xf]
        %v462 = vld [vmem:[%s1 + $0x20] sm:$0xf]
        %v463 = vld [vmem:[%s1 + $0x24] sm:$0xf]
        %v464 = vld [vmem:[%s1 + $0x28] sm:$0xf]
        %v465 = vld [vmem:[%s1 + $0x2c] sm:$0xf]
        %v466 = vld [vmem:[%s1 + $0x30] sm:$0xf]
        %v467 = vld [vmem:[%s1 + $0x34] sm:$0xf]
        %v468 = vld [vmem:[%s1 + $0x38] sm:$0xf]
        %v469 = vld [vmem:[%s1 + $0x3c] sm:$0xf]
        %v486 = vunpack.c.l.b16 %v454
        %v487 = vunpack.c.l.b16 %v455
        %v488 = vunpack.c.l.b16 %v456
        %v489 = vunpack.c.l.b16 %v457
        %v490 = vunpack.c.l.b16 %v458
        %v491 = vunpack.c.l.b16 %v459
        %v492 = vunpack.c.l.b16 %v460
        %v493 = vunpack.c.l.b16 %v461
        %v494 = vunpack.c.l.b16 %v462
        %v495 = vunpack.c.l.b16 %v463
        %v496 = vunpack.c.l.b16 %v464
        %v497 = vunpack.c.l.b16 %v465
        %v498 = vunpack.c.l.b16 %v466
        %v499 = vunpack.c.l.b16 %v467
        %v500 = vunpack.c.l.b16 %v468
        %v501 = vunpack.c.l.b16 %v469
        %v502 = vpack.c.b16 %v487, %v486
        %v503 = vpack.c.b16 %v489, %v488
        %v504 = vpack.c.b16 %v491, %v490
        %v505 = vpack.c.b16 %v493, %v492
        %v506 = vpack.c.b16 %v495, %v494
        %v507 = vpack.c.b16 %v497, %v496
        %v508 = vpack.c.b16 %v499, %v498
        %v509 = vpack.c.b16 %v501, %v500
        %518 = vmatprep.subr.bf16.mxu0 0
        %519 = vmatpush1.bf16.msra.mxu0 %v509
        %520 = vmatprep.subr.bf16.mxu0 0
        %521 = vmatpush1.bf16.msra.mxu0 %v508
        %522 = vmatprep.subr.bf16.mxu0 0
        %523 = vmatpush1.bf16.msra.mxu0 %v507
        %524 = vmatprep.subr.bf16.mxu0 0
        %525 = vmatpush1.bf16.msra.mxu0 %v506
        %526 = vmatprep.subr.bf16.mxu0 0
        %527 = vmatpush1.bf16.msra.mxu0 %v505
        %528 = vmatprep.subr.bf16.mxu0 0
        %529 = vmatpush1.bf16.msra.mxu0 %v504
        %530 = vmatprep.subr.bf16.mxu0 0
        %531 = vmatpush1.bf16.msra.mxu0 %v503
        %532 = vmatprep.subr.bf16.mxu0 0
        %533 = vmatpush1.bf16.msra.mxu0 %v502
        %534 = vmatprep.subr.bf16.mxu0 0
        %535 = vmatpush2.bf16.msra.mxu0 0
        %536 = vmatprep.subr.bf16.mxu0 0
        %537 = vmatpush2.bf16.msra.mxu0 0
        %538 = vmatprep.subr.bf16.mxu0 0
        %539 = vmatpush2.bf16.msra.mxu0 0
        %540 = vmatprep.subr.bf16.mxu0 0
        %541 = vmatpush2.bf16.msra.mxu0 0
        %542 = vmatprep.subr.bf16.mxu0 0
        %543 = vmatpush2.bf16.msra.mxu0 0
        %544 = vmatprep.subr.bf16.mxu0 0
        %545 = vmatpush2.bf16.msra.mxu0 0
        %546 = vmatprep.subr.bf16.mxu0 0
        %547 = vmatpush2.bf16.msra.mxu0 0
        %548 = vmatprep.subr.bf16.mxu0 0
        %549 = vmatpush2.bf16.msra.mxu0 0
        %550 = vmatprep.mubr.bf16.mxu0 0
        %551 = vmatmul.mubr.bf16.gmra.mxu0 %v452
        %v552 = vpop.f32.mrf.mxu0
        %v553 = vadd.f32 0.0, %v552
        %v554 = vpop.f32.mrf.mxu0
        %v555 = vpop.f32.mrf.mxu0
        %v556 = vadd.f32 0.0, %v555
        %v557 = vpop.f32.mrf.mxu0
        %558 = vdwg.mxu0
        %v559 = vld [vmem:[%s2] sm:$0x1]
        %v561 = vlaneseq
        %v562 = vshrl.u32 %v561, 7
        %v563 = vsub.s32 0, %v562
        %v564 = vrot.slane %v559, %v563
        %v566 = vmul.f32 %v553, %v564
        %v567 = vmul.f32 %v556, %v564
        %v568 = vld [vmem:[%s3] sm:$0x1]
        %v570 = vlaneseq
        %v571 = vshrl.u32 %v570, 7
        %v572 = vsub.s32 0, %v571
        %v573 = vrot.slane %v568, %v572
        %v575 = vadd.f32 %v566, %v573
        %v576 = vadd.f32 %v567, %v573
        %v577 = vmax.f32 %v575, 0.0
        %v578 = vmax.f32 %v576, 0.0
        %v579 = vstv %s444
        %v580 = vmul.f32 %v577, %v579
        %v581 = vmul.f32 %v578, %v579
        %v582 = vpack.c.bf16 %v581, %v580
        %v583 = vpack.c.bf16 %v423, %v422
        %v584 = vpack.c.bf16 %v425, %v424
        %v585 = vpack.c.bf16 %v427, %v426
        %v586 = vpack.c.bf16 %v429, %v428
        %v587 = vpack.c.bf16 %v431, %v430
        %v588 = vpack.c.bf16 %v433, %v432
        %v589 = vpack.c.bf16 %v435, %v434
        %v590 = vpack.c.bf16 %v437, %v436
        %v592 = vsel %vm449, %v583, 0
        %v595 = vsel %vm449, %v584, 0
        %v598 = vsel %vm449, %v585, 0
        %v601 = vsel %vm449, %v586, 0
        %v604 = vsel %vm449, %v587, 0
        %v607 = vsel %vm449, %v588, 0
        %v610 = vsel %vm449, %v589, 0
        %v613 = vsel %vm449, %v590, 0
        %615 = vmatprep.subr.bf16.mxu0 0
        %616 = vmatpush1.bf16.msra.mxu0 %v509
        %617 = vmatprep.subr.bf16.mxu0 0
        %618 = vmatpush1.bf16.msra.mxu0 %v508
        %619 = vmatprep.subr.bf16.mxu0 0
        %620 = vmatpush1.bf16.msra.mxu0 %v507
        %621 = vmatprep.subr.bf16.mxu0 0
        %622 = vmatpush1.bf16.msra.mxu0 %v506
        %623 = vmatprep.subr.bf16.mxu0 0
        %624 = vmatpush1.bf16.msra.mxu0 %v505
        %625 = vmatprep.subr.bf16.mxu0 0
        %626 = vmatpush1.bf16.msra.mxu0 %v504
        %627 = vmatprep.subr.bf16.mxu0 0
        %628 = vmatpush1.bf16.msra.mxu0 %v503
        %629 = vmatprep.subr.bf16.mxu0 0
        %630 = vmatpush1.bf16.msra.mxu0 %v502
        %631 = vmatprep.subr.bf16.mxu0 0
        %632 = vmatpush2.bf16.msra.mxu0 0
        %633 = vmatprep.subr.bf16.mxu0 0
        %634 = vmatpush2.bf16.msra.mxu0 0
        %635 = vmatprep.subr.bf16.mxu0 0
        %636 = vmatpush2.bf16.msra.mxu0 0
        %637 = vmatprep.subr.bf16.mxu0 0
        %638 = vmatpush2.bf16.msra.mxu0 0
        %639 = vmatprep.subr.bf16.mxu0 0
        %640 = vmatpush2.bf16.msra.mxu0 0
        %641 = vmatprep.subr.bf16.mxu0 0
        %642 = vmatpush2.bf16.msra.mxu0 0
        %643 = vmatprep.subr.bf16.mxu0 0
        %644 = vmatpush2.bf16.msra.mxu0 0
        %645 = vmatprep.subr.bf16.mxu0 0
        %646 = vmatpush2.bf16.msra.mxu0 0
        %647 = vmatprep.mubr.bf16.mxu0 0
        %648 = vmatmul.mubr.bf16.gmra.mxu0 %v592
        %v649 = vpop.f32.mrf.mxu0
        %v650 = vadd.f32 0.0, %v649
        %v651 = vpop.f32.mrf.mxu0
        %v652 = vpop.f32.mrf.mxu0
        %v653 = vadd.f32 0.0, %v652
        %v654 = vpop.f32.mrf.mxu0
        %655 = vmatprep.mubr.bf16.mxu0 0
        %656 = vmatmul.mubr.bf16.gmra.mxu0 %v595
        %v657 = vpop.f32.mrf.mxu0
        %v658 = vadd.f32 0.0, %v657
        %v659 = vpop.f32.mrf.mxu0
        %v660 = vpop.f32.mrf.mxu0
        %v661 = vadd.f32 0.0, %v660
        %v662 = vpop.f32.mrf.mxu0
        %663 = vmatprep.mubr.bf16.mxu0 0
        %664 = vmatmul.mubr.bf16.gmra.mxu0 %v598
        %v665 = vpop.f32.mrf.mxu0
        %v666 = vadd.f32 0.0, %v665
        %v667 = vpop.f32.mrf.mxu0
        %v668 = vpop.f32.mrf.mxu0
        %v669 = vadd.f32 0.0, %v668
        %v670 = vpop.f32.mrf.mxu0
        %671 = vmatprep.mubr.bf16.mxu0 0
        %672 = vmatmul.mubr.bf16.gmra.mxu0 %v601
        %v673 = vpop.f32.mrf.mxu0
        %v674 = vadd.f32 0.0, %v673
        %v675 = vpop.f32.mrf.mxu0
        %v676 = vpop.f32.mrf.mxu0
        %v677 = vadd.f32 0.0, %v676
        %v678 = vpop.f32.mrf.mxu0
        %679 = vmatprep.mubr.bf16.mxu0 0
        %680 = vmatmul.mubr.bf16.gmra.mxu0 %v604
        %v681 = vpop.f32.mrf.mxu0
        %v682 = vadd.f32 0.0, %v681
        %v683 = vpop.f32.mrf.mxu0
        %v684 = vpop.f32.mrf.mxu0
        %v685 = vadd.f32 0.0, %v684
        %v686 = vpop.f32.mrf.mxu0
        %687 = vmatprep.mubr.bf16.mxu0 0
        %688 = vmatmul.mubr.bf16.gmra.mxu0 %v607
        %v689 = vpop.f32.mrf.mxu0
        %v690 = vadd.f32 0.0, %v689
        %v691 = vpop.f32.mrf.mxu0
        %v692 = vpop.f32.mrf.mxu0
        %v693 = vadd.f32 0.0, %v692
        %v694 = vpop.f32.mrf.mxu0
        %695 = vmatprep.mubr.bf16.mxu0 0
        %696 = vmatmul.mubr.bf16.gmra.mxu0 %v610
        %v697 = vpop.f32.mrf.mxu0
        %v698 = vadd.f32 0.0, %v697
        %v699 = vpop.f32.mrf.mxu0
        %v700 = vpop.f32.mrf.mxu0
        %v701 = vadd.f32 0.0, %v700
        %v702 = vpop.f32.mrf.mxu0
        %703 = vmatprep.mubr.bf16.mxu0 0
        %704 = vmatmul.mubr.bf16.gmra.mxu0 %v613
        %v705 = vpop.f32.mrf.mxu0
        %v706 = vadd.f32 0.0, %v705
        %v707 = vpop.f32.mrf.mxu0
        %v708 = vpop.f32.mrf.mxu0
        %v709 = vadd.f32 0.0, %v708
        %v710 = vpop.f32.mrf.mxu0
        %711 = vdwg.mxu0
        %v712 = vmul.f32 %v650, %v564
        %v713 = vmul.f32 %v653, %v564
        %v714 = vmul.f32 %v658, %v564
        %v715 = vmul.f32 %v661, %v564
        %v716 = vmul.f32 %v666, %v564
        %v717 = vmul.f32 %v669, %v564
        %v718 = vmul.f32 %v674, %v564
        %v719 = vmul.f32 %v677, %v564
        %v720 = vmul.f32 %v682, %v564
        %v721 = vmul.f32 %v685, %v564
        %v722 = vmul.f32 %v690, %v564
        %v723 = vmul.f32 %v693, %v564
        %v724 = vmul.f32 %v698, %v564
        %v725 = vmul.f32 %v701, %v564
        %v726 = vmul.f32 %v706, %v564
        %v727 = vmul.f32 %v709, %v564
        %v728 = vadd.f32 %v712, %v573
        %v729 = vadd.f32 %v713, %v573
        %v730 = vadd.f32 %v714, %v573
        %v731 = vadd.f32 %v715, %v573
        %v732 = vadd.f32 %v716, %v573
        %v733 = vadd.f32 %v717, %v573
        %v734 = vadd.f32 %v718, %v573
        %v735 = vadd.f32 %v719, %v573
        %v736 = vadd.f32 %v720, %v573
        %v737 = vadd.f32 %v721, %v573
        %v738 = vadd.f32 %v722, %v573
        %v739 = vadd.f32 %v723, %v573
        %v740 = vadd.f32 %v724, %v573
        %v741 = vadd.f32 %v725, %v573
        %v742 = vadd.f32 %v726, %v573
        %v743 = vadd.f32 %v727, %v573
        %v744 = vmax.f32 %v728, 0.0
        %v745 = vmax.f32 %v729, 0.0
        %v746 = vmax.f32 %v730, 0.0
        %v747 = vmax.f32 %v731, 0.0
        %v748 = vmax.f32 %v732, 0.0
        %v749 = vmax.f32 %v733, 0.0
        %v750 = vmax.f32 %v734, 0.0
        %v751 = vmax.f32 %v735, 0.0
        %v752 = vmax.f32 %v736, 0.0
        %v753 = vmax.f32 %v737, 0.0
        %v754 = vmax.f32 %v738, 0.0
        %v755 = vmax.f32 %v739, 0.0
        %v756 = vmax.f32 %v740, 0.0
        %v757 = vmax.f32 %v741, 0.0
        %v758 = vmax.f32 %v742, 0.0
        %v759 = vmax.f32 %v743, 0.0
        %v760 = vpack.c.bf16 %v745, %v744
        %v761 = vpack.c.bf16 %v747, %v746
        %v762 = vpack.c.bf16 %v749, %v748
        %v763 = vpack.c.bf16 %v751, %v750
        %v764 = vpack.c.bf16 %v753, %v752
        %v765 = vpack.c.bf16 %v755, %v754
        %v766 = vpack.c.bf16 %v757, %v756
        %v767 = vpack.c.bf16 %v759, %v758
        %v768 = vpack.c.bf16 %v441, %v440
        %v770 = vsel %vm449, %v768, 0
        %772 = vmatprep.subr.bf16.mxu0 0
        %773 = vmatpush1.bf16.msra.mxu0 %v509
        %774 = vmatprep.subr.bf16.mxu0 0
        %775 = vmatpush1.bf16.msra.mxu0 %v508
        %776 = vmatprep.subr.bf16.mxu0 0
        %777 = vmatpush1.bf16.msra.mxu0 %v507
        %778 = vmatprep.subr.bf16.mxu0 0
        %779 = vmatpush1.bf16.msra.mxu0 %v506
        %780 = vmatprep.subr.bf16.mxu0 0
        %781 = vmatpush1.bf16.msra.mxu0 %v505
        %782 = vmatprep.subr.bf16.mxu0 0
        %783 = vmatpush1.bf16.msra.mxu0 %v504
        %784 = vmatprep.subr.bf16.mxu0 0
        %785 = vmatpush1.bf16.msra.mxu0 %v503
        %786 = vmatprep.subr.bf16.mxu0 0
        %787 = vmatpush1.bf16.msra.mxu0 %v502
        %788 = vmatprep.subr.bf16.mxu0 0
        %789 = vmatpush2.bf16.msra.mxu0 0
        %790 = vmatprep.subr.bf16.mxu0 0
        %791 = vmatpush2.bf16.msra.mxu0 0
        %792 = vmatprep.subr.bf16.mxu0 0
        %793 = vmatpush2.bf16.msra.mxu0 0
        %794 = vmatprep.subr.bf16.mxu0 0
        %795 = vmatpush2.bf16.msra.mxu0 0
        %796 = vmatprep.subr.bf16.mxu0 0
        %797 = vmatpush2.bf16.msra.mxu0 0
        %798 = vmatprep.subr.bf16.mxu0 0
        %799 = vmatpush2.bf16.msra.mxu0 0
        %800 = vmatprep.subr.bf16.mxu0 0
        %801 = vmatpush2.bf16.msra.mxu0 0
        %802 = vmatprep.subr.bf16.mxu0 0
        %803 = vmatpush2.bf16.msra.mxu0 0
        %804 = vmatprep.mubr.bf16.mxu0 0
        %805 = vmatmul.mubr.bf16.gmra.mxu0 %v770
        %v806 = vpop.f32.mrf.mxu0
        %v807 = vadd.f32 0.0, %v806
        %v808 = vpop.f32.mrf.mxu0
        %v809 = vpop.f32.mrf.mxu0
        %v810 = vadd.f32 0.0, %v809
        %v811 = vpop.f32.mrf.mxu0
        %812 = vdwg.mxu0
        %v813 = vmul.f32 %v807, %v564
        %v814 = vmul.f32 %v810, %v564
        %v815 = vadd.f32 %v813, %v573
        %v816 = vadd.f32 %v814, %v573
        %v817 = vmax.f32 %v815, 0.0
        %v818 = vmax.f32 %v816, 0.0
        %v819 = vstv %s447
        %v820 = vmul.f32 %v817, %v819
        %v821 = vmul.f32 %v818, %v819
        %v822 = vpack.c.bf16 %v821, %v820
        %v824 = vshrl.u32 %v582, 16
        %v826 = vrot.slane %v824, 7
        %v827 = vshll.u32 %v582, 16
        %v829 = vor.u32 %v826, %v827
        %v831 = vshrl.u32 %v760, 16
        %v833 = vrot.slane %v831, 7
        %v834 = vshll.u32 %v760, 16
        %v836 = vor.u32 %v833, %v834
        %v838 = vshrl.u32 %v761, 16
        %v840 = vrot.slane %v838, 7
        %v841 = vshll.u32 %v761, 16
        %v843 = vor.u32 %v840, %v841
        %v845 = vshrl.u32 %v762, 16
        %v847 = vrot.slane %v845, 7
        %v848 = vshll.u32 %v762, 16
        %v850 = vor.u32 %v847, %v848
        %v852 = vshrl.u32 %v763, 16
        %v854 = vrot.slane %v852, 7
        %v855 = vshll.u32 %v763, 16
        %v857 = vor.u32 %v854, %v855
        %v859 = vshrl.u32 %v764, 16
        %v861 = vrot.slane %v859, 7
        %v862 = vshll.u32 %v764, 16
        %v864 = vor.u32 %v861, %v862
        %v866 = vshrl.u32 %v765, 16
        %v868 = vrot.slane %v866, 7
        %v869 = vshll.u32 %v765, 16
        %v871 = vor.u32 %v868, %v869
        %v873 = vshrl.u32 %v766, 16
        %v875 = vrot.slane %v873, 7
        %v876 = vshll.u32 %v766, 16
        %v878 = vor.u32 %v875, %v876
        %v880 = vshrl.u32 %v767, 16
        %v882 = vrot.slane %v880, 7
        %v883 = vshll.u32 %v767, 16
        %v885 = vor.u32 %v882, %v883
        %v887 = vshrl.u32 %v822, 16
        %v889 = vrot.slane %v887, 7
        %v890 = vshll.u32 %v822, 16
        %v892 = vor.u32 %v889, %v890
        %vm913 = vcmask 1040384
        %vm914 = vsmask.f32 256
        %vm915 = vmand %vm913, %vm914
        %v916 = vsel %vm915, 0, %v829
        %v917 = vsel %vm915, 0, %v836
        %v918 = vsel %vm915, 0, %v843
        %v919 = vsel %vm915, 0, %v850
        %v920 = vsel %vm915, 0, %v857
        %v921 = vsel %vm915, 0, %v864
        %v922 = vsel %vm915, 0, %v871
        %v923 = vsel %vm915, 0, %v878
        %v924 = vsel %vm915, 0, %v885
        %v925 = vsel %vm915, 0, %v892
        %v926 = vsel %vm915, %v826, 0
        %v927 = vsel %vm915, %v833, 0
        %v928 = vsel %vm915, %v840, 0
        %v929 = vsel %vm915, %v847, 0
        %v930 = vsel %vm915, %v854, 0
        %v931 = vsel %vm915, %v861, 0
        %v932 = vsel %vm915, %v868, 0
        %v933 = vsel %vm915, %v875, 0
        %v934 = vsel %vm915, %v882, 0
        %v935 = vsel %vm915, %v889, 0
        %v956 = vcombine.high %v916, %v916
        %v958 = vunpack.c.l.s4 1966171168
        %v959 = vunpack.c.0.s8 %v958
        %v960 = vlaneseq
        %v961 = vshrl.u32 %v960, 7
        %v962 = vsub.s32 %v959, %v961
        %v963 = vrot.slane %v916, %v962
        %v965 = vunpack.c.l.s4 1966171168
        %v966 = vunpack.c.0.s8 %v965
        %v967 = vlaneseq
        %v968 = vshrl.u32 %v967, 7
        %v969 = vsub.s32 %v966, %v968
        %v970 = vrot.slane %v956, %v969
        %v971 = vcombine.high %v963, %v963
        %v972 = vcombine.high %v970, %v970
        %v974 = vunpack.c.l.s4 1966171168
        %v975 = vunpack.c.0.s8 %v974
        %v976 = vlaneseq
        %v977 = vshrl.u32 %v976, 7
        %v978 = vsub.s32 %v975, %v977
        %v979 = vrot.slane %v963, %v978
        %v981 = vunpack.c.l.s4 1966171168
        %v982 = vunpack.c.0.s8 %v981
        %v983 = vlaneseq
        %v984 = vshrl.u32 %v983, 7
        %v985 = vsub.s32 %v982, %v984
        %v986 = vrot.slane %v970, %v985
        %v988 = vunpack.c.l.s4 1966171168
        %v989 = vunpack.c.0.s8 %v988
        %v990 = vlaneseq
        %v991 = vshrl.u32 %v990, 7
        %v992 = vsub.s32 %v989, %v991
        %v993 = vrot.slane %v971, %v992
        %v995 = vunpack.c.l.s4 1966171168
        %v996 = vunpack.c.0.s8 %v995
        %v997 = vlaneseq
        %v998 = vshrl.u32 %v997, 7
        %v999 = vsub.s32 %v996, %v998
        %v1000 = vrot.slane %v972, %v999
        %v1001 = vcombine.high %v979, %v979
        %v1002 = vcombine.high %v986, %v986
        %v1003 = vcombine.high %v993, %v993
        %v1004 = vcombine.high %v1000, %v1000
        %v1006 = vunpack.c.l.s4 1966171168
        %v1007 = vunpack.c.0.s8 %v1006
        %v1008 = vlaneseq
        %v1009 = vshrl.u32 %v1008, 7
        %v1010 = vsub.s32 %v1007, %v1009
        %v1011 = vrot.slane %v926, %v1010
        %v1013 = vunpack.c.l.s4 1966171168
        %v1014 = vunpack.c.0.s8 %v1013
        %v1015 = vlaneseq
        %v1016 = vshrl.u32 %v1015, 7
        %v1017 = vsub.s32 %v1014, %v1016
        %v1018 = vrot.slane %v1011, %v1017
        %v1019 = vcombine.high %v917, %v917
        %v1021 = vunpack.c.l.s4 1966171168
        %v1022 = vunpack.c.0.s8 %v1021
        %v1023 = vlaneseq
        %v1024 = vshrl.u32 %v1023, 7
        %v1025 = vsub.s32 %v1022, %v1024
        %v1026 = vrot.slane %v917, %v1025
        %v1028 = vunpack.c.l.s4 1966171168
        %v1029 = vunpack.c.0.s8 %v1028
        %v1030 = vlaneseq
        %v1031 = vshrl.u32 %v1030, 7
        %v1032 = vsub.s32 %v1029, %v1031
        %v1033 = vrot.slane %v1019, %v1032
        %v1034 = vcombine.high %v1026, %v1026
        %v1035 = vcombine.high %v1033, %v1033
        %v1037 = vunpack.c.l.s4 1966171168
        %v1038 = vunpack.c.0.s8 %v1037
        %v1039 = vlaneseq
        %v1040 = vshrl.u32 %v1039, 7
        %v1041 = vsub.s32 %v1038, %v1040
        %v1042 = vrot.slane %v1026, %v1041
        %v1044 = vunpack.c.l.s4 1966171168
        %v1045 = vunpack.c.0.s8 %v1044
        %v1046 = vlaneseq
        %v1047 = vshrl.u32 %v1046, 7
        %v1048 = vsub.s32 %v1045, %v1047
        %v1049 = vrot.slane %v1033, %v1048
        %v1051 = vunpack.c.l.s4 1966171168
        %v1052 = vunpack.c.0.s8 %v1051
        %v1053 = vlaneseq
        %v1054 = vshrl.u32 %v1053, 7
        %v1055 = vsub.s32 %v1052, %v1054
        %v1056 = vrot.slane %v1034, %v1055
        %v1058 = vunpack.c.l.s4 1966171168
        %v1059 = vunpack.c.0.s8 %v1058
        %v1060 = vlaneseq
        %v1061 = vshrl.u32 %v1060, 7
        %v1062 = vsub.s32 %v1059, %v1061
        %v1063 = vrot.slane %v1035, %v1062
        %v1064 = vcombine.high %v1042, %v1042
        %v1065 = vcombine.high %v1049, %v1049
        %v1066 = vcombine.high %v1056, %v1056
        %v1067 = vcombine.high %v1063, %v1063
        %v1069 = vunpack.c.l.s4 1966171168
        %v1070 = vunpack.c.0.s8 %v1069
        %v1071 = vlaneseq
        %v1072 = vshrl.u32 %v1071, 7
        %v1073 = vsub.s32 %v1070, %v1072
        %v1074 = vrot.slane %v927, %v1073
        %v1076 = vunpack.c.l.s4 1966171168
        %v1077 = vunpack.c.0.s8 %v1076
        %v1078 = vlaneseq
        %v1079 = vshrl.u32 %v1078, 7
        %v1080 = vsub.s32 %v1077, %v1079
        %v1081 = vrot.slane %v1074, %v1080
        %v1082 = vcombine.high %v918, %v918
        %v1084 = vunpack.c.l.s4 1966171168
        %v1085 = vunpack.c.0.s8 %v1084
        %v1086 = vlaneseq
        %v1087 = vshrl.u32 %v1086, 7
        %v1088 = vsub.s32 %v1085, %v1087
        %v1089 = vrot.slane %v918, %v1088
        %v1091 = vunpack.c.l.s4 1966171168
        %v1092 = vunpack.c.0.s8 %v1091
        %v1093 = vlaneseq
        %v1094 = vshrl.u32 %v1093, 7
        %v1095 = vsub.s32 %v1092, %v1094
        %v1096 = vrot.slane %v1082, %v1095
        %v1097 = vcombine.high %v1089, %v1089
        %v1098 = vcombine.high %v1096, %v1096
        %v1100 = vunpack.c.l.s4 1966171168
        %v1101 = vunpack.c.0.s8 %v1100
        %v1102 = vlaneseq
        %v1103 = vshrl.u32 %v1102, 7
        %v1104 = vsub.s32 %v1101, %v1103
        %v1105 = vrot.slane %v1089, %v1104
        %v1107 = vunpack.c.l.s4 1966171168
        %v1108 = vunpack.c.0.s8 %v1107
        %v1109 = vlaneseq
        %v1110 = vshrl.u32 %v1109, 7
        %v1111 = vsub.s32 %v1108, %v1110
        %v1112 = vrot.slane %v1096, %v1111
        %v1114 = vunpack.c.l.s4 1966171168
        %v1115 = vunpack.c.0.s8 %v1114
        %v1116 = vlaneseq
        %v1117 = vshrl.u32 %v1116, 7
        %v1118 = vsub.s32 %v1115, %v1117
        %v1119 = vrot.slane %v1097, %v1118
        %v1121 = vunpack.c.l.s4 1966171168
        %v1122 = vunpack.c.0.s8 %v1121
        %v1123 = vlaneseq
        %v1124 = vshrl.u32 %v1123, 7
        %v1125 = vsub.s32 %v1122, %v1124
        %v1126 = vrot.slane %v1098, %v1125
        %v1127 = vcombine.high %v1105, %v1105
        %v1128 = vcombine.high %v1112, %v1112
        %v1129 = vcombine.high %v1119, %v1119
        %v1130 = vcombine.high %v1126, %v1126
        %v1132 = vunpack.c.l.s4 1966171168
        %v1133 = vunpack.c.0.s8 %v1132
        %v1134 = vlaneseq
        %v1135 = vshrl.u32 %v1134, 7
        %v1136 = vsub.s32 %v1133, %v1135
        %v1137 = vrot.slane %v928, %v1136
        %v1139 = vunpack.c.l.s4 1966171168
        %v1140 = vunpack.c.0.s8 %v1139
        %v1141 = vlaneseq
        %v1142 = vshrl.u32 %v1141, 7
        %v1143 = vsub.s32 %v1140, %v1142
        %v1144 = vrot.slane %v1137, %v1143
        %v1145 = vcombine.high %v919, %v919
        %v1147 = vunpack.c.l.s4 1966171168
        %v1148 = vunpack.c.0.s8 %v1147
        %v1149 = vlaneseq
        %v1150 = vshrl.u32 %v1149, 7
        %v1151 = vsub.s32 %v1148, %v1150
        %v1152 = vrot.slane %v919, %v1151
        %v1154 = vunpack.c.l.s4 1966171168
        %v1155 = vunpack.c.0.s8 %v1154
        %v1156 = vlaneseq
        %v1157 = vshrl.u32 %v1156, 7
        %v1158 = vsub.s32 %v1155, %v1157
        %v1159 = vrot.slane %v1145, %v1158
        %v1160 = vcombine.high %v1152, %v1152
        %v1161 = vcombine.high %v1159, %v1159
        %v1163 = vunpack.c.l.s4 1966171168
        %v1164 = vunpack.c.0.s8 %v1163
        %v1165 = vlaneseq
        %v1166 = vshrl.u32 %v1165, 7
        %v1167 = vsub.s32 %v1164, %v1166
        %v1168 = vrot.slane %v1152, %v1167
        %v1170 = vunpack.c.l.s4 1966171168
        %v1171 = vunpack.c.0.s8 %v1170
        %v1172 = vlaneseq
        %v1173 = vshrl.u32 %v1172, 7
        %v1174 = vsub.s32 %v1171, %v1173
        %v1175 = vrot.slane %v1159, %v1174
        %v1177 = vunpack.c.l.s4 1966171168
        %v1178 = vunpack.c.0.s8 %v1177
        %v1179 = vlaneseq
        %v1180 = vshrl.u32 %v1179, 7
        %v1181 = vsub.s32 %v1178, %v1180
        %v1182 = vrot.slane %v1160, %v1181
        %v1184 = vunpack.c.l.s4 1966171168
        %v1185 = vunpack.c.0.s8 %v1184
        %v1186 = vlaneseq
        %v1187 = vshrl.u32 %v1186, 7
        %v1188 = vsub.s32 %v1185, %v1187
        %v1189 = vrot.slane %v1161, %v1188
        %v1190 = vcombine.high %v1168, %v1168
        %v1191 = vcombine.high %v1175, %v1175
        %v1192 = vcombine.high %v1182, %v1182
        %v1193 = vcombine.high %v1189, %v1189
        %v1195 = vunpack.c.l.s4 1966171168
        %v1196 = vunpack.c.0.s8 %v1195
        %v1197 = vlaneseq
        %v1198 = vshrl.u32 %v1197, 7
        %v1199 = vsub.s32 %v1196, %v1198
        %v1200 = vrot.slane %v929, %v1199
        %v1202 = vunpack.c.l.s4 1966171168
        %v1203 = vunpack.c.0.s8 %v1202
        %v1204 = vlaneseq
        %v1205 = vshrl.u32 %v1204, 7
        %v1206 = vsub.s32 %v1203, %v1205
        %v1207 = vrot.slane %v1200, %v1206
        %v1208 = vcombine.high %v920, %v920
        %v1210 = vunpack.c.l.s4 1966171168
        %v1211 = vunpack.c.0.s8 %v1210
        %v1212 = vlaneseq
        %v1213 = vshrl.u32 %v1212, 7
        %v1214 = vsub.s32 %v1211, %v1213
        %v1215 = vrot.slane %v920, %v1214
        %v1217 = vunpack.c.l.s4 1966171168
        %v1218 = vunpack.c.0.s8 %v1217
        %v1219 = vlaneseq
        %v1220 = vshrl.u32 %v1219, 7
        %v1221 = vsub.s32 %v1218, %v1220
        %v1222 = vrot.slane %v1208, %v1221
        %v1223 = vcombine.high %v1215, %v1215
        %v1224 = vcombine.high %v1222, %v1222
        %v1226 = vunpack.c.l.s4 1966171168
        %v1227 = vunpack.c.0.s8 %v1226
        %v1228 = vlaneseq
        %v1229 = vshrl.u32 %v1228, 7
        %v1230 = vsub.s32 %v1227, %v1229
        %v1231 = vrot.slane %v1215, %v1230
        %v1233 = vunpack.c.l.s4 1966171168
        %v1234 = vunpack.c.0.s8 %v1233
        %v1235 = vlaneseq
        %v1236 = vshrl.u32 %v1235, 7
        %v1237 = vsub.s32 %v1234, %v1236
        %v1238 = vrot.slane %v1222, %v1237
        %v1240 = vunpack.c.l.s4 1966171168
        %v1241 = vunpack.c.0.s8 %v1240
        %v1242 = vlaneseq
        %v1243 = vshrl.u32 %v1242, 7
        %v1244 = vsub.s32 %v1241, %v1243
        %v1245 = vrot.slane %v1223, %v1244
        %v1247 = vunpack.c.l.s4 1966171168
        %v1248 = vunpack.c.0.s8 %v1247
        %v1249 = vlaneseq
        %v1250 = vshrl.u32 %v1249, 7
        %v1251 = vsub.s32 %v1248, %v1250
        %v1252 = vrot.slane %v1224, %v1251
        %v1253 = vcombine.high %v1231, %v1231
        %v1254 = vcombine.high %v1238, %v1238
        %v1255 = vcombine.high %v1245, %v1245
        %v1256 = vcombine.high %v1252, %v1252
        %v1258 = vunpack.c.l.s4 1966171168
        %v1259 = vunpack.c.0.s8 %v1258
        %v1260 = vlaneseq
        %v1261 = vshrl.u32 %v1260, 7
        %v1262 = vsub.s32 %v1259, %v1261
        %v1263 = vrot.slane %v930, %v1262
        %v1265 = vunpack.c.l.s4 1966171168
        %v1266 = vunpack.c.0.s8 %v1265
        %v1267 = vlaneseq
        %v1268 = vshrl.u32 %v1267, 7
        %v1269 = vsub.s32 %v1266, %v1268
        %v1270 = vrot.slane %v1263, %v1269
        %v1271 = vcombine.high %v921, %v921
        %v1273 = vunpack.c.l.s4 1966171168
        %v1274 = vunpack.c.0.s8 %v1273
        %v1275 = vlaneseq
        %v1276 = vshrl.u32 %v1275, 7
        %v1277 = vsub.s32 %v1274, %v1276
        %v1278 = vrot.slane %v921, %v1277
        %v1280 = vunpack.c.l.s4 1966171168
        %v1281 = vunpack.c.0.s8 %v1280
        %v1282 = vlaneseq
        %v1283 = vshrl.u32 %v1282, 7
        %v1284 = vsub.s32 %v1281, %v1283
        %v1285 = vrot.slane %v1271, %v1284
        %v1286 = vcombine.high %v1278, %v1278
        %v1287 = vcombine.high %v1285, %v1285
        %v1289 = vunpack.c.l.s4 1966171168
        %v1290 = vunpack.c.0.s8 %v1289
        %v1291 = vlaneseq
        %v1292 = vshrl.u32 %v1291, 7
        %v1293 = vsub.s32 %v1290, %v1292
        %v1294 = vrot.slane %v1278, %v1293
        %v1296 = vunpack.c.l.s4 1966171168
        %v1297 = vunpack.c.0.s8 %v1296
        %v1298 = vlaneseq
        %v1299 = vshrl.u32 %v1298, 7
        %v1300 = vsub.s32 %v1297, %v1299
        %v1301 = vrot.slane %v1285, %v1300
        %v1303 = vunpack.c.l.s4 1966171168
        %v1304 = vunpack.c.0.s8 %v1303
        %v1305 = vlaneseq
        %v1306 = vshrl.u32 %v1305, 7
        %v1307 = vsub.s32 %v1304, %v1306
        %v1308 = vrot.slane %v1286, %v1307
        %v1310 = vunpack.c.l.s4 1966171168
        %v1311 = vunpack.c.0.s8 %v1310
        %v1312 = vlaneseq
        %v1313 = vshrl.u32 %v1312, 7
        %v1314 = vsub.s32 %v1311, %v1313
        %v1315 = vrot.slane %v1287, %v1314
        %v1316 = vcombine.high %v1294, %v1294
        %v1317 = vcombine.high %v1301, %v1301
        %v1318 = vcombine.high %v1308, %v1308
        %v1319 = vcombine.high %v1315, %v1315
        %v1321 = vunpack.c.l.s4 1966171168
        %v1322 = vunpack.c.0.s8 %v1321
        %v1323 = vlaneseq
        %v1324 = vshrl.u32 %v1323, 7
        %v1325 = vsub.s32 %v1322, %v1324
        %v1326 = vrot.slane %v931, %v1325
        %v1328 = vunpack.c.l.s4 1966171168
        %v1329 = vunpack.c.0.s8 %v1328
        %v1330 = vlaneseq
        %v1331 = vshrl.u32 %v1330, 7
        %v1332 = vsub.s32 %v1329, %v1331
        %v1333 = vrot.slane %v1326, %v1332
        %v1334 = vcombine.high %v922, %v922
        %v1336 = vunpack.c.l.s4 1966171168
        %v1337 = vunpack.c.0.s8 %v1336
        %v1338 = vlaneseq
        %v1339 = vshrl.u32 %v1338, 7
        %v1340 = vsub.s32 %v1337, %v1339
        %v1341 = vrot.slane %v922, %v1340
        %v1343 = vunpack.c.l.s4 1966171168
        %v1344 = vunpack.c.0.s8 %v1343
        %v1345 = vlaneseq
        %v1346 = vshrl.u32 %v1345, 7
        %v1347 = vsub.s32 %v1344, %v1346
        %v1348 = vrot.slane %v1334, %v1347
        %v1349 = vcombine.high %v1341, %v1341
        %v1350 = vcombine.high %v1348, %v1348
        %v1352 = vunpack.c.l.s4 1966171168
        %v1353 = vunpack.c.0.s8 %v1352
        %v1354 = vlaneseq
        %v1355 = vshrl.u32 %v1354, 7
        %v1356 = vsub.s32 %v1353, %v1355
        %v1357 = vrot.slane %v1341, %v1356
        %v1359 = vunpack.c.l.s4 1966171168
        %v1360 = vunpack.c.0.s8 %v1359
        %v1361 = vlaneseq
        %v1362 = vshrl.u32 %v1361, 7
        %v1363 = vsub.s32 %v1360, %v1362
        %v1364 = vrot.slane %v1348, %v1363
        %v1366 = vunpack.c.l.s4 1966171168
        %v1367 = vunpack.c.0.s8 %v1366
        %v1368 = vlaneseq
        %v1369 = vshrl.u32 %v1368, 7
        %v1370 = vsub.s32 %v1367, %v1369
        %v1371 = vrot.slane %v1349, %v1370
        %v1373 = vunpack.c.l.s4 1966171168
        %v1374 = vunpack.c.0.s8 %v1373
        %v1375 = vlaneseq
        %v1376 = vshrl.u32 %v1375, 7
        %v1377 = vsub.s32 %v1374, %v1376
        %v1378 = vrot.slane %v1350, %v1377
        %v1379 = vcombine.high %v1357, %v1357
        %v1380 = vcombine.high %v1364, %v1364
        %v1381 = vcombine.high %v1371, %v1371
        %v1382 = vcombine.high %v1378, %v1378
        %v1384 = vunpack.c.l.s4 1966171168
        %v1385 = vunpack.c.0.s8 %v1384
        %v1386 = vlaneseq
        %v1387 = vshrl.u32 %v1386, 7
        %v1388 = vsub.s32 %v1385, %v1387
        %v1389 = vrot.slane %v932, %v1388
        %v1391 = vunpack.c.l.s4 1966171168
        %v1392 = vunpack.c.0.s8 %v1391
        %v1393 = vlaneseq
        %v1394 = vshrl.u32 %v1393, 7
        %v1395 = vsub.s32 %v1392, %v1394
        %v1396 = vrot.slane %v1389, %v1395
        %v1397 = vcombine.high %v923, %v923
        %v1399 = vunpack.c.l.s4 1966171168
        %v1400 = vunpack.c.0.s8 %v1399
        %v1401 = vlaneseq
        %v1402 = vshrl.u32 %v1401, 7
        %v1403 = vsub.s32 %v1400, %v1402
        %v1404 = vrot.slane %v923, %v1403
        %v1406 = vunpack.c.l.s4 1966171168
        %v1407 = vunpack.c.0.s8 %v1406
        %v1408 = vlaneseq
        %v1409 = vshrl.u32 %v1408, 7
        %v1410 = vsub.s32 %v1407, %v1409
        %v1411 = vrot.slane %v1397, %v1410
        %v1412 = vcombine.high %v1404, %v1404
        %v1413 = vcombine.high %v1411, %v1411
        %v1415 = vunpack.c.l.s4 1966171168
        %v1416 = vunpack.c.0.s8 %v1415
        %v1417 = vlaneseq
        %v1418 = vshrl.u32 %v1417, 7
        %v1419 = vsub.s32 %v1416, %v1418
        %v1420 = vrot.slane %v1404, %v1419
        %v1422 = vunpack.c.l.s4 1966171168
        %v1423 = vunpack.c.0.s8 %v1422
        %v1424 = vlaneseq
        %v1425 = vshrl.u32 %v1424, 7
        %v1426 = vsub.s32 %v1423, %v1425
        %v1427 = vrot.slane %v1411, %v1426
        %v1429 = vunpack.c.l.s4 1966171168
        %v1430 = vunpack.c.0.s8 %v1429
        %v1431 = vlaneseq
        %v1432 = vshrl.u32 %v1431, 7
        %v1433 = vsub.s32 %v1430, %v1432
        %v1434 = vrot.slane %v1412, %v1433
        %v1436 = vunpack.c.l.s4 1966171168
        %v1437 = vunpack.c.0.s8 %v1436
        %v1438 = vlaneseq
        %v1439 = vshrl.u32 %v1438, 7
        %v1440 = vsub.s32 %v1437, %v1439
        %v1441 = vrot.slane %v1413, %v1440
        %v1442 = vcombine.high %v1420, %v1420
        %v1443 = vcombine.high %v1427, %v1427
        %v1444 = vcombine.high %v1434, %v1434
        %v1445 = vcombine.high %v1441, %v1441
        %v1447 = vunpack.c.l.s4 1966171168
        %v1448 = vunpack.c.0.s8 %v1447
        %v1449 = vlaneseq
        %v1450 = vshrl.u32 %v1449, 7
        %v1451 = vsub.s32 %v1448, %v1450
        %v1452 = vrot.slane %v933, %v1451
        %v1454 = vunpack.c.l.s4 1966171168
        %v1455 = vunpack.c.0.s8 %v1454
        %v1456 = vlaneseq
        %v1457 = vshrl.u32 %v1456, 7
        %v1458 = vsub.s32 %v1455, %v1457
        %v1459 = vrot.slane %v1452, %v1458
        %v1460 = vcombine.high %v924, %v924
        %v1462 = vunpack.c.l.s4 1966171168
        %v1463 = vunpack.c.0.s8 %v1462
        %v1464 = vlaneseq
        %v1465 = vshrl.u32 %v1464, 7
        %v1466 = vsub.s32 %v1463, %v1465
        %v1467 = vrot.slane %v924, %v1466
        %v1469 = vunpack.c.l.s4 1966171168
        %v1470 = vunpack.c.0.s8 %v1469
        %v1471 = vlaneseq
        %v1472 = vshrl.u32 %v1471, 7
        %v1473 = vsub.s32 %v1470, %v1472
        %v1474 = vrot.slane %v1460, %v1473
        %v1475 = vcombine.high %v1467, %v1467
        %v1476 = vcombine.high %v1474, %v1474
        %v1478 = vunpack.c.l.s4 1966171168
        %v1479 = vunpack.c.0.s8 %v1478
        %v1480 = vlaneseq
        %v1481 = vshrl.u32 %v1480, 7
        %v1482 = vsub.s32 %v1479, %v1481
        %v1483 = vrot.slane %v1467, %v1482
        %v1485 = vunpack.c.l.s4 1966171168
        %v1486 = vunpack.c.0.s8 %v1485
        %v1487 = vlaneseq
        %v1488 = vshrl.u32 %v1487, 7
        %v1489 = vsub.s32 %v1486, %v1488
        %v1490 = vrot.slane %v1474, %v1489
        %v1492 = vunpack.c.l.s4 1966171168
        %v1493 = vunpack.c.0.s8 %v1492
        %v1494 = vlaneseq
        %v1495 = vshrl.u32 %v1494, 7
        %v1496 = vsub.s32 %v1493, %v1495
        %v1497 = vrot.slane %v1475, %v1496
        %v1499 = vunpack.c.l.s4 1966171168
        %v1500 = vunpack.c.0.s8 %v1499
        %v1501 = vlaneseq
        %v1502 = vshrl.u32 %v1501, 7
        %v1503 = vsub.s32 %v1500, %v1502
        %v1504 = vrot.slane %v1476, %v1503
        %v1505 = vcombine.high %v1483, %v1483
        %v1506 = vcombine.high %v1490, %v1490
        %v1507 = vcombine.high %v1497, %v1497
        %v1508 = vcombine.high %v1504, %v1504
        %v1510 = vunpack.c.l.s4 1966171168
        %v1511 = vunpack.c.0.s8 %v1510
        %v1512 = vlaneseq
        %v1513 = vshrl.u32 %v1512, 7
        %v1514 = vsub.s32 %v1511, %v1513
        %v1515 = vrot.slane %v934, %v1514
        %v1517 = vunpack.c.l.s4 1966171168
        %v1518 = vunpack.c.0.s8 %v1517
        %v1519 = vlaneseq
        %v1520 = vshrl.u32 %v1519, 7
        %v1521 = vsub.s32 %v1518, %v1520
        %v1522 = vrot.slane %v1515, %v1521
        %v1523 = vcombine.high %v925, %v925
        %v1525 = vunpack.c.l.s4 1966171168
        %v1526 = vunpack.c.0.s8 %v1525
        %v1527 = vlaneseq
        %v1528 = vshrl.u32 %v1527, 7
        %v1529 = vsub.s32 %v1526, %v1528
        %v1530 = vrot.slane %v925, %v1529
        %v1532 = vunpack.c.l.s4 1966171168
        %v1533 = vunpack.c.0.s8 %v1532
        %v1534 = vlaneseq
        %v1535 = vshrl.u32 %v1534, 7
        %v1536 = vsub.s32 %v1533, %v1535
        %v1537 = vrot.slane %v1523, %v1536
        %v1538 = vcombine.high %v1530, %v1530
        %v1539 = vcombine.high %v1537, %v1537
        %v1541 = vunpack.c.l.s4 1966171168
        %v1542 = vunpack.c.0.s8 %v1541
        %v1543 = vlaneseq
        %v1544 = vshrl.u32 %v1543, 7
        %v1545 = vsub.s32 %v1542, %v1544
        %v1546 = vrot.slane %v1530, %v1545
        %v1548 = vunpack.c.l.s4 1966171168
        %v1549 = vunpack.c.0.s8 %v1548
        %v1550 = vlaneseq
        %v1551 = vshrl.u32 %v1550, 7
        %v1552 = vsub.s32 %v1549, %v1551
        %v1553 = vrot.slane %v1537, %v1552
        %v1555 = vunpack.c.l.s4 1966171168
        %v1556 = vunpack.c.0.s8 %v1555
        %v1557 = vlaneseq
        %v1558 = vshrl.u32 %v1557, 7
        %v1559 = vsub.s32 %v1556, %v1558
        %v1560 = vrot.slane %v1538, %v1559
        %v1562 = vunpack.c.l.s4 1966171168
        %v1563 = vunpack.c.0.s8 %v1562
        %v1564 = vlaneseq
        %v1565 = vshrl.u32 %v1564, 7
        %v1566 = vsub.s32 %v1563, %v1565
        %v1567 = vrot.slane %v1539, %v1566
        %v1568 = vcombine.high %v1546, %v1546
        %v1569 = vcombine.high %v1553, %v1553
        %v1570 = vcombine.high %v1560, %v1560
        %v1571 = vcombine.high %v1567, %v1567
        %v1573 = vunpack.c.l.s4 1966171168
        %v1574 = vunpack.c.0.s8 %v1573
        %v1575 = vlaneseq
        %v1576 = vshrl.u32 %v1575, 7
        %v1577 = vsub.s32 %v1574, %v1576
        %v1578 = vrot.slane %v935, %v1577
        %v1580 = vunpack.c.l.s4 1966171168
        %v1581 = vunpack.c.0.s8 %v1580
        %v1582 = vlaneseq
        %v1583 = vshrl.u32 %v1582, 7
        %v1584 = vsub.s32 %v1581, %v1583
        %v1585 = vrot.slane %v1578, %v1584
        %v1586 = vcombine.low %v979, %v1001
        %v1587 = vcombine.low %v993, %v1003
        %v1589 = vunpack.c.l.s4 1935823168
        %v1590 = vunpack.c.0.s8 %v1589
        %v1591 = vlaneseq
        %v1592 = vshrl.u32 %v1591, 7
        %v1593 = vsub.s32 %v1590, %v1592
        %v1594 = vrot.slane %v1586, %v1593
        %v1596 = vunpack.c.l.s4 1935823168
        %v1597 = vunpack.c.0.s8 %v1596
        %v1598 = vlaneseq
        %v1599 = vshrl.u32 %v1598, 7
        %v1600 = vsub.s32 %v1597, %v1599
        %v1601 = vrot.slane %v1587, %v1600
        %v1602 = vcombine.low %v1594, %v1601
        %v1604 = vunpack.c.l.s4 1935823168
        %v1605 = vunpack.c.0.s8 %v1604
        %v1606 = vlaneseq
        %v1607 = vshrl.u32 %v1606, 7
        %v1608 = vsub.s32 %v1605, %v1607
        %v1609 = vrot.slane %v1602, %v1608
        %v1610 = vcombine.low %v986, %v1002
        %v1611 = vcombine.low %v1000, %v1004
        %v1613 = vunpack.c.l.s4 1935823168
        %v1614 = vunpack.c.0.s8 %v1613
        %v1615 = vlaneseq
        %v1616 = vshrl.u32 %v1615, 7
        %v1617 = vsub.s32 %v1614, %v1616
        %v1618 = vrot.slane %v1610, %v1617
        %v1620 = vunpack.c.l.s4 1935823168
        %v1621 = vunpack.c.0.s8 %v1620
        %v1622 = vlaneseq
        %v1623 = vshrl.u32 %v1622, 7
        %v1624 = vsub.s32 %v1621, %v1623
        %v1625 = vrot.slane %v1611, %v1624
        %v1626 = vcombine.low %v1618, %v1625
        %v1628 = vunpack.c.l.s4 1935823168
        %v1629 = vunpack.c.0.s8 %v1628
        %v1630 = vlaneseq
        %v1631 = vshrl.u32 %v1630, 7
        %v1632 = vsub.s32 %v1629, %v1631
        %v1633 = vrot.slane %v1626, %v1632
        %v1634 = vcombine.low %v1018, %v1056
        %v1635 = vcombine.low %v1042, %v1064
        %v1637 = vunpack.c.l.s4 1935823168
        %v1638 = vunpack.c.0.s8 %v1637
        %v1639 = vlaneseq
        %v1640 = vshrl.u32 %v1639, 7
        %v1641 = vsub.s32 %v1638, %v1640
        %v1642 = vrot.slane %v1634, %v1641
        %v1644 = vunpack.c.l.s4 1935823168
        %v1645 = vunpack.c.0.s8 %v1644
        %v1646 = vlaneseq
        %v1647 = vshrl.u32 %v1646, 7
        %v1648 = vsub.s32 %v1645, %v1647
        %v1649 = vrot.slane %v1635, %v1648
        %v1650 = vcombine.low %v1642, %v1649
        %v1652 = vunpack.c.l.s4 1935823168
        %v1653 = vunpack.c.0.s8 %v1652
        %v1654 = vlaneseq
        %v1655 = vshrl.u32 %v1654, 7
        %v1656 = vsub.s32 %v1653, %v1655
        %v1657 = vrot.slane %v1650, %v1656
        %v1658 = vcombine.low %v1066, %v1063
        %v1659 = vcombine.low %v1049, %v1065
        %v1661 = vunpack.c.l.s4 1935823168
        %v1662 = vunpack.c.0.s8 %v1661
        %v1663 = vlaneseq
        %v1664 = vshrl.u32 %v1663, 7
        %v1665 = vsub.s32 %v1662, %v1664
        %v1666 = vrot.slane %v1658, %v1665
        %v1668 = vunpack.c.l.s4 1935823168
        %v1669 = vunpack.c.0.s8 %v1668
        %v1670 = vlaneseq
        %v1671 = vshrl.u32 %v1670, 7
        %v1672 = vsub.s32 %v1669, %v1671
        %v1673 = vrot.slane %v1659, %v1672
        %v1674 = vcombine.low %v1666, %v1673
        %v1676 = vunpack.c.l.s4 1935823168
        %v1677 = vunpack.c.0.s8 %v1676
        %v1678 = vlaneseq
        %v1679 = vshrl.u32 %v1678, 7
        %v1680 = vsub.s32 %v1677, %v1679
        %v1681 = vrot.slane %v1674, %v1680
        %v1682 = vcombine.low %v1067, %v1105
        %v1683 = vcombine.low %v1081, %v1119
        %v1685 = vunpack.c.l.s4 1935823168
        %v1686 = vunpack.c.0.s8 %v1685
        %v1687 = vlaneseq
        %v1688 = vshrl.u32 %v1687, 7
        %v1689 = vsub.s32 %v1686, %v1688
        %v1690 = vrot.slane %v1682, %v1689
        %v1692 = vunpack.c.l.s4 1935823168
        %v1693 = vunpack.c.0.s8 %v1692
        %v1694 = vlaneseq
        %v1695 = vshrl.u32 %v1694, 7
        %v1696 = vsub.s32 %v1693, %v1695
        %v1697 = vrot.slane %v1683, %v1696
        %v1698 = vcombine.low %v1690, %v1697
        %v1700 = vunpack.c.l.s4 1935823168
        %v1701 = vunpack.c.0.s8 %v1700
        %v1702 = vlaneseq
        %v1703 = vshrl.u32 %v1702, 7
        %v1704 = vsub.s32 %v1701, %v1703
        %v1705 = vrot.slane %v1698, %v1704
        %v1706 = vcombine.low %v1127, %v1112
        %v1707 = vcombine.low %v1129, %v1126
        %v1709 = vunpack.c.l.s4 1935823168
        %v1710 = vunpack.c.0.s8 %v1709
        %v1711 = vlaneseq
        %v1712 = vshrl.u32 %v1711, 7
        %v1713 = vsub.s32 %v1710, %v1712
        %v1714 = vrot.slane %v1706, %v1713
        %v1716 = vunpack.c.l.s4 1935823168
        %v1717 = vunpack.c.0.s8 %v1716
        %v1718 = vlaneseq
        %v1719 = vshrl.u32 %v1718, 7
        %v1720 = vsub.s32 %v1717, %v1719
        %v1721 = vrot.slane %v1707, %v1720
        %v1722 = vcombine.low %v1714, %v1721
        %v1724 = vunpack.c.l.s4 1935823168
        %v1725 = vunpack.c.0.s8 %v1724
        %v1726 = vlaneseq
        %v1727 = vshrl.u32 %v1726, 7
        %v1728 = vsub.s32 %v1725, %v1727
        %v1729 = vrot.slane %v1722, %v1728
        %v1730 = vcombine.low %v1128, %v1144
        %v1731 = vcombine.low %v1130, %v1168
        %v1733 = vunpack.c.l.s4 1935823168
        %v1734 = vunpack.c.0.s8 %v1733
        %v1735 = vlaneseq
        %v1736 = vshrl.u32 %v1735, 7
        %v1737 = vsub.s32 %v1734, %v1736
        %v1738 = vrot.slane %v1730, %v1737
        %v1740 = vunpack.c.l.s4 1935823168
        %v1741 = vunpack.c.0.s8 %v1740
        %v1742 = vlaneseq
        %v1743 = vshrl.u32 %v1742, 7
        %v1744 = vsub.s32 %v1741, %v1743
        %v1745 = vrot.slane %v1731, %v1744
        %v1746 = vcombine.low %v1738, %v1745
        %v1748 = vunpack.c.l.s4 1935823168
        %v1749 = vunpack.c.0.s8 %v1748
        %v1750 = vlaneseq
        %v1751 = vshrl.u32 %v1750, 7
        %v1752 = vsub.s32 %v1749, %v1751
        %v1753 = vrot.slane %v1746, %v1752
        %v1754 = vcombine.low %v1182, %v1192
        %v1755 = vcombine.low %v1190, %v1175
        %v1757 = vunpack.c.l.s4 1935823168
        %v1758 = vunpack.c.0.s8 %v1757
        %v1759 = vlaneseq
        %v1760 = vshrl.u32 %v1759, 7
        %v1761 = vsub.s32 %v1758, %v1760
        %v1762 = vrot.slane %v1754, %v1761
        %v1764 = vunpack.c.l.s4 1935823168
        %v1765 = vunpack.c.0.s8 %v1764
        %v1766 = vlaneseq
        %v1767 = vshrl.u32 %v1766, 7
        %v1768 = vsub.s32 %v1765, %v1767
        %v1769 = vrot.slane %v1755, %v1768
        %v1770 = vcombine.low %v1762, %v1769
        %v1772 = vunpack.c.l.s4 1935823168
        %v1773 = vunpack.c.0.s8 %v1772
        %v1774 = vlaneseq
        %v1775 = vshrl.u32 %v1774, 7
        %v1776 = vsub.s32 %v1773, %v1775
        %v1777 = vrot.slane %v1770, %v1776
        %v1778 = vcombine.low %v1189, %v1193
        %v1779 = vcombine.low %v1191, %v1207
        %v1781 = vunpack.c.l.s4 1935823168
        %v1782 = vunpack.c.0.s8 %v1781
        %v1783 = vlaneseq
        %v1784 = vshrl.u32 %v1783, 7
        %v1785 = vsub.s32 %v1782, %v1784
        %v1786 = vrot.slane %v1778, %v1785
        %v1788 = vunpack.c.l.s4 1935823168
        %v1789 = vunpack.c.0.s8 %v1788
        %v1790 = vlaneseq
        %v1791 = vshrl.u32 %v1790, 7
        %v1792 = vsub.s32 %v1789, %v1791
        %v1793 = vrot.slane %v1779, %v1792
        %v1794 = vcombine.low %v1786, %v1793
        %v1796 = vunpack.c.l.s4 1935823168
        %v1797 = vunpack.c.0.s8 %v1796
        %v1798 = vlaneseq
        %v1799 = vshrl.u32 %v1798, 7
        %v1800 = vsub.s32 %v1797, %v1799
        %v1801 = vrot.slane %v1794, %v1800
        %v1802 = vcombine.low %v1231, %v1253
        %v1803 = vcombine.low %v1245, %v1255
        %v1805 = vunpack.c.l.s4 1935823168
        %v1806 = vunpack.c.0.s8 %v1805
        %v1807 = vlaneseq
        %v1808 = vshrl.u32 %v1807, 7
        %v1809 = vsub.s32 %v1806, %v1808
        %v1810 = vrot.slane %v1802, %v1809
        %v1812 = vunpack.c.l.s4 1935823168
        %v1813 = vunpack.c.0.s8 %v1812
        %v1814 = vlaneseq
        %v1815 = vshrl.u32 %v1814, 7
        %v1816 = vsub.s32 %v1813, %v1815
        %v1817 = vrot.slane %v1803, %v1816
        %v1818 = vcombine.low %v1810, %v1817
        %v1820 = vunpack.c.l.s4 1935823168
        %v1821 = vunpack.c.0.s8 %v1820
        %v1822 = vlaneseq
        %v1823 = vshrl.u32 %v1822, 7
        %v1824 = vsub.s32 %v1821, %v1823
        %v1825 = vrot.slane %v1818, %v1824
        %v1826 = vcombine.low %v1238, %v1254
        %v1827 = vcombine.low %v1252, %v1256
        %v1829 = vunpack.c.l.s4 1935823168
        %v1830 = vunpack.c.0.s8 %v1829
        %v1831 = vlaneseq
        %v1832 = vshrl.u32 %v1831, 7
        %v1833 = vsub.s32 %v1830, %v1832
        %v1834 = vrot.slane %v1826, %v1833
        %v1836 = vunpack.c.l.s4 1935823168
        %v1837 = vunpack.c.0.s8 %v1836
        %v1838 = vlaneseq
        %v1839 = vshrl.u32 %v1838, 7
        %v1840 = vsub.s32 %v1837, %v1839
        %v1841 = vrot.slane %v1827, %v1840
        %v1842 = vcombine.low %v1834, %v1841
        %v1844 = vunpack.c.l.s4 1935823168
        %v1845 = vunpack.c.0.s8 %v1844
        %v1846 = vlaneseq
        %v1847 = vshrl.u32 %v1846, 7
        %v1848 = vsub.s32 %v1845, %v1847
        %v1849 = vrot.slane %v1842, %v1848
        %v1850 = vcombine.low %v1270, %v1308
        %v1851 = vcombine.low %v1294, %v1316
        %v1853 = vunpack.c.l.s4 1935823168
        %v1854 = vunpack.c.0.s8 %v1853
        %v1855 = vlaneseq
        %v1856 = vshrl.u32 %v1855, 7
        %v1857 = vsub.s32 %v1854, %v1856
        %v1858 = vrot.slane %v1850, %v1857
        %v1860 = vunpack.c.l.s4 1935823168
        %v1861 = vunpack.c.0.s8 %v1860
        %v1862 = vlaneseq
        %v1863 = vshrl.u32 %v1862, 7
        %v1864 = vsub.s32 %v1861, %v1863
        %v1865 = vrot.slane %v1851, %v1864
        %v1866 = vcombine.low %v1858, %v1865
        %v1868 = vunpack.c.l.s4 1935823168
        %v1869 = vunpack.c.0.s8 %v1868
        %v1870 = vlaneseq
        %v1871 = vshrl.u32 %v1870, 7
        %v1872 = vsub.s32 %v1869, %v1871
        %v1873 = vrot.slane %v1866, %v1872
        %v1874 = vcombine.low %v1318, %v1315
        %v1875 = vcombine.low %v1301, %v1317
        %v1877 = vunpack.c.l.s4 1935823168
        %v1878 = vunpack.c.0.s8 %v1877
        %v1879 = vlaneseq
        %v1880 = vshrl.u32 %v1879, 7
        %v1881 = vsub.s32 %v1878, %v1880
        %v1882 = vrot.slane %v1874, %v1881
        %v1884 = vunpack.c.l.s4 1935823168
        %v1885 = vunpack.c.0.s8 %v1884
        %v1886 = vlaneseq
        %v1887 = vshrl.u32 %v1886, 7
        %v1888 = vsub.s32 %v1885, %v1887
        %v1889 = vrot.slane %v1875, %v1888
        %v1890 = vcombine.low %v1882, %v1889
        %v1892 = vunpack.c.l.s4 1935823168
        %v1893 = vunpack.c.0.s8 %v1892
        %v1894 = vlaneseq
        %v1895 = vshrl.u32 %v1894, 7
        %v1896 = vsub.s32 %v1893, %v1895
        %v1897 = vrot.slane %v1890, %v1896
        %v1898 = vcombine.low %v1319, %v1357
        %v1899 = vcombine.low %v1333, %v1371
        %v1901 = vunpack.c.l.s4 1935823168
        %v1902 = vunpack.c.0.s8 %v1901
        %v1903 = vlaneseq
        %v1904 = vshrl.u32 %v1903, 7
        %v1905 = vsub.s32 %v1902, %v1904
        %v1906 = vrot.slane %v1898, %v1905
        %v1908 = vunpack.c.l.s4 1935823168
        %v1909 = vunpack.c.0.s8 %v1908
        %v1910 = vlaneseq
        %v1911 = vshrl.u32 %v1910, 7
        %v1912 = vsub.s32 %v1909, %v1911
        %v1913 = vrot.slane %v1899, %v1912
        %v1914 = vcombine.low %v1906, %v1913
        %v1916 = vunpack.c.l.s4 1935823168
        %v1917 = vunpack.c.0.s8 %v1916
        %v1918 = vlaneseq
        %v1919 = vshrl.u32 %v1918, 7
        %v1920 = vsub.s32 %v1917, %v1919
        %v1921 = vrot.slane %v1914, %v1920
        %v1922 = vcombine.low %v1379, %v1364
        %v1923 = vcombine.low %v1381, %v1378
        %v1925 = vunpack.c.l.s4 1935823168
        %v1926 = vunpack.c.0.s8 %v1925
        %v1927 = vlaneseq
        %v1928 = vshrl.u32 %v1927, 7
        %v1929 = vsub.s32 %v1926, %v1928
        %v1930 = vrot.slane %v1922, %v1929
        %v1932 = vunpack.c.l.s4 1935823168
        %v1933 = vunpack.c.0.s8 %v1932
        %v1934 = vlaneseq
        %v1935 = vshrl.u32 %v1934, 7
        %v1936 = vsub.s32 %v1933, %v1935
        %v1937 = vrot.slane %v1923, %v1936
        %v1938 = vcombine.low %v1930, %v1937
        %v1940 = vunpack.c.l.s4 1935823168
        %v1941 = vunpack.c.0.s8 %v1940
        %v1942 = vlaneseq
        %v1943 = vshrl.u32 %v1942, 7
        %v1944 = vsub.s32 %v1941, %v1943
        %v1945 = vrot.slane %v1938, %v1944
        %v1946 = vcombine.low %v1380, %v1396
        %v1947 = vcombine.low %v1382, %v1420
        %v1949 = vunpack.c.l.s4 1935823168
        %v1950 = vunpack.c.0.s8 %v1949
        %v1951 = vlaneseq
        %v1952 = vshrl.u32 %v1951, 7
        %v1953 = vsub.s32 %v1950, %v1952
        %v1954 = vrot.slane %v1946, %v1953
        %v1956 = vunpack.c.l.s4 1935823168
        %v1957 = vunpack.c.0.s8 %v1956
        %v1958 = vlaneseq
        %v1959 = vshrl.u32 %v1958, 7
        %v1960 = vsub.s32 %v1957, %v1959
        %v1961 = vrot.slane %v1947, %v1960
        %v1962 = vcombine.low %v1954, %v1961
        %v1964 = vunpack.c.l.s4 1935823168
        %v1965 = vunpack.c.0.s8 %v1964
        %v1966 = vlaneseq
        %v1967 = vshrl.u32 %v1966, 7
        %v1968 = vsub.s32 %v1965, %v1967
        %v1969 = vrot.slane %v1962, %v1968
        %v1970 = vcombine.low %v1434, %v1444
        %v1971 = vcombine.low %v1442, %v1427
        %v1973 = vunpack.c.l.s4 1935823168
        %v1974 = vunpack.c.0.s8 %v1973
        %v1975 = vlaneseq
        %v1976 = vshrl.u32 %v1975, 7
        %v1977 = vsub.s32 %v1974, %v1976
        %v1978 = vrot.slane %v1970, %v1977
        %v1980 = vunpack.c.l.s4 1935823168
        %v1981 = vunpack.c.0.s8 %v1980
        %v1982 = vlaneseq
        %v1983 = vshrl.u32 %v1982, 7
        %v1984 = vsub.s32 %v1981, %v1983
        %v1985 = vrot.slane %v1971, %v1984
        %v1986 = vcombine.low %v1978, %v1985
        %v1988 = vunpack.c.l.s4 1935823168
        %v1989 = vunpack.c.0.s8 %v1988
        %v1990 = vlaneseq
        %v1991 = vshrl.u32 %v1990, 7
        %v1992 = vsub.s32 %v1989, %v1991
        %v1993 = vrot.slane %v1986, %v1992
        %v1994 = vcombine.low %v1441, %v1445
        %v1995 = vcombine.low %v1443, %v1459
        %v1997 = vunpack.c.l.s4 1935823168
        %v1998 = vunpack.c.0.s8 %v1997
        %v1999 = vlaneseq
        %v2000 = vshrl.u32 %v1999, 7
        %v2001 = vsub.s32 %v1998, %v2000
        %v2002 = vrot.slane %v1994, %v2001
        %v2004 = vunpack.c.l.s4 1935823168
        %v2005 = vunpack.c.0.s8 %v2004
        %v2006 = vlaneseq
        %v2007 = vshrl.u32 %v2006, 7
        %v2008 = vsub.s32 %v2005, %v2007
        %v2009 = vrot.slane %v1995, %v2008
        %v2010 = vcombine.low %v2002, %v2009
        %v2012 = vunpack.c.l.s4 1935823168
        %v2013 = vunpack.c.0.s8 %v2012
        %v2014 = vlaneseq
        %v2015 = vshrl.u32 %v2014, 7
        %v2016 = vsub.s32 %v2013, %v2015
        %v2017 = vrot.slane %v2010, %v2016
        %v2018 = vcombine.low %v1483, %v1505
        %v2019 = vcombine.low %v1497, %v1507
        %v2021 = vunpack.c.l.s4 1935823168
        %v2022 = vunpack.c.0.s8 %v2021
        %v2023 = vlaneseq
        %v2024 = vshrl.u32 %v2023, 7
        %v2025 = vsub.s32 %v2022, %v2024
        %v2026 = vrot.slane %v2018, %v2025
        %v2028 = vunpack.c.l.s4 1935823168
        %v2029 = vunpack.c.0.s8 %v2028
        %v2030 = vlaneseq
        %v2031 = vshrl.u32 %v2030, 7
        %v2032 = vsub.s32 %v2029, %v2031
        %v2033 = vrot.slane %v2019, %v2032
        %v2034 = vcombine.low %v2026, %v2033
        %v2036 = vunpack.c.l.s4 1935823168
        %v2037 = vunpack.c.0.s8 %v2036
        %v2038 = vlaneseq
        %v2039 = vshrl.u32 %v2038, 7
        %v2040 = vsub.s32 %v2037, %v2039
        %v2041 = vrot.slane %v2034, %v2040
        %v2042 = vcombine.low %v1490, %v1506
        %v2043 = vcombine.low %v1504, %v1508
        %v2045 = vunpack.c.l.s4 1935823168
        %v2046 = vunpack.c.0.s8 %v2045
        %v2047 = vlaneseq
        %v2048 = vshrl.u32 %v2047, 7
        %v2049 = vsub.s32 %v2046, %v2048
        %v2050 = vrot.slane %v2042, %v2049
        %v2052 = vunpack.c.l.s4 1935823168
        %v2053 = vunpack.c.0.s8 %v2052
        %v2054 = vlaneseq
        %v2055 = vshrl.u32 %v2054, 7
        %v2056 = vsub.s32 %v2053, %v2055
        %v2057 = vrot.slane %v2043, %v2056
        %v2058 = vcombine.low %v2050, %v2057
        %v2060 = vunpack.c.l.s4 1935823168
        %v2061 = vunpack.c.0.s8 %v2060
        %v2062 = vlaneseq
        %v2063 = vshrl.u32 %v2062, 7
        %v2064 = vsub.s32 %v2061, %v2063
        %v2065 = vrot.slane %v2058, %v2064
        %v2066 = vcombine.low %v1522, %v1560
        %v2067 = vcombine.low %v1546, %v1568
        %v2069 = vunpack.c.l.s4 1935823168
        %v2070 = vunpack.c.0.s8 %v2069
        %v2071 = vlaneseq
        %v2072 = vshrl.u32 %v2071, 7
        %v2073 = vsub.s32 %v2070, %v2072
        %v2074 = vrot.slane %v2066, %v2073
        %v2076 = vunpack.c.l.s4 1935823168
        %v2077 = vunpack.c.0.s8 %v2076
        %v2078 = vlaneseq
        %v2079 = vshrl.u32 %v2078, 7
        %v2080 = vsub.s32 %v2077, %v2079
        %v2081 = vrot.slane %v2067, %v2080
        %v2082 = vcombine.low %v2074, %v2081
        %v2084 = vunpack.c.l.s4 1935823168
        %v2085 = vunpack.c.0.s8 %v2084
        %v2086 = vlaneseq
        %v2087 = vshrl.u32 %v2086, 7
        %v2088 = vsub.s32 %v2085, %v2087
        %v2089 = vrot.slane %v2082, %v2088
        %v2090 = vcombine.low %v1570, %v1567
        %v2091 = vcombine.low %v1553, %v1569
        %v2093 = vunpack.c.l.s4 1935823168
        %v2094 = vunpack.c.0.s8 %v2093
        %v2095 = vlaneseq
        %v2096 = vshrl.u32 %v2095, 7
        %v2097 = vsub.s32 %v2094, %v2096
        %v2098 = vrot.slane %v2090, %v2097
        %v2100 = vunpack.c.l.s4 1935823168
        %v2101 = vunpack.c.0.s8 %v2100
        %v2102 = vlaneseq
        %v2103 = vshrl.u32 %v2102, 7
        %v2104 = vsub.s32 %v2101, %v2103
        %v2105 = vrot.slane %v2091, %v2104
        %v2106 = vcombine.low %v2098, %v2105
        %v2108 = vunpack.c.l.s4 1935823168
        %v2109 = vunpack.c.0.s8 %v2108
        %v2110 = vlaneseq
        %v2111 = vshrl.u32 %v2110, 7
        %v2112 = vsub.s32 %v2109, %v2111
        %v2113 = vrot.slane %v2106, %v2112
        %v2115 = vunpack.c.l.s4 1935823168
        %v2116 = vunpack.c.0.s8 %v2115
        %v2117 = vlaneseq
        %v2118 = vshrl.u32 %v2117, 7
        %v2119 = vsub.s32 %v2116, %v2118
        %v2120 = vrot.slane %v1571, %v2119
        %v2122 = vunpack.c.l.s4 1935823168
        %v2123 = vunpack.c.0.s8 %v2122
        %v2124 = vlaneseq
        %v2125 = vshrl.u32 %v2124, 7
        %v2126 = vsub.s32 %v2123, %v2125
        %v2127 = vrot.slane %v1585, %v2126
        %v2128 = vcombine.low %v2120, %v2127
        %v2130 = vunpack.c.l.s4 1935823168
        %v2131 = vunpack.c.0.s8 %v2130
        %v2132 = vlaneseq
        %v2133 = vshrl.u32 %v2132, 7
        %v2134 = vsub.s32 %v2131, %v2133
        %v2135 = vrot.slane %v2128, %v2134
        %2159 = vst [vmem:[#allocation2] sm:$0xf] %v1609
        %2160 = vst [vmem:[#allocation2 + $0x4] sm:$0xf] %v1633
        %2161 = vst [vmem:[#allocation2 + $0x8] sm:$0xf] %v1657
        %2162 = vst [vmem:[#allocation2 + $0xc] sm:$0xf] %v1681
        %2163 = vst [vmem:[#allocation2 + $0x10] sm:$0xf] %v1705
        %2164 = vst [vmem:[#allocation2 + $0x14] sm:$0xf] %v1729
        %2165 = vst [vmem:[#allocation2 + $0x18] sm:$0xf] %v1753
        %2166 = vst [vmem:[#allocation2 + $0x1c] sm:$0xf] %v1777
        %2167 = vst [vmem:[#allocation2 + $0x20] sm:$0xf] %v1801
        %2168 = vst [vmem:[#allocation2 + $0x24] sm:$0xf] %v1825
        %2169 = vst [vmem:[#allocation2 + $0x28] sm:$0xf] %v1849
        %2170 = vst [vmem:[#allocation2 + $0x2c] sm:$0xf] %v1873
        %2171 = vst [vmem:[#allocation2 + $0x30] sm:$0xf] %v1897
        %2172 = vst [vmem:[#allocation2 + $0x34] sm:$0xf] %v1921
        %2173 = vst [vmem:[#allocation2 + $0x38] sm:$0xf] %v1945
        %2174 = vst [vmem:[#allocation2 + $0x3c] sm:$0xf] %v1969
        %2175 = vst [vmem:[#allocation2 + $0x40] sm:$0xf] %v1993
        %2176 = vst [vmem:[#allocation2 + $0x44] sm:$0xf] %v2017
        %2177 = vst [vmem:[#allocation2 + $0x48] sm:$0xf] %v2041
        %2178 = vst [vmem:[#allocation2 + $0x4c] sm:$0xf] %v2065
        %2179 = vst [vmem:[#allocation2 + $0x50] sm:$0xf] %v2089
        %2180 = vst [vmem:[#allocation2 + $0x54] sm:$0xf] %v2113
        %2181 = vst [vmem:[#allocation2 + $0x58] sm:$0x3] %v2135
        %2182 = vst [vmem:[#allocation2 + $0x58] sm:$0xc] 0
        %v2183 = vld [vmem:[#allocation2] sm:$0xf]
        %v2184 = vld [vmem:[#allocation2 + $0x4] sm:$0xf]
        %v2185 = vld [vmem:[#allocation2 + $0x8] sm:$0xf]
        %v2186 = vld [vmem:[#allocation2 + $0xc] sm:$0xf]
        %v2187 = vld [vmem:[#allocation2 + $0x10] sm:$0xf]
        %v2188 = vld [vmem:[#allocation2 + $0x14] sm:$0xf]
        %v2189 = vld [vmem:[#allocation2 + $0x18] sm:$0xf]
        %v2190 = vld [vmem:[#allocation2 + $0x1c] sm:$0xf]
        %v2191 = vld [vmem:[#allocation2 + $0x20] sm:$0xf]
        %v2192 = vld [vmem:[#allocation2 + $0x24] sm:$0xf]
        %v2193 = vld [vmem:[#allocation2 + $0x28] sm:$0xf]
        %v2194 = vld [vmem:[#allocation2 + $0x2c] sm:$0xf]
        %v2195 = vld [vmem:[#allocation2 + $0x30] sm:$0xf]
        %v2196 = vld [vmem:[#allocation2 + $0x34] sm:$0xf]
        %v2197 = vld [vmem:[#allocation2 + $0x38] sm:$0xf]
        %v2198 = vld [vmem:[#allocation2 + $0x3c] sm:$0xf]
        %v2199 = vld [vmem:[#allocation2 + $0x40] sm:$0xf]
        %v2200 = vld [vmem:[#allocation2 + $0x44] sm:$0xf]
        %v2201 = vld [vmem:[#allocation6] sm:$0xf]
        %v2202 = vld [vmem:[#allocation6 + $0x4] sm:$0xf]
        %v2203 = vld [vmem:[#allocation6 + $0x8] sm:$0xf]
        %v2204 = vld [vmem:[#allocation6 + $0xc] sm:$0xf]
        %v2205 = vld [vmem:[#allocation6 + $0x10] sm:$0xf]
        %v2206 = vld [vmem:[#allocation6 + $0x14] sm:$0xf]
        %v2207 = vld [vmem:[#allocation6 + $0x18] sm:$0xf]
        %v2208 = vld [vmem:[#allocation6 + $0x1c] sm:$0xf]
        %v2209 = vld [vmem:[#allocation6 + $0x20] sm:$0xf]
        %v2210 = vld [vmem:[#allocation6 + $0x24] sm:$0xf]
        %v2211 = vld [vmem:[#allocation6 + $0x28] sm:$0xf]
        %v2212 = vld [vmem:[#allocation6 + $0x2c] sm:$0xf]
        %v2213 = vld [vmem:[#allocation6 + $0x30] sm:$0xf]
        %v2214 = vld [vmem:[#allocation6 + $0x34] sm:$0xf]
        %v2215 = vld [vmem:[#allocation6 + $0x38] sm:$0xf]
        %v2216 = vld [vmem:[#allocation6 + $0x3c] sm:$0xf]
        %v2217 = vld [vmem:[#allocation2 + $0x48] sm:$0x1]
        %s2218 = scalar_lea.vmem [#allocation6], 64
        %v2219 = vld [vmem:[%s2218] sm:$0xf]
        %v2220 = vld [vmem:[%s2218 + $0x4] sm:$0xf]
        %v2221 = vld [vmem:[%s2218 + $0x8] sm:$0xf]
        %v2222 = vld [vmem:[%s2218 + $0xc] sm:$0xf]
        %v2223 = vld [vmem:[%s2218 + $0x10] sm:$0xf]
        %v2224 = vld [vmem:[%s2218 + $0x14] sm:$0xf]
        %v2225 = vld [vmem:[%s2218 + $0x18] sm:$0xf]
        %v2226 = vld [vmem:[%s2218 + $0x1c] sm:$0xf]
        %v2227 = vld [vmem:[%s2218 + $0x20] sm:$0xf]
        %v2228 = vld [vmem:[%s2218 + $0x24] sm:$0xf]
        %v2229 = vld [vmem:[%s2218 + $0x28] sm:$0xf]
        %v2230 = vld [vmem:[%s2218 + $0x2c] sm:$0xf]
        %v2231 = vld [vmem:[%s2218 + $0x30] sm:$0xf]
        %v2232 = vld [vmem:[%s2218 + $0x34] sm:$0xf]
        %v2233 = vld [vmem:[%s2218 + $0x38] sm:$0xf]
        %v2234 = vld [vmem:[%s2218 + $0x3c] sm:$0xf]
        %v2254 = vunpack.c.l.b16 %v2183
        %v2255 = vunpack.c.l.b16 %v2184
        %v2256 = vunpack.c.l.b16 %v2185
        %v2257 = vunpack.c.l.b16 %v2186
        %v2258 = vunpack.c.l.b16 %v2187
        %v2259 = vunpack.c.l.b16 %v2188
        %v2260 = vunpack.c.l.b16 %v2189
        %v2261 = vunpack.c.l.b16 %v2190
        %v2262 = vunpack.c.l.b16 %v2191
        %v2263 = vunpack.c.l.b16 %v2192
        %v2264 = vunpack.c.l.b16 %v2193
        %v2265 = vunpack.c.l.b16 %v2194
        %v2266 = vunpack.c.l.b16 %v2195
        %v2267 = vunpack.c.l.b16 %v2196
        %v2268 = vunpack.c.l.b16 %v2197
        %v2269 = vunpack.c.l.b16 %v2198
        %v2270 = vunpack.c.l.b16 %v2199
        %v2271 = vunpack.c.l.b16 %v2200
        %v2272 = vunpack.c.l.b16 %v2217
        %v2273 = vpack.c.b16 %v2255, %v2254
        %v2274 = vpack.c.b16 %v2257, %v2256
        %v2275 = vpack.c.b16 %v2259, %v2258
        %v2276 = vpack.c.b16 %v2261, %v2260
        %v2277 = vpack.c.b16 %v2263, %v2262
        %v2278 = vpack.c.b16 %v2265, %v2264
        %v2279 = vpack.c.b16 %v2267, %v2266
        %v2280 = vpack.c.b16 %v2269, %v2268
        %v2281 = vpack.c.b16 %v2271, %v2270
        %v2282 = vpack.c.b16 %v2272, %v2272
        %vm2283 = vsmask.f32 7424
        %v2285 = vshrl.u32 %v2273, 16
        %v2287 = vshll.u32 %v2273, 16
        %v2289 = vrot.slane %v2287, 1
        %v2290 = vor.u32 %v2285, %v2289
        %v2292 = vshll.u32 %v2274, 16
        %v2294 = vrot.slane %v2292, 1
        %v2295 = vsel %vm2283, %v2290, %v2294
        %v2296 = vshrl.u32 %v2274, 16
        %v2298 = vor.u32 %v2296, %v2294
        %v2300 = vshll.u32 %v2275, 16
        %v2302 = vrot.slane %v2300, 1
        %v2303 = vsel %vm2283, %v2298, %v2302
        %v2304 = vshrl.u32 %v2275, 16
        %v2306 = vor.u32 %v2304, %v2302
        %v2308 = vshll.u32 %v2276, 16
        %v2310 = vrot.slane %v2308, 1
        %v2311 = vsel %vm2283, %v2306, %v2310
        %v2312 = vshrl.u32 %v2276, 16
        %v2314 = vor.u32 %v2312, %v2310
        %v2316 = vshll.u32 %v2277, 16
        %v2318 = vrot.slane %v2316, 1
        %v2319 = vsel %vm2283, %v2314, %v2318
        %v2320 = vshrl.u32 %v2277, 16
        %v2322 = vor.u32 %v2320, %v2318
        %v2324 = vshll.u32 %v2278, 16
        %v2326 = vrot.slane %v2324, 1
        %v2327 = vsel %vm2283, %v2322, %v2326
        %v2328 = vshrl.u32 %v2278, 16
        %v2330 = vor.u32 %v2328, %v2326
        %v2332 = vshll.u32 %v2279, 16
        %v2334 = vrot.slane %v2332, 1
        %v2335 = vsel %vm2283, %v2330, %v2334
        %v2336 = vshrl.u32 %v2279, 16
        %v2338 = vor.u32 %v2336, %v2334
        %v2340 = vshll.u32 %v2280, 16
        %v2342 = vrot.slane %v2340, 1
        %v2343 = vsel %vm2283, %v2338, %v2342
        %v2344 = vshrl.u32 %v2280, 16
        %v2346 = vor.u32 %v2344, %v2342
        %v2348 = vshll.u32 %v2281, 16
        %v2350 = vrot.slane %v2348, 1
        %v2351 = vsel %vm2283, %v2346, %v2350
        %v2352 = vshrl.u32 %v2281, 16
        %v2354 = vor.u32 %v2352, %v2350
        %v2356 = vshll.u32 %v2282, 16
        %v2358 = vrot.slane %v2356, 1
        %v2359 = vsel %vm2283, %v2354, %v2358
        %v2385 = vunpack.c.l.b16 %v2219
        %v2386 = vunpack.c.l.b16 %v2220
        %v2387 = vunpack.c.l.b16 %v2221
        %v2388 = vunpack.c.l.b16 %v2222
        %v2389 = vunpack.c.l.b16 %v2223
        %v2390 = vunpack.c.l.b16 %v2224
        %v2391 = vunpack.c.l.b16 %v2225
        %v2392 = vunpack.c.l.b16 %v2226
        %v2393 = vunpack.c.l.b16 %v2227
        %v2394 = vunpack.c.l.b16 %v2228
        %v2395 = vunpack.c.l.b16 %v2229
        %v2396 = vunpack.c.l.b16 %v2230
        %v2397 = vunpack.c.l.b16 %v2231
        %v2398 = vunpack.c.l.b16 %v2232
        %v2399 = vunpack.c.l.b16 %v2233
        %v2400 = vunpack.c.l.b16 %v2234
        %v2401 = vpack.c.b16 %v2386, %v2385
        %v2402 = vpack.c.b16 %v2388, %v2387
        %v2403 = vpack.c.b16 %v2390, %v2389
        %v2404 = vpack.c.b16 %v2392, %v2391
        %v2405 = vpack.c.b16 %v2394, %v2393
        %v2406 = vpack.c.b16 %v2396, %v2395
        %v2407 = vpack.c.b16 %v2398, %v2397
        %v2408 = vpack.c.b16 %v2400, %v2399
        %2417 = vmatprep.subr.bf16.mxu0 0
        %2418 = vmatpush1.bf16.msra.mxu0 %v2408
        %2419 = vmatprep.subr.bf16.mxu0 0
        %2420 = vmatpush1.bf16.msra.mxu0 %v2407
        %2421 = vmatprep.subr.bf16.mxu0 0
        %2422 = vmatpush1.bf16.msra.mxu0 %v2406
        %2423 = vmatprep.subr.bf16.mxu0 0
        %2424 = vmatpush1.bf16.msra.mxu0 %v2405
        %2425 = vmatprep.subr.bf16.mxu0 0
        %2426 = vmatpush1.bf16.msra.mxu0 %v2404
        %2427 = vmatprep.subr.bf16.mxu0 0
        %2428 = vmatpush1.bf16.msra.mxu0 %v2403
        %2429 = vmatprep.subr.bf16.mxu0 0
        %2430 = vmatpush1.bf16.msra.mxu0 %v2402
        %2431 = vmatprep.subr.bf16.mxu0 0
        %2432 = vmatpush1.bf16.msra.mxu0 %v2401
        %2433 = vmatprep.subr.bf16.mxu0 0
        %2434 = vmatpush2.bf16.msra.mxu0 0
        %2435 = vmatprep.subr.bf16.mxu0 0
        %2436 = vmatpush2.bf16.msra.mxu0 0
        %2437 = vmatprep.subr.bf16.mxu0 0
        %2438 = vmatpush2.bf16.msra.mxu0 0
        %2439 = vmatprep.subr.bf16.mxu0 0
        %2440 = vmatpush2.bf16.msra.mxu0 0
        %2441 = vmatprep.subr.bf16.mxu0 0
        %2442 = vmatpush2.bf16.msra.mxu0 0
        %2443 = vmatprep.subr.bf16.mxu0 0
        %2444 = vmatpush2.bf16.msra.mxu0 0
        %2445 = vmatprep.subr.bf16.mxu0 0
        %2446 = vmatpush2.bf16.msra.mxu0 0
        %2447 = vmatprep.subr.bf16.mxu0 0
        %2448 = vmatpush2.bf16.msra.mxu0 0
        %2449 = vmatprep.mubr.bf16.mxu0 0
        %2450 = vmatmul.mubr.bf16.gmra.mxu0 %v2295
        %v2451 = vpop.f32.mrf.mxu0
        %v2452 = vadd.f32 0.0, %v2451
        %v2453 = vpop.f32.mrf.mxu0
        %v2454 = vpop.f32.mrf.mxu0
        %v2455 = vadd.f32 0.0, %v2454
        %v2456 = vpop.f32.mrf.mxu0
        %2457 = vmatprep.mubr.bf16.mxu0 0
        %2458 = vmatmul.mubr.bf16.gmra.mxu0 %v2303
        %v2459 = vpop.f32.mrf.mxu0
        %v2460 = vadd.f32 0.0, %v2459
        %v2461 = vpop.f32.mrf.mxu0
        %v2462 = vpop.f32.mrf.mxu0
        %v2463 = vadd.f32 0.0, %v2462
        %v2464 = vpop.f32.mrf.mxu0
        %2465 = vmatprep.mubr.bf16.mxu0 0
        %2466 = vmatmul.mubr.bf16.gmra.mxu0 %v2311
        %v2467 = vpop.f32.mrf.mxu0
        %v2468 = vadd.f32 0.0, %v2467
        %v2469 = vpop.f32.mrf.mxu0
        %v2470 = vpop.f32.mrf.mxu0
        %v2471 = vadd.f32 0.0, %v2470
        %v2472 = vpop.f32.mrf.mxu0
        %2473 = vmatprep.mubr.bf16.mxu0 0
        %2474 = vmatmul.mubr.bf16.gmra.mxu0 %v2319
        %v2475 = vpop.f32.mrf.mxu0
        %v2476 = vadd.f32 0.0, %v2475
        %v2477 = vpop.f32.mrf.mxu0
        %v2478 = vpop.f32.mrf.mxu0
        %v2479 = vadd.f32 0.0, %v2478
        %v2480 = vpop.f32.mrf.mxu0
        %2481 = vmatprep.mubr.bf16.mxu0 0
        %2482 = vmatmul.mubr.bf16.gmra.mxu0 %v2327
        %v2483 = vpop.f32.mrf.mxu0
        %v2484 = vadd.f32 0.0, %v2483
        %v2485 = vpop.f32.mrf.mxu0
        %v2486 = vpop.f32.mrf.mxu0
        %v2487 = vadd.f32 0.0, %v2486
        %v2488 = vpop.f32.mrf.mxu0
        %2489 = vmatprep.mubr.bf16.mxu0 0
        %2490 = vmatmul.mubr.bf16.gmra.mxu0 %v2335
        %v2491 = vpop.f32.mrf.mxu0
        %v2492 = vadd.f32 0.0, %v2491
        %v2493 = vpop.f32.mrf.mxu0
        %v2494 = vpop.f32.mrf.mxu0
        %v2495 = vadd.f32 0.0, %v2494
        %v2496 = vpop.f32.mrf.mxu0
        %2497 = vmatprep.mubr.bf16.mxu0 0
        %2498 = vmatmul.mubr.bf16.gmra.mxu0 %v2343
        %v2499 = vpop.f32.mrf.mxu0
        %v2500 = vadd.f32 0.0, %v2499
        %v2501 = vpop.f32.mrf.mxu0
        %v2502 = vpop.f32.mrf.mxu0
        %v2503 = vadd.f32 0.0, %v2502
        %v2504 = vpop.f32.mrf.mxu0
        %2505 = vmatprep.mubr.bf16.mxu0 0
        %2506 = vmatmul.mubr.bf16.gmra.mxu0 %v2351
        %v2507 = vpop.f32.mrf.mxu0
        %v2508 = vadd.f32 0.0, %v2507
        %v2509 = vpop.f32.mrf.mxu0
        %v2510 = vpop.f32.mrf.mxu0
        %v2511 = vadd.f32 0.0, %v2510
        %v2512 = vpop.f32.mrf.mxu0
        %2513 = vmatprep.mubr.bf16.mxu0 0
        %2514 = vmatmul.mubr.bf16.gmra.mxu0 %v2359
        %v2515 = vpop.f32.mrf.mxu0
        %v2516 = vadd.f32 0.0, %v2515
        %v2517 = vpop.f32.mrf.mxu0
        %v2518 = vpop.f32.mrf.mxu0
        %v2519 = vadd.f32 0.0, %v2518
        %v2520 = vpop.f32.mrf.mxu0
        %2521 = vdwg.mxu0
        %v2547 = vunpack.c.l.b16 %v2201
        %v2548 = vunpack.c.l.b16 %v2202
        %v2549 = vunpack.c.l.b16 %v2203
        %v2550 = vunpack.c.l.b16 %v2204
        %v2551 = vunpack.c.l.b16 %v2205
        %v2552 = vunpack.c.l.b16 %v2206
        %v2553 = vunpack.c.l.b16 %v2207
        %v2554 = vunpack.c.l.b16 %v2208
        %v2555 = vunpack.c.l.b16 %v2209
        %v2556 = vunpack.c.l.b16 %v2210
        %v2557 = vunpack.c.l.b16 %v2211
        %v2558 = vunpack.c.l.b16 %v2212
        %v2559 = vunpack.c.l.b16 %v2213
        %v2560 = vunpack.c.l.b16 %v2214
        %v2561 = vunpack.c.l.b16 %v2215
        %v2562 = vunpack.c.l.b16 %v2216
        %v2563 = vpack.c.b16 %v2548, %v2547
        %v2564 = vpack.c.b16 %v2550, %v2549
        %v2565 = vpack.c.b16 %v2552, %v2551
        %v2566 = vpack.c.b16 %v2554, %v2553
        %v2567 = vpack.c.b16 %v2556, %v2555
        %v2568 = vpack.c.b16 %v2558, %v2557
        %v2569 = vpack.c.b16 %v2560, %v2559
        %v2570 = vpack.c.b16 %v2562, %v2561
        %2579 = vmatprep.subr.bf16.mxu0 0
        %2580 = vmatpush1.bf16.msra.mxu0 %v2570
        %2581 = vmatprep.subr.bf16.mxu0 0
        %2582 = vmatpush1.bf16.msra.mxu0 %v2569
        %2583 = vmatprep.subr.bf16.mxu0 0
        %2584 = vmatpush1.bf16.msra.mxu0 %v2568
        %2585 = vmatprep.subr.bf16.mxu0 0
        %2586 = vmatpush1.bf16.msra.mxu0 %v2567
        %2587 = vmatprep.subr.bf16.mxu0 0
        %2588 = vmatpush1.bf16.msra.mxu0 %v2566
        %2589 = vmatprep.subr.bf16.mxu0 0
        %2590 = vmatpush1.bf16.msra.mxu0 %v2565
        %2591 = vmatprep.subr.bf16.mxu0 0
        %2592 = vmatpush1.bf16.msra.mxu0 %v2564
        %2593 = vmatprep.subr.bf16.mxu0 0
        %2594 = vmatpush1.bf16.msra.mxu0 %v2563
        %2595 = vmatprep.subr.bf16.mxu0 0
        %2596 = vmatpush2.bf16.msra.mxu0 0
        %2597 = vmatprep.subr.bf16.mxu0 0
        %2598 = vmatpush2.bf16.msra.mxu0 0
        %2599 = vmatprep.subr.bf16.mxu0 0
        %2600 = vmatpush2.bf16.msra.mxu0 0
        %2601 = vmatprep.subr.bf16.mxu0 0
        %2602 = vmatpush2.bf16.msra.mxu0 0
        %2603 = vmatprep.subr.bf16.mxu0 0
        %2604 = vmatpush2.bf16.msra.mxu0 0
        %2605 = vmatprep.subr.bf16.mxu0 0
        %2606 = vmatpush2.bf16.msra.mxu0 0
        %2607 = vmatprep.subr.bf16.mxu0 0
        %2608 = vmatpush2.bf16.msra.mxu0 0
        %2609 = vmatprep.subr.bf16.mxu0 0
        %2610 = vmatpush2.bf16.msra.mxu0 0
        %2611 = vmatprep.mubr.bf16.mxu0 0
        %2612 = vmatmul.mubr.bf16.gmra.mxu0 %v2273
        %v2613 = vpop.f32.mrf.mxu0
        %v2614 = vadd.f32 %v2452, %v2613
        %v2615 = vpop.f32.mrf.mxu0
        %v2616 = vpop.f32.mrf.mxu0
        %v2617 = vadd.f32 %v2455, %v2616
        %v2618 = vpop.f32.mrf.mxu0
        %2619 = vmatprep.mubr.bf16.mxu0 0
        %2620 = vmatmul.mubr.bf16.gmra.mxu0 %v2274
        %v2621 = vpop.f32.mrf.mxu0
        %v2622 = vadd.f32 %v2460, %v2621
        %v2623 = vpop.f32.mrf.mxu0
        %v2624 = vpop.f32.mrf.mxu0
        %v2625 = vadd.f32 %v2463, %v2624
        %v2626 = vpop.f32.mrf.mxu0
        %2627 = vmatprep.mubr.bf16.mxu0 0
        %2628 = vmatmul.mubr.bf16.gmra.mxu0 %v2275
        %v2629 = vpop.f32.mrf.mxu0
        %v2630 = vadd.f32 %v2468, %v2629
        %v2631 = vpop.f32.mrf.mxu0
        %v2632 = vpop.f32.mrf.mxu0
        %v2633 = vadd.f32 %v2471, %v2632
        %v2634 = vpop.f32.mrf.mxu0
        %2635 = vmatprep.mubr.bf16.mxu0 0
        %2636 = vmatmul.mubr.bf16.gmra.mxu0 %v2276
        %v2637 = vpop.f32.mrf.mxu0
        %v2638 = vadd.f32 %v2476, %v2637
        %v2639 = vpop.f32.mrf.mxu0
        %v2640 = vpop.f32.mrf.mxu0
        %v2641 = vadd.f32 %v2479, %v2640
        %v2642 = vpop.f32.mrf.mxu0
        %2643 = vmatprep.mubr.bf16.mxu0 0
        %2644 = vmatmul.mubr.bf16.gmra.mxu0 %v2277
        %v2645 = vpop.f32.mrf.mxu0
        %v2646 = vadd.f32 %v2484, %v2645
        %v2647 = vpop.f32.mrf.mxu0
        %v2648 = vpop.f32.mrf.mxu0
        %v2649 = vadd.f32 %v2487, %v2648
        %v2650 = vpop.f32.mrf.mxu0
        %2651 = vmatprep.mubr.bf16.mxu0 0
        %2652 = vmatmul.mubr.bf16.gmra.mxu0 %v2278
        %v2653 = vpop.f32.mrf.mxu0
        %v2654 = vadd.f32 %v2492, %v2653
        %v2655 = vpop.f32.mrf.mxu0
        %v2656 = vpop.f32.mrf.mxu0
        %v2657 = vadd.f32 %v2495, %v2656
        %v2658 = vpop.f32.mrf.mxu0
        %2659 = vmatprep.mubr.bf16.mxu0 0
        %2660 = vmatmul.mubr.bf16.gmra.mxu0 %v2279
        %v2661 = vpop.f32.mrf.mxu0
        %v2662 = vadd.f32 %v2500, %v2661
        %v2663 = vpop.f32.mrf.mxu0
        %v2664 = vpop.f32.mrf.mxu0
        %v2665 = vadd.f32 %v2503, %v2664
        %v2666 = vpop.f32.mrf.mxu0
        %2667 = vmatprep.mubr.bf16.mxu0 0
        %2668 = vmatmul.mubr.bf16.gmra.mxu0 %v2280
        %v2669 = vpop.f32.mrf.mxu0
        %v2670 = vadd.f32 %v2508, %v2669
        %v2671 = vpop.f32.mrf.mxu0
        %v2672 = vpop.f32.mrf.mxu0
        %v2673 = vadd.f32 %v2511, %v2672
        %v2674 = vpop.f32.mrf.mxu0
        %2675 = vmatprep.mubr.bf16.mxu0 0
        %2676 = vmatmul.mubr.bf16.gmra.mxu0 %v2281
        %v2677 = vpop.f32.mrf.mxu0
        %v2678 = vadd.f32 %v2516, %v2677
        %v2679 = vpop.f32.mrf.mxu0
        %v2680 = vpop.f32.mrf.mxu0
        %v2681 = vadd.f32 %v2519, %v2680
        %v2682 = vpop.f32.mrf.mxu0
        %2683 = vdwg.mxu0
        %v2684 = vld [vmem:[#allocation2] sm:$0xe]
        %s2685 = scalar_lea.vmem [#allocation6], 128
        %v2686 = vld [vmem:[%s2685] sm:$0xf]
        %v2687 = vld [vmem:[%s2685 + $0x4] sm:$0xf]
        %v2688 = vld [vmem:[%s2685 + $0x8] sm:$0xf]
        %v2689 = vld [vmem:[%s2685 + $0xc] sm:$0xf]
        %v2690 = vld [vmem:[%s2685 + $0x10] sm:$0xf]
        %v2691 = vld [vmem:[%s2685 + $0x14] sm:$0xf]
        %v2692 = vld [vmem:[%s2685 + $0x18] sm:$0xf]
        %v2693 = vld [vmem:[%s2685 + $0x1c] sm:$0xf]
        %v2694 = vld [vmem:[%s2685 + $0x20] sm:$0xf]
        %v2695 = vld [vmem:[%s2685 + $0x24] sm:$0xf]
        %v2696 = vld [vmem:[%s2685 + $0x28] sm:$0xf]
        %v2697 = vld [vmem:[%s2685 + $0x2c] sm:$0xf]
        %v2698 = vld [vmem:[%s2685 + $0x30] sm:$0xf]
        %v2699 = vld [vmem:[%s2685 + $0x34] sm:$0xf]
        %v2700 = vld [vmem:[%s2685 + $0x38] sm:$0xf]
        %v2701 = vld [vmem:[%s2685 + $0x3c] sm:$0xf]
        %v2703 = vunpack.c.l.b16 %v2684
        %v2704 = vpack.c.b16 %v2255, %v2703
        %vm2705 = vcmask 1046528
        %v2706 = vrot.slane %v2704, 1
        %v2707 = vrot.slane %v2274, 1
        %v2708 = vsel %vm2705, %v2706, %v2707
        %v2709 = vrot.slane %v2275, 1
        %v2710 = vsel %vm2705, %v2707, %v2709
        %v2711 = vrot.slane %v2276, 1
        %v2712 = vsel %vm2705, %v2709, %v2711
        %v2713 = vrot.slane %v2277, 1
        %v2714 = vsel %vm2705, %v2711, %v2713
        %v2715 = vrot.slane %v2278, 1
        %v2716 = vsel %vm2705, %v2713, %v2715
        %v2717 = vrot.slane %v2279, 1
        %v2718 = vsel %vm2705, %v2715, %v2717
        %v2719 = vrot.slane %v2280, 1
        %v2720 = vsel %vm2705, %v2717, %v2719
        %v2721 = vrot.slane %v2281, 1
        %v2722 = vsel %vm2705, %v2719, %v2721
        %v2723 = vrot.slane %v2282, 1
        %v2724 = vsel %vm2705, %v2721, %v2723
        %v2750 = vunpack.c.l.b16 %v2686
        %v2751 = vunpack.c.l.b16 %v2687
        %v2752 = vunpack.c.l.b16 %v2688
        %v2753 = vunpack.c.l.b16 %v2689
        %v2754 = vunpack.c.l.b16 %v2690
        %v2755 = vunpack.c.l.b16 %v2691
        %v2756 = vunpack.c.l.b16 %v2692
        %v2757 = vunpack.c.l.b16 %v2693
        %v2758 = vunpack.c.l.b16 %v2694
        %v2759 = vunpack.c.l.b16 %v2695
        %v2760 = vunpack.c.l.b16 %v2696
        %v2761 = vunpack.c.l.b16 %v2697
        %v2762 = vunpack.c.l.b16 %v2698
        %v2763 = vunpack.c.l.b16 %v2699
        %v2764 = vunpack.c.l.b16 %v2700
        %v2765 = vunpack.c.l.b16 %v2701
        %v2766 = vpack.c.b16 %v2751, %v2750
        %v2767 = vpack.c.b16 %v2753, %v2752
        %v2768 = vpack.c.b16 %v2755, %v2754
        %v2769 = vpack.c.b16 %v2757, %v2756
        %v2770 = vpack.c.b16 %v2759, %v2758
        %v2771 = vpack.c.b16 %v2761, %v2760
        %v2772 = vpack.c.b16 %v2763, %v2762
        %v2773 = vpack.c.b16 %v2765, %v2764
        %2782 = vmatprep.subr.bf16.mxu0 0
        %2783 = vmatpush1.bf16.msra.mxu0 %v2773
        %2784 = vmatprep.subr.bf16.mxu0 0
        %2785 = vmatpush1.bf16.msra.mxu0 %v2772
        %2786 = vmatprep.subr.bf16.mxu0 0
        %2787 = vmatpush1.bf16.msra.mxu0 %v2771
        %2788 = vmatprep.subr.bf16.mxu0 0
        %2789 = vmatpush1.bf16.msra.mxu0 %v2770
        %2790 = vmatprep.subr.bf16.mxu0 0
        %2791 = vmatpush1.bf16.msra.mxu0 %v2769
        %2792 = vmatprep.subr.bf16.mxu0 0
        %2793 = vmatpush1.bf16.msra.mxu0 %v2768
        %2794 = vmatprep.subr.bf16.mxu0 0
        %2795 = vmatpush1.bf16.msra.mxu0 %v2767
        %2796 = vmatprep.subr.bf16.mxu0 0
        %2797 = vmatpush1.bf16.msra.mxu0 %v2766
        %2798 = vmatprep.subr.bf16.mxu0 0
        %2799 = vmatpush2.bf16.msra.mxu0 0
        %2800 = vmatprep.subr.bf16.mxu0 0
        %2801 = vmatpush2.bf16.msra.mxu0 0
        %2802 = vmatprep.subr.bf16.mxu0 0
        %2803 = vmatpush2.bf16.msra.mxu0 0
        %2804 = vmatprep.subr.bf16.mxu0 0
        %2805 = vmatpush2.bf16.msra.mxu0 0
        %2806 = vmatprep.subr.bf16.mxu0 0
        %2807 = vmatpush2.bf16.msra.mxu0 0
        %2808 = vmatprep.subr.bf16.mxu0 0
        %2809 = vmatpush2.bf16.msra.mxu0 0
        %2810 = vmatprep.subr.bf16.mxu0 0
        %2811 = vmatpush2.bf16.msra.mxu0 0
        %2812 = vmatprep.subr.bf16.mxu0 0
        %2813 = vmatpush2.bf16.msra.mxu0 0
        %2814 = vmatprep.mubr.bf16.mxu0 0
        %2815 = vmatmul.mubr.bf16.gmra.mxu0 %v2708
        %v2816 = vpop.f32.mrf.mxu0
        %v2817 = vadd.f32 0.0, %v2816
        %v2818 = vpop.f32.mrf.mxu0
        %v2819 = vpop.f32.mrf.mxu0
        %v2820 = vadd.f32 0.0, %v2819
        %v2821 = vpop.f32.mrf.mxu0
        %2822 = vmatprep.mubr.bf16.mxu0 0
        %2823 = vmatmul.mubr.bf16.gmra.mxu0 %v2710
        %v2824 = vpop.f32.mrf.mxu0
        %v2825 = vadd.f32 0.0, %v2824
        %v2826 = vpop.f32.mrf.mxu0
        %v2827 = vpop.f32.mrf.mxu0
        %v2828 = vadd.f32 0.0, %v2827
        %v2829 = vpop.f32.mrf.mxu0
        %2830 = vmatprep.mubr.bf16.mxu0 0
        %2831 = vmatmul.mubr.bf16.gmra.mxu0 %v2712
        %v2832 = vpop.f32.mrf.mxu0
        %v2833 = vadd.f32 0.0, %v2832
        %v2834 = vpop.f32.mrf.mxu0
        %v2835 = vpop.f32.mrf.mxu0
        %v2836 = vadd.f32 0.0, %v2835
        %v2837 = vpop.f32.mrf.mxu0
        %2838 = vmatprep.mubr.bf16.mxu0 0
        %2839 = vmatmul.mubr.bf16.gmra.mxu0 %v2714
        %v2840 = vpop.f32.mrf.mxu0
        %v2841 = vadd.f32 0.0, %v2840
        %v2842 = vpop.f32.mrf.mxu0
        %v2843 = vpop.f32.mrf.mxu0
        %v2844 = vadd.f32 0.0, %v2843
        %v2845 = vpop.f32.mrf.mxu0
        %2846 = vmatprep.mubr.bf16.mxu0 0
        %2847 = vmatmul.mubr.bf16.gmra.mxu0 %v2716
        %v2848 = vpop.f32.mrf.mxu0
        %v2849 = vadd.f32 0.0, %v2848
        %v2850 = vpop.f32.mrf.mxu0
        %v2851 = vpop.f32.mrf.mxu0
        %v2852 = vadd.f32 0.0, %v2851
        %v2853 = vpop.f32.mrf.mxu0
        %2854 = vmatprep.mubr.bf16.mxu0 0
        %2855 = vmatmul.mubr.bf16.gmra.mxu0 %v2718
        %v2856 = vpop.f32.mrf.mxu0
        %v2857 = vadd.f32 0.0, %v2856
        %v2858 = vpop.f32.mrf.mxu0
        %v2859 = vpop.f32.mrf.mxu0
        %v2860 = vadd.f32 0.0, %v2859
        %v2861 = vpop.f32.mrf.mxu0
        %2862 = vmatprep.mubr.bf16.mxu0 0
        %2863 = vmatmul.mubr.bf16.gmra.mxu0 %v2720
        %v2864 = vpop.f32.mrf.mxu0
        %v2865 = vadd.f32 0.0, %v2864
        %v2866 = vpop.f32.mrf.mxu0
        %v2867 = vpop.f32.mrf.mxu0
        %v2868 = vadd.f32 0.0, %v2867
        %v2869 = vpop.f32.mrf.mxu0
        %2870 = vmatprep.mubr.bf16.mxu0 0
        %2871 = vmatmul.mubr.bf16.gmra.mxu0 %v2722
        %v2872 = vpop.f32.mrf.mxu0
        %v2873 = vadd.f32 0.0, %v2872
        %v2874 = vpop.f32.mrf.mxu0
        %v2875 = vpop.f32.mrf.mxu0
        %v2876 = vadd.f32 0.0, %v2875
        %v2877 = vpop.f32.mrf.mxu0
        %2878 = vmatprep.mubr.bf16.mxu0 0
        %2879 = vmatmul.mubr.bf16.gmra.mxu0 %v2724
        %v2880 = vpop.f32.mrf.mxu0
        %v2881 = vadd.f32 0.0, %v2880
        %v2882 = vpop.f32.mrf.mxu0
        %v2883 = vpop.f32.mrf.mxu0
        %v2884 = vadd.f32 0.0, %v2883
        %v2885 = vpop.f32.mrf.mxu0
        %2886 = vdwg.mxu0
        %v2887 = vadd.f32 %v2614, %v2817
        %v2888 = vadd.f32 %v2617, %v2820
        %v2889 = vadd.f32 %v2622, %v2825
        %v2890 = vadd.f32 %v2625, %v2828
        %v2891 = vadd.f32 %v2630, %v2833
        %v2892 = vadd.f32 %v2633, %v2836
        %v2893 = vadd.f32 %v2638, %v2841
        %v2894 = vadd.f32 %v2641, %v2844
        %v2895 = vadd.f32 %v2646, %v2849
        %v2896 = vadd.f32 %v2649, %v2852
        %v2897 = vadd.f32 %v2654, %v2857
        %v2898 = vadd.f32 %v2657, %v2860
        %v2899 = vadd.f32 %v2662, %v2865
        %v2900 = vadd.f32 %v2665, %v2868
        %v2901 = vadd.f32 %v2670, %v2873
        %v2902 = vadd.f32 %v2673, %v2876
        %v2903 = vadd.f32 %v2678, %v2881
        %v2904 = vadd.f32 %v2681, %v2884
        %v2905 = vld [vmem:[#allocation2 + $0x8] sm:$0xe]
        %v2906 = vld [vmem:[#allocation2 + $0xc] sm:$0xf]
        %v2907 = vld [vmem:[#allocation2 + $0x10] sm:$0xf]
        %v2908 = vld [vmem:[#allocation2 + $0x14] sm:$0xf]
        %v2909 = vld [vmem:[#allocation2 + $0x18] sm:$0xf]
        %v2910 = vld [vmem:[#allocation2 + $0x1c] sm:$0xf]
        %v2911 = vld [vmem:[#allocation2 + $0x20] sm:$0xf]
        %v2912 = vld [vmem:[#allocation2 + $0x24] sm:$0xf]
        %v2913 = vld [vmem:[#allocation2 + $0x28] sm:$0xf]
        %v2914 = vld [vmem:[#allocation2 + $0x2c] sm:$0xf]
        %v2915 = vld [vmem:[#allocation2 + $0x30] sm:$0xf]
        %v2916 = vld [vmem:[#allocation2 + $0x34] sm:$0xf]
        %v2917 = vld [vmem:[#allocation2 + $0x38] sm:$0xf]
        %v2918 = vld [vmem:[#allocation2 + $0x3c] sm:$0xf]
        %v2919 = vld [vmem:[#allocation2 + $0x40] sm:$0xf]
        %v2920 = vld [vmem:[#allocation2 + $0x44] sm:$0xf]
        %v2921 = vld [vmem:[#allocation2 + $0x48] sm:$0xf]
        %v2922 = vld [vmem:[#allocation2 + $0x4c] sm:$0xf]
        %v2923 = vld [vmem:[#allocation2 + $0x50] sm:$0x1]
        %s2924 = scalar_lea.vmem [#allocation6], 192
        %v2925 = vld [vmem:[%s2924] sm:$0xf]
        %v2926 = vld [vmem:[%s2924 + $0x4] sm:$0xf]
        %v2927 = vld [vmem:[%s2924 + $0x8] sm:$0xf]
        %v2928 = vld [vmem:[%s2924 + $0xc] sm:$0xf]
        %v2929 = vld [vmem:[%s2924 + $0x10] sm:$0xf]
        %v2930 = vld [vmem:[%s2924 + $0x14] sm:$0xf]
        %v2931 = vld [vmem:[%s2924 + $0x18] sm:$0xf]
        %v2932 = vld [vmem:[%s2924 + $0x1c] sm:$0xf]
        %v2933 = vld [vmem:[%s2924 + $0x20] sm:$0xf]
        %v2934 = vld [vmem:[%s2924 + $0x24] sm:$0xf]
        %v2935 = vld [vmem:[%s2924 + $0x28] sm:$0xf]
        %v2936 = vld [vmem:[%s2924 + $0x2c] sm:$0xf]
        %v2937 = vld [vmem:[%s2924 + $0x30] sm:$0xf]
        %v2938 = vld [vmem:[%s2924 + $0x34] sm:$0xf]
        %v2939 = vld [vmem:[%s2924 + $0x38] sm:$0xf]
        %v2940 = vld [vmem:[%s2924 + $0x3c] sm:$0xf]
        %v2960 = vunpack.c.l.b16 %v2905
        %v2961 = vunpack.c.l.b16 %v2906
        %v2962 = vunpack.c.l.b16 %v2907
        %v2963 = vunpack.c.l.b16 %v2908
        %v2964 = vunpack.c.l.b16 %v2909
        %v2965 = vunpack.c.l.b16 %v2910
        %v2966 = vunpack.c.l.b16 %v2911
        %v2967 = vunpack.c.l.b16 %v2912
        %v2968 = vunpack.c.l.b16 %v2913
        %v2969 = vunpack.c.l.b16 %v2914
        %v2970 = vunpack.c.l.b16 %v2915
        %v2971 = vunpack.c.l.b16 %v2916
        %v2972 = vunpack.c.l.b16 %v2917
        %v2973 = vunpack.c.l.b16 %v2918
        %v2974 = vunpack.c.l.b16 %v2919
        %v2975 = vunpack.c.l.b16 %v2920
        %v2976 = vunpack.c.l.b16 %v2921
        %v2977 = vunpack.c.l.b16 %v2922
        %v2978 = vunpack.c.l.b16 %v2923
        %v2979 = vpack.c.b16 %v2961, %v2960
        %v2980 = vpack.c.b16 %v2963, %v2962
        %v2981 = vpack.c.b16 %v2965, %v2964
        %v2982 = vpack.c.b16 %v2967, %v2966
        %v2983 = vpack.c.b16 %v2969, %v2968
        %v2984 = vpack.c.b16 %v2971, %v2970
        %v2985 = vpack.c.b16 %v2973, %v2972
        %v2986 = vpack.c.b16 %v2975, %v2974
        %v2987 = vpack.c.b16 %v2977, %v2976
        %v2988 = vpack.c.b16 %v2978, %v2978
        %v2989 = vrot.slane %v2979, 1
        %v2990 = vrot.slane %v2980, 1
        %v2991 = vsel %vm2705, %v2989, %v2990
        %v2992 = vrot.slane %v2981, 1
        %v2993 = vsel %vm2705, %v2990, %v2992
        %v2994 = vrot.slane %v2982, 1
        %v2995 = vsel %vm2705, %v2992, %v2994
        %v2996 = vrot.slane %v2983, 1
        %v2997 = vsel %vm2705, %v2994, %v2996
        %v2998 = vrot.slane %v2984, 1
        %v2999 = vsel %vm2705, %v2996, %v2998
        %v3000 = vrot.slane %v2985, 1
        %v3001 = vsel %vm2705, %v2998, %v3000
        %v3002 = vrot.slane %v2986, 1
        %v3003 = vsel %vm2705, %v3000, %v3002
        %v3004 = vrot.slane %v2987, 1
        %v3005 = vsel %vm2705, %v3002, %v3004
        %v3006 = vrot.slane %v2988, 1
        %v3007 = vsel %vm2705, %v3004, %v3006
        %v3033 = vunpack.c.l.b16 %v2925
        %v3034 = vunpack.c.l.b16 %v2926
        %v3035 = vunpack.c.l.b16 %v2927
        %v3036 = vunpack.c.l.b16 %v2928
        %v3037 = vunpack.c.l.b16 %v2929
        %v3038 = vunpack.c.l.b16 %v2930
        %v3039 = vunpack.c.l.b16 %v2931
        %v3040 = vunpack.c.l.b16 %v2932
        %v3041 = vunpack.c.l.b16 %v2933
        %v3042 = vunpack.c.l.b16 %v2934
        %v3043 = vunpack.c.l.b16 %v2935
        %v3044 = vunpack.c.l.b16 %v2936
        %v3045 = vunpack.c.l.b16 %v2937
        %v3046 = vunpack.c.l.b16 %v2938
        %v3047 = vunpack.c.l.b16 %v2939
        %v3048 = vunpack.c.l.b16 %v2940
        %v3049 = vpack.c.b16 %v3034, %v3033
        %v3050 = vpack.c.b16 %v3036, %v3035
        %v3051 = vpack.c.b16 %v3038, %v3037
        %v3052 = vpack.c.b16 %v3040, %v3039
        %v3053 = vpack.c.b16 %v3042, %v3041
        %v3054 = vpack.c.b16 %v3044, %v3043
        %v3055 = vpack.c.b16 %v3046, %v3045
        %v3056 = vpack.c.b16 %v3048, %v3047
        %3065 = vmatprep.subr.bf16.mxu0 0
        %3066 = vmatpush1.bf16.msra.mxu0 %v3056
        %3067 = vmatprep.subr.bf16.mxu0 0
        %3068 = vmatpush1.bf16.msra.mxu0 %v3055
        %3069 = vmatprep.subr.bf16.mxu0 0
        %3070 = vmatpush1.bf16.msra.mxu0 %v3054
        %3071 = vmatprep.subr.bf16.mxu0 0
        %3072 = vmatpush1.bf16.msra.mxu0 %v3053
        %3073 = vmatprep.subr.bf16.mxu0 0
        %3074 = vmatpush1.bf16.msra.mxu0 %v3052
        %3075 = vmatprep.subr.bf16.mxu0 0
        %3076 = vmatpush1.bf16.msra.mxu0 %v3051
        %3077 = vmatprep.subr.bf16.mxu0 0
        %3078 = vmatpush1.bf16.msra.mxu0 %v3050
        %3079 = vmatprep.subr.bf16.mxu0 0
        %3080 = vmatpush1.bf16.msra.mxu0 %v3049
        %3081 = vmatprep.subr.bf16.mxu0 0
        %3082 = vmatpush2.bf16.msra.mxu0 0
        %3083 = vmatprep.subr.bf16.mxu0 0
        %3084 = vmatpush2.bf16.msra.mxu0 0
        %3085 = vmatprep.subr.bf16.mxu0 0
        %3086 = vmatpush2.bf16.msra.mxu0 0
        %3087 = vmatprep.subr.bf16.mxu0 0
        %3088 = vmatpush2.bf16.msra.mxu0 0
        %3089 = vmatprep.subr.bf16.mxu0 0
        %3090 = vmatpush2.bf16.msra.mxu0 0
        %3091 = vmatprep.subr.bf16.mxu0 0
        %3092 = vmatpush2.bf16.msra.mxu0 0
        %3093 = vmatprep.subr.bf16.mxu0 0
        %3094 = vmatpush2.bf16.msra.mxu0 0
        %3095 = vmatprep.subr.bf16.mxu0 0
        %3096 = vmatpush2.bf16.msra.mxu0 0
        %3097 = vmatprep.mubr.bf16.mxu0 0
        %3098 = vmatmul.mubr.bf16.gmra.mxu0 %v2991
        %v3099 = vpop.f32.mrf.mxu0
        %v3100 = vadd.f32 0.0, %v3099
        %v3101 = vpop.f32.mrf.mxu0
        %v3102 = vpop.f32.mrf.mxu0
        %v3103 = vadd.f32 0.0, %v3102
        %v3104 = vpop.f32.mrf.mxu0
        %3105 = vmatprep.mubr.bf16.mxu0 0
        %3106 = vmatmul.mubr.bf16.gmra.mxu0 %v2993
        %v3107 = vpop.f32.mrf.mxu0
        %v3108 = vadd.f32 0.0, %v3107
        %v3109 = vpop.f32.mrf.mxu0
        %v3110 = vpop.f32.mrf.mxu0
        %v3111 = vadd.f32 0.0, %v3110
        %v3112 = vpop.f32.mrf.mxu0
        %3113 = vmatprep.mubr.bf16.mxu0 0
        %3114 = vmatmul.mubr.bf16.gmra.mxu0 %v2995
        %v3115 = vpop.f32.mrf.mxu0
        %v3116 = vadd.f32 0.0, %v3115
        %v3117 = vpop.f32.mrf.mxu0
        %v3118 = vpop.f32.mrf.mxu0
        %v3119 = vadd.f32 0.0, %v3118
        %v3120 = vpop.f32.mrf.mxu0
        %3121 = vmatprep.mubr.bf16.mxu0 0
        %3122 = vmatmul.mubr.bf16.gmra.mxu0 %v2997
        %v3123 = vpop.f32.mrf.mxu0
        %v3124 = vadd.f32 0.0, %v3123
        %v3125 = vpop.f32.mrf.mxu0
        %v3126 = vpop.f32.mrf.mxu0
        %v3127 = vadd.f32 0.0, %v3126
        %v3128 = vpop.f32.mrf.mxu0
        %3129 = vmatprep.mubr.bf16.mxu0 0
        %3130 = vmatmul.mubr.bf16.gmra.mxu0 %v2999
        %v3131 = vpop.f32.mrf.mxu0
        %v3132 = vadd.f32 0.0, %v3131
        %v3133 = vpop.f32.mrf.mxu0
        %v3134 = vpop.f32.mrf.mxu0
        %v3135 = vadd.f32 0.0, %v3134
        %v3136 = vpop.f32.mrf.mxu0
        %3137 = vmatprep.mubr.bf16.mxu0 0
        %3138 = vmatmul.mubr.bf16.gmra.mxu0 %v3001
        %v3139 = vpop.f32.mrf.mxu0
        %v3140 = vadd.f32 0.0, %v3139
        %v3141 = vpop.f32.mrf.mxu0
        %v3142 = vpop.f32.mrf.mxu0
        %v3143 = vadd.f32 0.0, %v3142
        %v3144 = vpop.f32.mrf.mxu0
        %3145 = vmatprep.mubr.bf16.mxu0 0
        %3146 = vmatmul.mubr.bf16.gmra.mxu0 %v3003
        %v3147 = vpop.f32.mrf.mxu0
        %v3148 = vadd.f32 0.0, %v3147
        %v3149 = vpop.f32.mrf.mxu0
        %v3150 = vpop.f32.mrf.mxu0
        %v3151 = vadd.f32 0.0, %v3150
        %v3152 = vpop.f32.mrf.mxu0
        %3153 = vmatprep.mubr.bf16.mxu0 0
        %3154 = vmatmul.mubr.bf16.gmra.mxu0 %v3005
        %v3155 = vpop.f32.mrf.mxu0
        %v3156 = vadd.f32 0.0, %v3155
        %v3157 = vpop.f32.mrf.mxu0
        %v3158 = vpop.f32.mrf.mxu0
        %v3159 = vadd.f32 0.0, %v3158
        %v3160 = vpop.f32.mrf.mxu0
        %3161 = vmatprep.mubr.bf16.mxu0 0
        %3162 = vmatmul.mubr.bf16.gmra.mxu0 %v3007
        %v3163 = vpop.f32.mrf.mxu0
        %v3164 = vadd.f32 0.0, %v3163
        %v3165 = vpop.f32.mrf.mxu0
        %v3166 = vpop.f32.mrf.mxu0
        %v3167 = vadd.f32 0.0, %v3166
        %v3168 = vpop.f32.mrf.mxu0
        %3169 = vdwg.mxu0
        %v3170 = vadd.f32 %v2887, %v3100
        %v3171 = vadd.f32 %v2888, %v3103
        %v3172 = vadd.f32 %v2889, %v3108
        %v3173 = vadd.f32 %v2890, %v3111
        %v3174 = vadd.f32 %v2891, %v3116
        %v3175 = vadd.f32 %v2892, %v3119
        %v3176 = vadd.f32 %v2893, %v3124
        %v3177 = vadd.f32 %v2894, %v3127
        %v3178 = vadd.f32 %v2895, %v3132
        %v3179 = vadd.f32 %v2896, %v3135
        %v3180 = vadd.f32 %v2897, %v3140
        %v3181 = vadd.f32 %v2898, %v3143
        %v3182 = vadd.f32 %v2899, %v3148
        %v3183 = vadd.f32 %v2900, %v3151
        %v3184 = vadd.f32 %v2901, %v3156
        %v3185 = vadd.f32 %v2902, %v3159
        %v3186 = vadd.f32 %v2903, %v3164
        %v3187 = vadd.f32 %v2904, %v3167
        %v3188 = vld [vmem:[#allocation2 + $0x50] sm:$0x3]
        %s3189 = scalar_lea.vmem [#allocation6], 256
        %v3190 = vld [vmem:[%s3189] sm:$0xf]
        %v3191 = vld [vmem:[%s3189 + $0x4] sm:$0xf]
        %v3192 = vld [vmem:[%s3189 + $0x8] sm:$0xf]
        %v3193 = vld [vmem:[%s3189 + $0xc] sm:$0xf]
        %v3194 = vld [vmem:[%s3189 + $0x10] sm:$0xf]
        %v3195 = vld [vmem:[%s3189 + $0x14] sm:$0xf]
        %v3196 = vld [vmem:[%s3189 + $0x18] sm:$0xf]
        %v3197 = vld [vmem:[%s3189 + $0x1c] sm:$0xf]
        %v3198 = vld [vmem:[%s3189 + $0x20] sm:$0xf]
        %v3199 = vld [vmem:[%s3189 + $0x24] sm:$0xf]
        %v3200 = vld [vmem:[%s3189 + $0x28] sm:$0xf]
        %v3201 = vld [vmem:[%s3189 + $0x2c] sm:$0xf]
        %v3202 = vld [vmem:[%s3189 + $0x30] sm:$0xf]
        %v3203 = vld [vmem:[%s3189 + $0x34] sm:$0xf]
        %v3204 = vld [vmem:[%s3189 + $0x38] sm:$0xf]
        %v3205 = vld [vmem:[%s3189 + $0x3c] sm:$0xf]
        %v3207 = vunpack.c.l.b16 %v3188
        %v3208 = vpack.c.b16 %v3207, %v3207
        %vm3209 = vsmask.f32 6400
        %v3211 = vshrl.u32 %v2979, 16
        %v3213 = vrot.slane %v3211, 1
        %v3214 = vshll.u32 %v2979, 16
        %v3216 = vrot.slane %v3214, 2
        %v3217 = vor.u32 %v3213, %v3216
        %v3219 = vshrl.u32 %v2980, 16
        %v3221 = vrot.slane %v3219, 1
        %v3222 = vshll.u32 %v2980, 16
        %v3224 = vrot.slane %v3222, 2
        %v3225 = vor.u32 %v3221, %v3224
        %v3226 = vsel %vm3209, %v3217, %v3225
        %v3228 = vshrl.u32 %v2981, 16
        %v3230 = vrot.slane %v3228, 1
        %v3231 = vshll.u32 %v2981, 16
        %v3233 = vrot.slane %v3231, 2
        %v3234 = vor.u32 %v3230, %v3233
        %v3235 = vsel %vm3209, %v3225, %v3234
        %v3237 = vshrl.u32 %v2982, 16
        %v3239 = vrot.slane %v3237, 1
        %v3240 = vshll.u32 %v2982, 16
        %v3242 = vrot.slane %v3240, 2
        %v3243 = vor.u32 %v3239, %v3242
        %v3244 = vsel %vm3209, %v3234, %v3243
        %v3246 = vshrl.u32 %v2983, 16
        %v3248 = vrot.slane %v3246, 1
        %v3249 = vshll.u32 %v2983, 16
        %v3251 = vrot.slane %v3249, 2
        %v3252 = vor.u32 %v3248, %v3251
        %v3253 = vsel %vm3209, %v3243, %v3252
        %v3255 = vshrl.u32 %v2984, 16
        %v3257 = vrot.slane %v3255, 1
        %v3258 = vshll.u32 %v2984, 16
        %v3260 = vrot.slane %v3258, 2
        %v3261 = vor.u32 %v3257, %v3260
        %v3262 = vsel %vm3209, %v3252, %v3261
        %v3264 = vshrl.u32 %v2985, 16
        %v3266 = vrot.slane %v3264, 1
        %v3267 = vshll.u32 %v2985, 16
        %v3269 = vrot.slane %v3267, 2
        %v3270 = vor.u32 %v3266, %v3269
        %v3271 = vsel %vm3209, %v3261, %v3270
        %v3273 = vshrl.u32 %v2986, 16
        %v3275 = vrot.slane %v3273, 1
        %v3276 = vshll.u32 %v2986, 16
        %v3278 = vrot.slane %v3276, 2
        %v3279 = vor.u32 %v3275, %v3278
        %v3280 = vsel %vm3209, %v3270, %v3279
        %v3282 = vshrl.u32 %v2987, 16
        %v3284 = vrot.slane %v3282, 1
        %v3285 = vshll.u32 %v2987, 16
        %v3287 = vrot.slane %v3285, 2
        %v3288 = vor.u32 %v3284, %v3287
        %v3289 = vsel %vm3209, %v3279, %v3288
        %v3291 = vshrl.u32 %v3208, 16
        %v3293 = vrot.slane %v3291, 1
        %v3294 = vshll.u32 %v3208, 16
        %v3296 = vrot.slane %v3294, 2
        %v3297 = vor.u32 %v3293, %v3296
        %v3298 = vsel %vm3209, %v3288, %v3297
        %v3324 = vunpack.c.l.b16 %v3190
        %v3325 = vunpack.c.l.b16 %v3191
        %v3326 = vunpack.c.l.b16 %v3192
        %v3327 = vunpack.c.l.b16 %v3193
        %v3328 = vunpack.c.l.b16 %v3194
        %v3329 = vunpack.c.l.b16 %v3195
        %v3330 = vunpack.c.l.b16 %v3196
        %v3331 = vunpack.c.l.b16 %v3197
        %v3332 = vunpack.c.l.b16 %v3198
        %v3333 = vunpack.c.l.b16 %v3199
        %v3334 = vunpack.c.l.b16 %v3200
        %v3335 = vunpack.c.l.b16 %v3201
        %v3336 = vunpack.c.l.b16 %v3202
        %v3337 = vunpack.c.l.b16 %v3203
        %v3338 = vunpack.c.l.b16 %v3204
        %v3339 = vunpack.c.l.b16 %v3205
        %v3340 = vpack.c.b16 %v3325, %v3324
        %v3341 = vpack.c.b16 %v3327, %v3326
        %v3342 = vpack.c.b16 %v3329, %v3328
        %v3343 = vpack.c.b16 %v3331, %v3330
        %v3344 = vpack.c.b16 %v3333, %v3332
        %v3345 = vpack.c.b16 %v3335, %v3334
        %v3346 = vpack.c.b16 %v3337, %v3336
        %v3347 = vpack.c.b16 %v3339, %v3338
        %3356 = vmatprep.subr.bf16.mxu0 0
        %3357 = vmatpush1.bf16.msra.mxu0 %v3347
        %3358 = vmatprep.subr.bf16.mxu0 0
        %3359 = vmatpush1.bf16.msra.mxu0 %v3346
        %3360 = vmatprep.subr.bf16.mxu0 0
        %3361 = vmatpush1.bf16.msra.mxu0 %v3345
        %3362 = vmatprep.subr.bf16.mxu0 0
        %3363 = vmatpush1.bf16.msra.mxu0 %v3344
        %3364 = vmatprep.subr.bf16.mxu0 0
        %3365 = vmatpush1.bf16.msra.mxu0 %v3343
        %3366 = vmatprep.subr.bf16.mxu0 0
        %3367 = vmatpush1.bf16.msra.mxu0 %v3342
        %3368 = vmatprep.subr.bf16.mxu0 0
        %3369 = vmatpush1.bf16.msra.mxu0 %v3341
        %3370 = vmatprep.subr.bf16.mxu0 0
        %3371 = vmatpush1.bf16.msra.mxu0 %v3340
        %3372 = vmatprep.subr.bf16.mxu0 0
        %3373 = vmatpush2.bf16.msra.mxu0 0
        %3374 = vmatprep.subr.bf16.mxu0 0
        %3375 = vmatpush2.bf16.msra.mxu0 0
        %3376 = vmatprep.subr.bf16.mxu0 0
        %3377 = vmatpush2.bf16.msra.mxu0 0
        %3378 = vmatprep.subr.bf16.mxu0 0
        %3379 = vmatpush2.bf16.msra.mxu0 0
        %3380 = vmatprep.subr.bf16.mxu0 0
        %3381 = vmatpush2.bf16.msra.mxu0 0
        %3382 = vmatprep.subr.bf16.mxu0 0
        %3383 = vmatpush2.bf16.msra.mxu0 0
        %3384 = vmatprep.subr.bf16.mxu0 0
        %3385 = vmatpush2.bf16.msra.mxu0 0
        %3386 = vmatprep.subr.bf16.mxu0 0
        %3387 = vmatpush2.bf16.msra.mxu0 0
        %3388 = vmatprep.mubr.bf16.mxu0 0
        %3389 = vmatmul.mubr.bf16.gmra.mxu0 %v3226
        %v3390 = vpop.f32.mrf.mxu0
        %v3391 = vadd.f32 0.0, %v3390
        %v3392 = vpop.f32.mrf.mxu0
        %v3393 = vpop.f32.mrf.mxu0
        %v3394 = vadd.f32 0.0, %v3393
        %v3395 = vpop.f32.mrf.mxu0
        %3396 = vmatprep.mubr.bf16.mxu0 0
        %3397 = vmatmul.mubr.bf16.gmra.mxu0 %v3235
        %v3398 = vpop.f32.mrf.mxu0
        %v3399 = vadd.f32 0.0, %v3398
        %v3400 = vpop.f32.mrf.mxu0
        %v3401 = vpop.f32.mrf.mxu0
        %v3402 = vadd.f32 0.0, %v3401
        %v3403 = vpop.f32.mrf.mxu0
        %3404 = vmatprep.mubr.bf16.mxu0 0
        %3405 = vmatmul.mubr.bf16.gmra.mxu0 %v3244
        %v3406 = vpop.f32.mrf.mxu0
        %v3407 = vadd.f32 0.0, %v3406
        %v3408 = vpop.f32.mrf.mxu0
        %v3409 = vpop.f32.mrf.mxu0
        %v3410 = vadd.f32 0.0, %v3409
        %v3411 = vpop.f32.mrf.mxu0
        %3412 = vmatprep.mubr.bf16.mxu0 0
        %3413 = vmatmul.mubr.bf16.gmra.mxu0 %v3253
        %v3414 = vpop.f32.mrf.mxu0
        %v3415 = vadd.f32 0.0, %v3414
        %v3416 = vpop.f32.mrf.mxu0
        %v3417 = vpop.f32.mrf.mxu0
        %v3418 = vadd.f32 0.0, %v3417
        %v3419 = vpop.f32.mrf.mxu0
        %3420 = vmatprep.mubr.bf16.mxu0 0
        %3421 = vmatmul.mubr.bf16.gmra.mxu0 %v3262
        %v3422 = vpop.f32.mrf.mxu0
        %v3423 = vadd.f32 0.0, %v3422
        %v3424 = vpop.f32.mrf.mxu0
        %v3425 = vpop.f32.mrf.mxu0
        %v3426 = vadd.f32 0.0, %v3425
        %v3427 = vpop.f32.mrf.mxu0
        %3428 = vmatprep.mubr.bf16.mxu0 0
        %3429 = vmatmul.mubr.bf16.gmra.mxu0 %v3271
        %v3430 = vpop.f32.mrf.mxu0
        %v3431 = vadd.f32 0.0, %v3430
        %v3432 = vpop.f32.mrf.mxu0
        %v3433 = vpop.f32.mrf.mxu0
        %v3434 = vadd.f32 0.0, %v3433
        %v3435 = vpop.f32.mrf.mxu0
        %3436 = vmatprep.mubr.bf16.mxu0 0
        %3437 = vmatmul.mubr.bf16.gmra.mxu0 %v3280
        %v3438 = vpop.f32.mrf.mxu0
        %v3439 = vadd.f32 0.0, %v3438
        %v3440 = vpop.f32.mrf.mxu0
        %v3441 = vpop.f32.mrf.mxu0
        %v3442 = vadd.f32 0.0, %v3441
        %v3443 = vpop.f32.mrf.mxu0
        %3444 = vmatprep.mubr.bf16.mxu0 0
        %3445 = vmatmul.mubr.bf16.gmra.mxu0 %v3289
        %v3446 = vpop.f32.mrf.mxu0
        %v3447 = vadd.f32 0.0, %v3446
        %v3448 = vpop.f32.mrf.mxu0
        %v3449 = vpop.f32.mrf.mxu0
        %v3450 = vadd.f32 0.0, %v3449
        %v3451 = vpop.f32.mrf.mxu0
        %3452 = vmatprep.mubr.bf16.mxu0 0
        %3453 = vmatmul.mubr.bf16.gmra.mxu0 %v3298
        %v3454 = vpop.f32.mrf.mxu0
        %v3455 = vadd.f32 0.0, %v3454
        %v3456 = vpop.f32.mrf.mxu0
        %v3457 = vpop.f32.mrf.mxu0
        %v3458 = vadd.f32 0.0, %v3457
        %v3459 = vpop.f32.mrf.mxu0
        %3460 = vdwg.mxu0
        %v3461 = vadd.f32 %v3170, %v3391
        %v3462 = vadd.f32 %v3171, %v3394
        %v3463 = vadd.f32 %v3172, %v3399
        %v3464 = vadd.f32 %v3173, %v3402
        %v3465 = vadd.f32 %v3174, %v3407
        %v3466 = vadd.f32 %v3175, %v3410
        %v3467 = vadd.f32 %v3176, %v3415
        %v3468 = vadd.f32 %v3177, %v3418
        %v3469 = vadd.f32 %v3178, %v3423
        %v3470 = vadd.f32 %v3179, %v3426
        %v3471 = vadd.f32 %v3180, %v3431
        %v3472 = vadd.f32 %v3181, %v3434
        %v3473 = vadd.f32 %v3182, %v3439
        %v3474 = vadd.f32 %v3183, %v3442
        %v3475 = vadd.f32 %v3184, %v3447
        %v3476 = vadd.f32 %v3185, %v3450
        %v3477 = vadd.f32 %v3186, %v3455
        %v3478 = vadd.f32 %v3187, %v3458
        %v3479 = vld [vmem:[#allocation2 + $0x8] sm:$0xc]
        %s3480 = scalar_lea.vmem [#allocation6], 320
        %v3481 = vld [vmem:[%s3480] sm:$0xf]
        %v3482 = vld [vmem:[%s3480 + $0x4] sm:$0xf]
        %v3483 = vld [vmem:[%s3480 + $0x8] sm:$0xf]
        %v3484 = vld [vmem:[%s3480 + $0xc] sm:$0xf]
        %v3485 = vld [vmem:[%s3480 + $0x10] sm:$0xf]
        %v3486 = vld [vmem:[%s3480 + $0x14] sm:$0xf]
        %v3487 = vld [vmem:[%s3480 + $0x18] sm:$0xf]
        %v3488 = vld [vmem:[%s3480 + $0x1c] sm:$0xf]
        %v3489 = vld [vmem:[%s3480 + $0x20] sm:$0xf]
        %v3490 = vld [vmem:[%s3480 + $0x24] sm:$0xf]
        %v3491 = vld [vmem:[%s3480 + $0x28] sm:$0xf]
        %v3492 = vld [vmem:[%s3480 + $0x2c] sm:$0xf]
        %v3493 = vld [vmem:[%s3480 + $0x30] sm:$0xf]
        %v3494 = vld [vmem:[%s3480 + $0x34] sm:$0xf]
        %v3495 = vld [vmem:[%s3480 + $0x38] sm:$0xf]
        %v3496 = vld [vmem:[%s3480 + $0x3c] sm:$0xf]
        %v3498 = vunpack.c.l.b16 %v3479
        %v3499 = vpack.c.b16 %v2961, %v3498
        %vm3500 = vcmask 1045504
        %v3501 = vrot.slane %v3499, 2
        %v3502 = vrot.slane %v2980, 2
        %v3503 = vsel %vm3500, %v3501, %v3502
        %v3504 = vrot.slane %v2981, 2
        %v3505 = vsel %vm3500, %v3502, %v3504
        %v3506 = vrot.slane %v2982, 2
        %v3507 = vsel %vm3500, %v3504, %v3506
        %v3508 = vrot.slane %v2983, 2
        %v3509 = vsel %vm3500, %v3506, %v3508
        %v3510 = vrot.slane %v2984, 2
        %v3511 = vsel %vm3500, %v3508, %v3510
        %v3512 = vrot.slane %v2985, 2
        %v3513 = vsel %vm3500, %v3510, %v3512
        %v3514 = vrot.slane %v2986, 2
        %v3515 = vsel %vm3500, %v3512, %v3514
        %v3516 = vrot.slane %v2987, 2
        %v3517 = vsel %vm3500, %v3514, %v3516
        %v3518 = vrot.slane %v3208, 2
        %v3519 = vsel %vm3500, %v3516, %v3518
        %v3545 = vunpack.c.l.b16 %v3481
        %v3546 = vunpack.c.l.b16 %v3482
        %v3547 = vunpack.c.l.b16 %v3483
        %v3548 = vunpack.c.l.b16 %v3484
        %v3549 = vunpack.c.l.b16 %v3485
        %v3550 = vunpack.c.l.b16 %v3486
        %v3551 = vunpack.c.l.b16 %v3487
        %v3552 = vunpack.c.l.b16 %v3488
        %v3553 = vunpack.c.l.b16 %v3489
        %v3554 = vunpack.c.l.b16 %v3490
        %v3555 = vunpack.c.l.b16 %v3491
        %v3556 = vunpack.c.l.b16 %v3492
        %v3557 = vunpack.c.l.b16 %v3493
        %v3558 = vunpack.c.l.b16 %v3494
        %v3559 = vunpack.c.l.b16 %v3495
        %v3560 = vunpack.c.l.b16 %v3496
        %v3561 = vpack.c.b16 %v3546, %v3545
        %v3562 = vpack.c.b16 %v3548, %v3547
        %v3563 = vpack.c.b16 %v3550, %v3549
        %v3564 = vpack.c.b16 %v3552, %v3551
        %v3565 = vpack.c.b16 %v3554, %v3553
        %v3566 = vpack.c.b16 %v3556, %v3555
        %v3567 = vpack.c.b16 %v3558, %v3557
        %v3568 = vpack.c.b16 %v3560, %v3559
        %3577 = vmatprep.subr.bf16.mxu0 0
        %3578 = vmatpush1.bf16.msra.mxu0 %v3568
        %3579 = vmatprep.subr.bf16.mxu0 0
        %3580 = vmatpush1.bf16.msra.mxu0 %v3567
        %3581 = vmatprep.subr.bf16.mxu0 0
        %3582 = vmatpush1.bf16.msra.mxu0 %v3566
        %3583 = vmatprep.subr.bf16.mxu0 0
        %3584 = vmatpush1.bf16.msra.mxu0 %v3565
        %3585 = vmatprep.subr.bf16.mxu0 0
        %3586 = vmatpush1.bf16.msra.mxu0 %v3564
        %3587 = vmatprep.subr.bf16.mxu0 0
        %3588 = vmatpush1.bf16.msra.mxu0 %v3563
        %3589 = vmatprep.subr.bf16.mxu0 0
        %3590 = vmatpush1.bf16.msra.mxu0 %v3562
        %3591 = vmatprep.subr.bf16.mxu0 0
        %3592 = vmatpush1.bf16.msra.mxu0 %v3561
        %3593 = vmatprep.subr.bf16.mxu0 0
        %3594 = vmatpush2.bf16.msra.mxu0 0
        %3595 = vmatprep.subr.bf16.mxu0 0
        %3596 = vmatpush2.bf16.msra.mxu0 0
        %3597 = vmatprep.subr.bf16.mxu0 0
        %3598 = vmatpush2.bf16.msra.mxu0 0
        %3599 = vmatprep.subr.bf16.mxu0 0
        %3600 = vmatpush2.bf16.msra.mxu0 0
        %3601 = vmatprep.subr.bf16.mxu0 0
        %3602 = vmatpush2.bf16.msra.mxu0 0
        %3603 = vmatprep.subr.bf16.mxu0 0
        %3604 = vmatpush2.bf16.msra.mxu0 0
        %3605 = vmatprep.subr.bf16.mxu0 0
        %3606 = vmatpush2.bf16.msra.mxu0 0
        %3607 = vmatprep.subr.bf16.mxu0 0
        %3608 = vmatpush2.bf16.msra.mxu0 0
        %3609 = vmatprep.mubr.bf16.mxu0 0
        %3610 = vmatmul.mubr.bf16.gmra.mxu0 %v3503
        %v3611 = vpop.f32.mrf.mxu0
        %v3612 = vadd.f32 0.0, %v3611
        %v3613 = vpop.f32.mrf.mxu0
        %v3614 = vpop.f32.mrf.mxu0
        %v3615 = vadd.f32 0.0, %v3614
        %v3616 = vpop.f32.mrf.mxu0
        %3617 = vmatprep.mubr.bf16.mxu0 0
        %3618 = vmatmul.mubr.bf16.gmra.mxu0 %v3505
        %v3619 = vpop.f32.mrf.mxu0
        %v3620 = vadd.f32 0.0, %v3619
        %v3621 = vpop.f32.mrf.mxu0
        %v3622 = vpop.f32.mrf.mxu0
        %v3623 = vadd.f32 0.0, %v3622
        %v3624 = vpop.f32.mrf.mxu0
        %3625 = vmatprep.mubr.bf16.mxu0 0
        %3626 = vmatmul.mubr.bf16.gmra.mxu0 %v3507
        %v3627 = vpop.f32.mrf.mxu0
        %v3628 = vadd.f32 0.0, %v3627
        %v3629 = vpop.f32.mrf.mxu0
        %v3630 = vpop.f32.mrf.mxu0
        %v3631 = vadd.f32 0.0, %v3630
        %v3632 = vpop.f32.mrf.mxu0
        %3633 = vmatprep.mubr.bf16.mxu0 0
        %3634 = vmatmul.mubr.bf16.gmra.mxu0 %v3509
        %v3635 = vpop.f32.mrf.mxu0
        %v3636 = vadd.f32 0.0, %v3635
        %v3637 = vpop.f32.mrf.mxu0
        %v3638 = vpop.f32.mrf.mxu0
        %v3639 = vadd.f32 0.0, %v3638
        %v3640 = vpop.f32.mrf.mxu0
        %3641 = vmatprep.mubr.bf16.mxu0 0
        %3642 = vmatmul.mubr.bf16.gmra.mxu0 %v3511
        %v3643 = vpop.f32.mrf.mxu0
        %v3644 = vadd.f32 0.0, %v3643
        %v3645 = vpop.f32.mrf.mxu0
        %v3646 = vpop.f32.mrf.mxu0
        %v3647 = vadd.f32 0.0, %v3646
        %v3648 = vpop.f32.mrf.mxu0
        %3649 = vmatprep.mubr.bf16.mxu0 0
        %3650 = vmatmul.mubr.bf16.gmra.mxu0 %v3513
        %v3651 = vpop.f32.mrf.mxu0
        %v3652 = vadd.f32 0.0, %v3651
        %v3653 = vpop.f32.mrf.mxu0
        %v3654 = vpop.f32.mrf.mxu0
        %v3655 = vadd.f32 0.0, %v3654
        %v3656 = vpop.f32.mrf.mxu0
        %3657 = vmatprep.mubr.bf16.mxu0 0
        %3658 = vmatmul.mubr.bf16.gmra.mxu0 %v3515
        %v3659 = vpop.f32.mrf.mxu0
        %v3660 = vadd.f32 0.0, %v3659
        %v3661 = vpop.f32.mrf.mxu0
        %v3662 = vpop.f32.mrf.mxu0
        %v3663 = vadd.f32 0.0, %v3662
        %v3664 = vpop.f32.mrf.mxu0
        %3665 = vmatprep.mubr.bf16.mxu0 0
        %3666 = vmatmul.mubr.bf16.gmra.mxu0 %v3517
        %v3667 = vpop.f32.mrf.mxu0
        %v3668 = vadd.f32 0.0, %v3667
        %v3669 = vpop.f32.mrf.mxu0
        %v3670 = vpop.f32.mrf.mxu0
        %v3671 = vadd.f32 0.0, %v3670
        %v3672 = vpop.f32.mrf.mxu0
        %3673 = vmatprep.mubr.bf16.mxu0 0
        %3674 = vmatmul.mubr.bf16.gmra.mxu0 %v3519
        %v3675 = vpop.f32.mrf.mxu0
        %v3676 = vadd.f32 0.0, %v3675
        %v3677 = vpop.f32.mrf.mxu0
        %v3678 = vpop.f32.mrf.mxu0
        %v3679 = vadd.f32 0.0, %v3678
        %v3680 = vpop.f32.mrf.mxu0
        %3681 = vdwg.mxu0
        %v3682 = vadd.f32 %v3461, %v3612
        %v3683 = vadd.f32 %v3462, %v3615
        %v3684 = vadd.f32 %v3463, %v3620
        %v3685 = vadd.f32 %v3464, %v3623
        %v3686 = vadd.f32 %v3465, %v3628
        %v3687 = vadd.f32 %v3466, %v3631
        %v3688 = vadd.f32 %v3467, %v3636
        %v3689 = vadd.f32 %v3468, %v3639
        %v3690 = vadd.f32 %v3469, %v3644
        %v3691 = vadd.f32 %v3470, %v3647
        %v3692 = vadd.f32 %v3471, %v3652
        %v3693 = vadd.f32 %v3472, %v3655
        %v3694 = vadd.f32 %v3473, %v3660
        %v3695 = vadd.f32 %v3474, %v3663
        %v3696 = vadd.f32 %v3475, %v3668
        %v3697 = vadd.f32 %v3476, %v3671
        %v3698 = vadd.f32 %v3477, %v3676
        %v3699 = vadd.f32 %v3478, %v3679
        %v3700 = vld [vmem:[#allocation2 + $0x10] sm:$0xc]
        %v3701 = vld [vmem:[#allocation2 + $0x14] sm:$0xf]
        %v3702 = vld [vmem:[#allocation2 + $0x18] sm:$0xf]
        %v3703 = vld [vmem:[#allocation2 + $0x1c] sm:$0xf]
        %v3704 = vld [vmem:[#allocation2 + $0x20] sm:$0xf]
        %v3705 = vld [vmem:[#allocation2 + $0x24] sm:$0xf]
        %v3706 = vld [vmem:[#allocation2 + $0x28] sm:$0xf]
        %v3707 = vld [vmem:[#allocation2 + $0x2c] sm:$0xf]
        %v3708 = vld [vmem:[#allocation2 + $0x30] sm:$0xf]
        %v3709 = vld [vmem:[#allocation2 + $0x34] sm:$0xf]
        %v3710 = vld [vmem:[#allocation2 + $0x38] sm:$0xf]
        %v3711 = vld [vmem:[#allocation2 + $0x3c] sm:$0xf]
        %v3712 = vld [vmem:[#allocation2 + $0x40] sm:$0xf]
        %v3713 = vld [vmem:[#allocation2 + $0x44] sm:$0xf]
        %v3714 = vld [vmem:[#allocation2 + $0x48] sm:$0xf]
        %v3715 = vld [vmem:[#allocation2 + $0x4c] sm:$0xf]
        %v3716 = vld [vmem:[#allocation2 + $0x50] sm:$0xf]
        %v3717 = vld [vmem:[#allocation2 + $0x54] sm:$0xf]
        %v3718 = vld [vmem:[#allocation2 + $0x58] sm:$0x3]
        %s3719 = scalar_lea.vmem [#allocation6], 384
        %v3720 = vld [vmem:[%s3719] sm:$0xf]
        %v3721 = vld [vmem:[%s3719 + $0x4] sm:$0xf]
        %v3722 = vld [vmem:[%s3719 + $0x8] sm:$0xf]
        %v3723 = vld [vmem:[%s3719 + $0xc] sm:$0xf]
        %v3724 = vld [vmem:[%s3719 + $0x10] sm:$0xf]
        %v3725 = vld [vmem:[%s3719 + $0x14] sm:$0xf]
        %v3726 = vld [vmem:[%s3719 + $0x18] sm:$0xf]
        %v3727 = vld [vmem:[%s3719 + $0x1c] sm:$0xf]
        %v3728 = vld [vmem:[%s3719 + $0x20] sm:$0xf]
        %v3729 = vld [vmem:[%s3719 + $0x24] sm:$0xf]
        %v3730 = vld [vmem:[%s3719 + $0x28] sm:$0xf]
        %v3731 = vld [vmem:[%s3719 + $0x2c] sm:$0xf]
        %v3732 = vld [vmem:[%s3719 + $0x30] sm:$0xf]
        %v3733 = vld [vmem:[%s3719 + $0x34] sm:$0xf]
        %v3734 = vld [vmem:[%s3719 + $0x38] sm:$0xf]
        %v3735 = vld [vmem:[%s3719 + $0x3c] sm:$0xf]
        %v3755 = vunpack.c.l.b16 %v3700
        %v3756 = vunpack.c.l.b16 %v3701
        %v3757 = vunpack.c.l.b16 %v3702
        %v3758 = vunpack.c.l.b16 %v3703
        %v3759 = vunpack.c.l.b16 %v3704
        %v3760 = vunpack.c.l.b16 %v3705
        %v3761 = vunpack.c.l.b16 %v3706
        %v3762 = vunpack.c.l.b16 %v3707
        %v3763 = vunpack.c.l.b16 %v3708
        %v3764 = vunpack.c.l.b16 %v3709
        %v3765 = vunpack.c.l.b16 %v3710
        %v3766 = vunpack.c.l.b16 %v3711
        %v3767 = vunpack.c.l.b16 %v3712
        %v3768 = vunpack.c.l.b16 %v3713
        %v3769 = vunpack.c.l.b16 %v3714
        %v3770 = vunpack.c.l.b16 %v3715
        %v3771 = vunpack.c.l.b16 %v3716
        %v3772 = vunpack.c.l.b16 %v3717
        %v3773 = vunpack.c.l.b16 %v3718
        %v3774 = vpack.c.b16 %v3756, %v3755
        %v3775 = vpack.c.b16 %v3758, %v3757
        %v3776 = vpack.c.b16 %v3760, %v3759
        %v3777 = vpack.c.b16 %v3762, %v3761
        %v3778 = vpack.c.b16 %v3764, %v3763
        %v3779 = vpack.c.b16 %v3766, %v3765
        %v3780 = vpack.c.b16 %v3768, %v3767
        %v3781 = vpack.c.b16 %v3770, %v3769
        %v3782 = vpack.c.b16 %v3772, %v3771
        %v3783 = vpack.c.b16 %v3773, %v3773
        %v3784 = vrot.slane %v3774, 2
        %v3785 = vrot.slane %v3775, 2
        %v3786 = vsel %vm3500, %v3784, %v3785
        %v3787 = vrot.slane %v3776, 2
        %v3788 = vsel %vm3500, %v3785, %v3787
        %v3789 = vrot.slane %v3777, 2
        %v3790 = vsel %vm3500, %v3787, %v3789
        %v3791 = vrot.slane %v3778, 2
        %v3792 = vsel %vm3500, %v3789, %v3791
        %v3793 = vrot.slane %v3779, 2
        %v3794 = vsel %vm3500, %v3791, %v3793
        %v3795 = vrot.slane %v3780, 2
        %v3796 = vsel %vm3500, %v3793, %v3795
        %v3797 = vrot.slane %v3781, 2
        %v3798 = vsel %vm3500, %v3795, %v3797
        %v3799 = vrot.slane %v3782, 2
        %v3800 = vsel %vm3500, %v3797, %v3799
        %v3801 = vrot.slane %v3783, 2
        %v3802 = vsel %vm3500, %v3799, %v3801
        %v3828 = vunpack.c.l.b16 %v3720
        %v3829 = vunpack.c.l.b16 %v3721
        %v3830 = vunpack.c.l.b16 %v3722
        %v3831 = vunpack.c.l.b16 %v3723
        %v3832 = vunpack.c.l.b16 %v3724
        %v3833 = vunpack.c.l.b16 %v3725
        %v3834 = vunpack.c.l.b16 %v3726
        %v3835 = vunpack.c.l.b16 %v3727
        %v3836 = vunpack.c.l.b16 %v3728
        %v3837 = vunpack.c.l.b16 %v3729
        %v3838 = vunpack.c.l.b16 %v3730
        %v3839 = vunpack.c.l.b16 %v3731
        %v3840 = vunpack.c.l.b16 %v3732
        %v3841 = vunpack.c.l.b16 %v3733
        %v3842 = vunpack.c.l.b16 %v3734
        %v3843 = vunpack.c.l.b16 %v3735
        %v3844 = vpack.c.b16 %v3829, %v3828
        %v3845 = vpack.c.b16 %v3831, %v3830
        %v3846 = vpack.c.b16 %v3833, %v3832
        %v3847 = vpack.c.b16 %v3835, %v3834
        %v3848 = vpack.c.b16 %v3837, %v3836
        %v3849 = vpack.c.b16 %v3839, %v3838
        %v3850 = vpack.c.b16 %v3841, %v3840
        %v3851 = vpack.c.b16 %v3843, %v3842
        %3860 = vmatprep.subr.bf16.mxu0 0
        %3861 = vmatpush1.bf16.msra.mxu0 %v3851
        %3862 = vmatprep.subr.bf16.mxu0 0
        %3863 = vmatpush1.bf16.msra.mxu0 %v3850
        %3864 = vmatprep.subr.bf16.mxu0 0
        %3865 = vmatpush1.bf16.msra.mxu0 %v3849
        %3866 = vmatprep.subr.bf16.mxu0 0
        %3867 = vmatpush1.bf16.msra.mxu0 %v3848
        %3868 = vmatprep.subr.bf16.mxu0 0
        %3869 = vmatpush1.bf16.msra.mxu0 %v3847
        %3870 = vmatprep.subr.bf16.mxu0 0
        %3871 = vmatpush1.bf16.msra.mxu0 %v3846
        %3872 = vmatprep.subr.bf16.mxu0 0
        %3873 = vmatpush1.bf16.msra.mxu0 %v3845
        %3874 = vmatprep.subr.bf16.mxu0 0
        %3875 = vmatpush1.bf16.msra.mxu0 %v3844
        %3876 = vmatprep.subr.bf16.mxu0 0
        %3877 = vmatpush2.bf16.msra.mxu0 0
        %3878 = vmatprep.subr.bf16.mxu0 0
        %3879 = vmatpush2.bf16.msra.mxu0 0
        %3880 = vmatprep.subr.bf16.mxu0 0
        %3881 = vmatpush2.bf16.msra.mxu0 0
        %3882 = vmatprep.subr.bf16.mxu0 0
        %3883 = vmatpush2.bf16.msra.mxu0 0
        %3884 = vmatprep.subr.bf16.mxu0 0
        %3885 = vmatpush2.bf16.msra.mxu0 0
        %3886 = vmatprep.subr.bf16.mxu0 0
        %3887 = vmatpush2.bf16.msra.mxu0 0
        %3888 = vmatprep.subr.bf16.mxu0 0
        %3889 = vmatpush2.bf16.msra.mxu0 0
        %3890 = vmatprep.subr.bf16.mxu0 0
        %3891 = vmatpush2.bf16.msra.mxu0 0
        %3892 = vmatprep.mubr.bf16.mxu0 0
        %3893 = vmatmul.mubr.bf16.gmra.mxu0 %v3786
        %v3894 = vpop.f32.mrf.mxu0
        %v3895 = vadd.f32 0.0, %v3894
        %v3896 = vpop.f32.mrf.mxu0
        %v3897 = vpop.f32.mrf.mxu0
        %v3898 = vadd.f32 0.0, %v3897
        %v3899 = vpop.f32.mrf.mxu0
        %3900 = vmatprep.mubr.bf16.mxu0 0
        %3901 = vmatmul.mubr.bf16.gmra.mxu0 %v3788
        %v3902 = vpop.f32.mrf.mxu0
        %v3903 = vadd.f32 0.0, %v3902
        %v3904 = vpop.f32.mrf.mxu0
        %v3905 = vpop.f32.mrf.mxu0
        %v3906 = vadd.f32 0.0, %v3905
        %v3907 = vpop.f32.mrf.mxu0
        %3908 = vmatprep.mubr.bf16.mxu0 0
        %3909 = vmatmul.mubr.bf16.gmra.mxu0 %v3790
        %v3910 = vpop.f32.mrf.mxu0
        %v3911 = vadd.f32 0.0, %v3910
        %v3912 = vpop.f32.mrf.mxu0
        %v3913 = vpop.f32.mrf.mxu0
        %v3914 = vadd.f32 0.0, %v3913
        %v3915 = vpop.f32.mrf.mxu0
        %3916 = vmatprep.mubr.bf16.mxu0 0
        %3917 = vmatmul.mubr.bf16.gmra.mxu0 %v3792
        %v3918 = vpop.f32.mrf.mxu0
        %v3919 = vadd.f32 0.0, %v3918
        %v3920 = vpop.f32.mrf.mxu0
        %v3921 = vpop.f32.mrf.mxu0
        %v3922 = vadd.f32 0.0, %v3921
        %v3923 = vpop.f32.mrf.mxu0
        %3924 = vmatprep.mubr.bf16.mxu0 0
        %3925 = vmatmul.mubr.bf16.gmra.mxu0 %v3794
        %v3926 = vpop.f32.mrf.mxu0
        %v3927 = vadd.f32 0.0, %v3926
        %v3928 = vpop.f32.mrf.mxu0
        %v3929 = vpop.f32.mrf.mxu0
        %v3930 = vadd.f32 0.0, %v3929
        %v3931 = vpop.f32.mrf.mxu0
        %3932 = vmatprep.mubr.bf16.mxu0 0
        %3933 = vmatmul.mubr.bf16.gmra.mxu0 %v3796
        %v3934 = vpop.f32.mrf.mxu0
        %v3935 = vadd.f32 0.0, %v3934
        %v3936 = vpop.f32.mrf.mxu0
        %v3937 = vpop.f32.mrf.mxu0
        %v3938 = vadd.f32 0.0, %v3937
        %v3939 = vpop.f32.mrf.mxu0
        %3940 = vmatprep.mubr.bf16.mxu0 0
        %3941 = vmatmul.mubr.bf16.gmra.mxu0 %v3798
        %v3942 = vpop.f32.mrf.mxu0
        %v3943 = vadd.f32 0.0, %v3942
        %v3944 = vpop.f32.mrf.mxu0
        %v3945 = vpop.f32.mrf.mxu0
        %v3946 = vadd.f32 0.0, %v3945
        %v3947 = vpop.f32.mrf.mxu0
        %3948 = vmatprep.mubr.bf16.mxu0 0
        %3949 = vmatmul.mubr.bf16.gmra.mxu0 %v3800
        %v3950 = vpop.f32.mrf.mxu0
        %v3951 = vadd.f32 0.0, %v3950
        %v3952 = vpop.f32.mrf.mxu0
        %v3953 = vpop.f32.mrf.mxu0
        %v3954 = vadd.f32 0.0, %v3953
        %v3955 = vpop.f32.mrf.mxu0
        %3956 = vmatprep.mubr.bf16.mxu0 0
        %3957 = vmatmul.mubr.bf16.gmra.mxu0 %v3802
        %v3958 = vpop.f32.mrf.mxu0
        %v3959 = vadd.f32 0.0, %v3958
        %v3960 = vpop.f32.mrf.mxu0
        %v3961 = vpop.f32.mrf.mxu0
        %v3962 = vadd.f32 0.0, %v3961
        %v3963 = vpop.f32.mrf.mxu0
        %3964 = vdwg.mxu0
        %v3965 = vadd.f32 %v3682, %v3895
        %v3966 = vadd.f32 %v3683, %v3898
        %v3967 = vadd.f32 %v3684, %v3903
        %v3968 = vadd.f32 %v3685, %v3906
        %v3969 = vadd.f32 %v3686, %v3911
        %v3970 = vadd.f32 %v3687, %v3914
        %v3971 = vadd.f32 %v3688, %v3919
        %v3972 = vadd.f32 %v3689, %v3922
        %v3973 = vadd.f32 %v3690, %v3927
        %v3974 = vadd.f32 %v3691, %v3930
        %v3975 = vadd.f32 %v3692, %v3935
        %v3976 = vadd.f32 %v3693, %v3938
        %v3977 = vadd.f32 %v3694, %v3943
        %v3978 = vadd.f32 %v3695, %v3946
        %v3979 = vadd.f32 %v3696, %v3951
        %v3980 = vadd.f32 %v3697, %v3954
        %v3981 = vadd.f32 %v3698, %v3959
        %v3982 = vadd.f32 %v3699, %v3962
        %v3983 = vld [vmem:[#allocation2 + $0x58] sm:$0x7]
        %s3984 = scalar_lea.vmem [#allocation6], 448
        %v3985 = vld [vmem:[%s3984] sm:$0xf]
        %v3986 = vld [vmem:[%s3984 + $0x4] sm:$0xf]
        %v3987 = vld [vmem:[%s3984 + $0x8] sm:$0xf]
        %v3988 = vld [vmem:[%s3984 + $0xc] sm:$0xf]
        %v3989 = vld [vmem:[%s3984 + $0x10] sm:$0xf]
        %v3990 = vld [vmem:[%s3984 + $0x14] sm:$0xf]
        %v3991 = vld [vmem:[%s3984 + $0x18] sm:$0xf]
        %v3992 = vld [vmem:[%s3984 + $0x1c] sm:$0xf]
        %v3993 = vld [vmem:[%s3984 + $0x20] sm:$0xf]
        %v3994 = vld [vmem:[%s3984 + $0x24] sm:$0xf]
        %v3995 = vld [vmem:[%s3984 + $0x28] sm:$0xf]
        %v3996 = vld [vmem:[%s3984 + $0x2c] sm:$0xf]
        %v3997 = vld [vmem:[%s3984 + $0x30] sm:$0xf]
        %v3998 = vld [vmem:[%s3984 + $0x34] sm:$0xf]
        %v3999 = vld [vmem:[%s3984 + $0x38] sm:$0xf]
        %v4000 = vld [vmem:[%s3984 + $0x3c] sm:$0xf]
        %v4002 = vunpack.c.l.b16 %v3983
        %v4003 = vpack.c.b16 %v4002, %v4002
        %vm4004 = vsmask.f32 5376
        %v4006 = vshrl.u32 %v3774, 16
        %v4008 = vrot.slane %v4006, 2
        %v4009 = vshll.u32 %v3774, 16
        %v4011 = vrot.slane %v4009, 3
        %v4012 = vor.u32 %v4008, %v4011
        %v4014 = vshrl.u32 %v3775, 16
        %v4016 = vrot.slane %v4014, 2
        %v4017 = vshll.u32 %v3775, 16
        %v4019 = vrot.slane %v4017, 3
        %v4020 = vor.u32 %v4016, %v4019
        %v4021 = vsel %vm4004, %v4012, %v4020
        %v4023 = vshrl.u32 %v3776, 16
        %v4025 = vrot.slane %v4023, 2
        %v4026 = vshll.u32 %v3776, 16
        %v4028 = vrot.slane %v4026, 3
        %v4029 = vor.u32 %v4025, %v4028
        %v4030 = vsel %vm4004, %v4020, %v4029
        %v4032 = vshrl.u32 %v3777, 16
        %v4034 = vrot.slane %v4032, 2
        %v4035 = vshll.u32 %v3777, 16
        %v4037 = vrot.slane %v4035, 3
        %v4038 = vor.u32 %v4034, %v4037
        %v4039 = vsel %vm4004, %v4029, %v4038
        %v4041 = vshrl.u32 %v3778, 16
        %v4043 = vrot.slane %v4041, 2
        %v4044 = vshll.u32 %v3778, 16
        %v4046 = vrot.slane %v4044, 3
        %v4047 = vor.u32 %v4043, %v4046
        %v4048 = vsel %vm4004, %v4038, %v4047
        %v4050 = vshrl.u32 %v3779, 16
        %v4052 = vrot.slane %v4050, 2
        %v4053 = vshll.u32 %v3779, 16
        %v4055 = vrot.slane %v4053, 3
        %v4056 = vor.u32 %v4052, %v4055
        %v4057 = vsel %vm4004, %v4047, %v4056
        %v4059 = vshrl.u32 %v3780, 16
        %v4061 = vrot.slane %v4059, 2
        %v4062 = vshll.u32 %v3780, 16
        %v4064 = vrot.slane %v4062, 3
        %v4065 = vor.u32 %v4061, %v4064
        %v4066 = vsel %vm4004, %v4056, %v4065
        %v4068 = vshrl.u32 %v3781, 16
        %v4070 = vrot.slane %v4068, 2
        %v4071 = vshll.u32 %v3781, 16
        %v4073 = vrot.slane %v4071, 3
        %v4074 = vor.u32 %v4070, %v4073
        %v4075 = vsel %vm4004, %v4065, %v4074
        %v4077 = vshrl.u32 %v3782, 16
        %v4079 = vrot.slane %v4077, 2
        %v4080 = vshll.u32 %v3782, 16
        %v4082 = vrot.slane %v4080, 3
        %v4083 = vor.u32 %v4079, %v4082
        %v4084 = vsel %vm4004, %v4074, %v4083
        %v4086 = vshrl.u32 %v4003, 16
        %v4088 = vrot.slane %v4086, 2
        %v4089 = vshll.u32 %v4003, 16
        %v4091 = vrot.slane %v4089, 3
        %v4092 = vor.u32 %v4088, %v4091
        %v4093 = vsel %vm4004, %v4083, %v4092
        %v4119 = vunpack.c.l.b16 %v3985
        %v4120 = vunpack.c.l.b16 %v3986
        %v4121 = vunpack.c.l.b16 %v3987
        %v4122 = vunpack.c.l.b16 %v3988
        %v4123 = vunpack.c.l.b16 %v3989
        %v4124 = vunpack.c.l.b16 %v3990
        %v4125 = vunpack.c.l.b16 %v3991
        %v4126 = vunpack.c.l.b16 %v3992
        %v4127 = vunpack.c.l.b16 %v3993
        %v4128 = vunpack.c.l.b16 %v3994
        %v4129 = vunpack.c.l.b16 %v3995
        %v4130 = vunpack.c.l.b16 %v3996
        %v4131 = vunpack.c.l.b16 %v3997
        %v4132 = vunpack.c.l.b16 %v3998
        %v4133 = vunpack.c.l.b16 %v3999
        %v4134 = vunpack.c.l.b16 %v4000
        %v4135 = vpack.c.b16 %v4120, %v4119
        %v4136 = vpack.c.b16 %v4122, %v4121
        %v4137 = vpack.c.b16 %v4124, %v4123
        %v4138 = vpack.c.b16 %v4126, %v4125
        %v4139 = vpack.c.b16 %v4128, %v4127
        %v4140 = vpack.c.b16 %v4130, %v4129
        %v4141 = vpack.c.b16 %v4132, %v4131
        %v4142 = vpack.c.b16 %v4134, %v4133
        %4151 = vmatprep.subr.bf16.mxu0 0
        %4152 = vmatpush1.bf16.msra.mxu0 %v4142
        %4153 = vmatprep.subr.bf16.mxu0 0
        %4154 = vmatpush1.bf16.msra.mxu0 %v4141
        %4155 = vmatprep.subr.bf16.mxu0 0
        %4156 = vmatpush1.bf16.msra.mxu0 %v4140
        %4157 = vmatprep.subr.bf16.mxu0 0
        %4158 = vmatpush1.bf16.msra.mxu0 %v4139
        %4159 = vmatprep.subr.bf16.mxu0 0
        %4160 = vmatpush1.bf16.msra.mxu0 %v4138
        %4161 = vmatprep.subr.bf16.mxu0 0
        %4162 = vmatpush1.bf16.msra.mxu0 %v4137
        %4163 = vmatprep.subr.bf16.mxu0 0
        %4164 = vmatpush1.bf16.msra.mxu0 %v4136
        %4165 = vmatprep.subr.bf16.mxu0 0
        %4166 = vmatpush1.bf16.msra.mxu0 %v4135
        %4167 = vmatprep.subr.bf16.mxu0 0
        %4168 = vmatpush2.bf16.msra.mxu0 0
        %4169 = vmatprep.subr.bf16.mxu0 0
        %4170 = vmatpush2.bf16.msra.mxu0 0
        %4171 = vmatprep.subr.bf16.mxu0 0
        %4172 = vmatpush2.bf16.msra.mxu0 0
        %4173 = vmatprep.subr.bf16.mxu0 0
        %4174 = vmatpush2.bf16.msra.mxu0 0
        %4175 = vmatprep.subr.bf16.mxu0 0
        %4176 = vmatpush2.bf16.msra.mxu0 0
        %4177 = vmatprep.subr.bf16.mxu0 0
        %4178 = vmatpush2.bf16.msra.mxu0 0
        %4179 = vmatprep.subr.bf16.mxu0 0
        %4180 = vmatpush2.bf16.msra.mxu0 0
        %4181 = vmatprep.subr.bf16.mxu0 0
        %4182 = vmatpush2.bf16.msra.mxu0 0
        %4183 = vmatprep.mubr.bf16.mxu0 0
        %4184 = vmatmul.mubr.bf16.gmra.mxu0 %v4021
        %v4185 = vpop.f32.mrf.mxu0
        %v4186 = vadd.f32 0.0, %v4185
        %v4187 = vpop.f32.mrf.mxu0
        %v4188 = vpop.f32.mrf.mxu0
        %v4189 = vadd.f32 0.0, %v4188
        %v4190 = vpop.f32.mrf.mxu0
        %4191 = vmatprep.mubr.bf16.mxu0 0
        %4192 = vmatmul.mubr.bf16.gmra.mxu0 %v4030
        %v4193 = vpop.f32.mrf.mxu0
        %v4194 = vadd.f32 0.0, %v4193
        %v4195 = vpop.f32.mrf.mxu0
        %v4196 = vpop.f32.mrf.mxu0
        %v4197 = vadd.f32 0.0, %v4196
        %v4198 = vpop.f32.mrf.mxu0
        %4199 = vmatprep.mubr.bf16.mxu0 0
        %4200 = vmatmul.mubr.bf16.gmra.mxu0 %v4039
        %v4201 = vpop.f32.mrf.mxu0
        %v4202 = vadd.f32 0.0, %v4201
        %v4203 = vpop.f32.mrf.mxu0
        %v4204 = vpop.f32.mrf.mxu0
        %v4205 = vadd.f32 0.0, %v4204
        %v4206 = vpop.f32.mrf.mxu0
        %4207 = vmatprep.mubr.bf16.mxu0 0
        %4208 = vmatmul.mubr.bf16.gmra.mxu0 %v4048
        %v4209 = vpop.f32.mrf.mxu0
        %v4210 = vadd.f32 0.0, %v4209
        %v4211 = vpop.f32.mrf.mxu0
        %v4212 = vpop.f32.mrf.mxu0
        %v4213 = vadd.f32 0.0, %v4212
        %v4214 = vpop.f32.mrf.mxu0
        %4215 = vmatprep.mubr.bf16.mxu0 0
        %4216 = vmatmul.mubr.bf16.gmra.mxu0 %v4057
        %v4217 = vpop.f32.mrf.mxu0
        %v4218 = vadd.f32 0.0, %v4217
        %v4219 = vpop.f32.mrf.mxu0
        %v4220 = vpop.f32.mrf.mxu0
        %v4221 = vadd.f32 0.0, %v4220
        %v4222 = vpop.f32.mrf.mxu0
        %4223 = vmatprep.mubr.bf16.mxu0 0
        %4224 = vmatmul.mubr.bf16.gmra.mxu0 %v4066
        %v4225 = vpop.f32.mrf.mxu0
        %v4226 = vadd.f32 0.0, %v4225
        %v4227 = vpop.f32.mrf.mxu0
        %v4228 = vpop.f32.mrf.mxu0
        %v4229 = vadd.f32 0.0, %v4228
        %v4230 = vpop.f32.mrf.mxu0
        %4231 = vmatprep.mubr.bf16.mxu0 0
        %4232 = vmatmul.mubr.bf16.gmra.mxu0 %v4075
        %v4233 = vpop.f32.mrf.mxu0
        %v4234 = vadd.f32 0.0, %v4233
        %v4235 = vpop.f32.mrf.mxu0
        %v4236 = vpop.f32.mrf.mxu0
        %v4237 = vadd.f32 0.0, %v4236
        %v4238 = vpop.f32.mrf.mxu0
        %4239 = vmatprep.mubr.bf16.mxu0 0
        %4240 = vmatmul.mubr.bf16.gmra.mxu0 %v4084
        %v4241 = vpop.f32.mrf.mxu0
        %v4242 = vadd.f32 0.0, %v4241
        %v4243 = vpop.f32.mrf.mxu0
        %v4244 = vpop.f32.mrf.mxu0
        %v4245 = vadd.f32 0.0, %v4244
        %v4246 = vpop.f32.mrf.mxu0
        %4247 = vmatprep.mubr.bf16.mxu0 0
        %4248 = vmatmul.mubr.bf16.gmra.mxu0 %v4093
        %v4249 = vpop.f32.mrf.mxu0
        %v4250 = vadd.f32 0.0, %v4249
        %v4251 = vpop.f32.mrf.mxu0
        %v4252 = vpop.f32.mrf.mxu0
        %v4253 = vadd.f32 0.0, %v4252
        %v4254 = vpop.f32.mrf.mxu0
        %4255 = vdwg.mxu0
        %v4256 = vadd.f32 %v3965, %v4186
        %v4257 = vadd.f32 %v3966, %v4189
        %v4258 = vadd.f32 %v3967, %v4194
        %v4259 = vadd.f32 %v3968, %v4197
        %v4260 = vadd.f32 %v3969, %v4202
        %v4261 = vadd.f32 %v3970, %v4205
        %v4262 = vadd.f32 %v3971, %v4210
        %v4263 = vadd.f32 %v3972, %v4213
        %v4264 = vadd.f32 %v3973, %v4218
        %v4265 = vadd.f32 %v3974, %v4221
        %v4266 = vadd.f32 %v3975, %v4226
        %v4267 = vadd.f32 %v3976, %v4229
        %v4268 = vadd.f32 %v3977, %v4234
        %v4269 = vadd.f32 %v3978, %v4237
        %v4270 = vadd.f32 %v3979, %v4242
        %v4271 = vadd.f32 %v3980, %v4245
        %v4272 = vadd.f32 %v3981, %v4250
        %v4273 = vadd.f32 %v3982, %v4253
        %v4274 = vld [vmem:[#allocation2 + $0x10] sm:$0x8]
        %s4275 = scalar_lea.vmem [#allocation6], 512
        %v4276 = vld [vmem:[%s4275] sm:$0xf]
        %v4277 = vld [vmem:[%s4275 + $0x4] sm:$0xf]
        %v4278 = vld [vmem:[%s4275 + $0x8] sm:$0xf]
        %v4279 = vld [vmem:[%s4275 + $0xc] sm:$0xf]
        %v4280 = vld [vmem:[%s4275 + $0x10] sm:$0xf]
        %v4281 = vld [vmem:[%s4275 + $0x14] sm:$0xf]
        %v4282 = vld [vmem:[%s4275 + $0x18] sm:$0xf]
        %v4283 = vld [vmem:[%s4275 + $0x1c] sm:$0xf]
        %v4284 = vld [vmem:[%s4275 + $0x20] sm:$0xf]
        %v4285 = vld [vmem:[%s4275 + $0x24] sm:$0xf]
        %v4286 = vld [vmem:[%s4275 + $0x28] sm:$0xf]
        %v4287 = vld [vmem:[%s4275 + $0x2c] sm:$0xf]
        %v4288 = vld [vmem:[%s4275 + $0x30] sm:$0xf]
        %v4289 = vld [vmem:[%s4275 + $0x34] sm:$0xf]
        %v4290 = vld [vmem:[%s4275 + $0x38] sm:$0xf]
        %v4291 = vld [vmem:[%s4275 + $0x3c] sm:$0xf]
        %v4293 = vunpack.c.l.b16 %v4274
        %v4294 = vpack.c.b16 %v3756, %v4293
        %vm4295 = vcmask 1044480
        %v4296 = vrot.slane %v4294, 3
        %v4297 = vrot.slane %v3775, 3
        %v4298 = vsel %vm4295, %v4296, %v4297
        %v4299 = vrot.slane %v3776, 3
        %v4300 = vsel %vm4295, %v4297, %v4299
        %v4301 = vrot.slane %v3777, 3
        %v4302 = vsel %vm4295, %v4299, %v4301
        %v4303 = vrot.slane %v3778, 3
        %v4304 = vsel %vm4295, %v4301, %v4303
        %v4305 = vrot.slane %v3779, 3
        %v4306 = vsel %vm4295, %v4303, %v4305
        %v4307 = vrot.slane %v3780, 3
        %v4308 = vsel %vm4295, %v4305, %v4307
        %v4309 = vrot.slane %v3781, 3
        %v4310 = vsel %vm4295, %v4307, %v4309
        %v4311 = vrot.slane %v3782, 3
        %v4312 = vsel %vm4295, %v4309, %v4311
        %v4313 = vrot.slane %v4003, 3
        %v4314 = vsel %vm4295, %v4311, %v4313
        %v4340 = vunpack.c.l.b16 %v4276
        %v4341 = vunpack.c.l.b16 %v4277
        %v4342 = vunpack.c.l.b16 %v4278
        %v4343 = vunpack.c.l.b16 %v4279
        %v4344 = vunpack.c.l.b16 %v4280
        %v4345 = vunpack.c.l.b16 %v4281
        %v4346 = vunpack.c.l.b16 %v4282
        %v4347 = vunpack.c.l.b16 %v4283
        %v4348 = vunpack.c.l.b16 %v4284
        %v4349 = vunpack.c.l.b16 %v4285
        %v4350 = vunpack.c.l.b16 %v4286
        %v4351 = vunpack.c.l.b16 %v4287
        %v4352 = vunpack.c.l.b16 %v4288
        %v4353 = vunpack.c.l.b16 %v4289
        %v4354 = vunpack.c.l.b16 %v4290
        %v4355 = vunpack.c.l.b16 %v4291
        %v4356 = vpack.c.b16 %v4341, %v4340
        %v4357 = vpack.c.b16 %v4343, %v4342
        %v4358 = vpack.c.b16 %v4345, %v4344
        %v4359 = vpack.c.b16 %v4347, %v4346
        %v4360 = vpack.c.b16 %v4349, %v4348
        %v4361 = vpack.c.b16 %v4351, %v4350
        %v4362 = vpack.c.b16 %v4353, %v4352
        %v4363 = vpack.c.b16 %v4355, %v4354
        %4372 = vmatprep.subr.bf16.mxu0 0
        %4373 = vmatpush1.bf16.msra.mxu0 %v4363
        %4374 = vmatprep.subr.bf16.mxu0 0
        %4375 = vmatpush1.bf16.msra.mxu0 %v4362
        %4376 = vmatprep.subr.bf16.mxu0 0
        %4377 = vmatpush1.bf16.msra.mxu0 %v4361
        %4378 = vmatprep.subr.bf16.mxu0 0
        %4379 = vmatpush1.bf16.msra.mxu0 %v4360
        %4380 = vmatprep.subr.bf16.mxu0 0
        %4381 = vmatpush1.bf16.msra.mxu0 %v4359
        %4382 = vmatprep.subr.bf16.mxu0 0
        %4383 = vmatpush1.bf16.msra.mxu0 %v4358
        %4384 = vmatprep.subr.bf16.mxu0 0
        %4385 = vmatpush1.bf16.msra.mxu0 %v4357
        %4386 = vmatprep.subr.bf16.mxu0 0
        %4387 = vmatpush1.bf16.msra.mxu0 %v4356
        %4388 = vmatprep.subr.bf16.mxu0 0
        %4389 = vmatpush2.bf16.msra.mxu0 0
        %4390 = vmatprep.subr.bf16.mxu0 0
        %4391 = vmatpush2.bf16.msra.mxu0 0
        %4392 = vmatprep.subr.bf16.mxu0 0
        %4393 = vmatpush2.bf16.msra.mxu0 0
        %4394 = vmatprep.subr.bf16.mxu0 0
        %4395 = vmatpush2.bf16.msra.mxu0 0
        %4396 = vmatprep.subr.bf16.mxu0 0
        %4397 = vmatpush2.bf16.msra.mxu0 0
        %4398 = vmatprep.subr.bf16.mxu0 0
        %4399 = vmatpush2.bf16.msra.mxu0 0
        %4400 = vmatprep.subr.bf16.mxu0 0
        %4401 = vmatpush2.bf16.msra.mxu0 0
        %4402 = vmatprep.subr.bf16.mxu0 0
        %4403 = vmatpush2.bf16.msra.mxu0 0
        %4404 = vmatprep.mubr.bf16.mxu0 0
        %4405 = vmatmul.mubr.bf16.gmra.mxu0 %v4298
        %v4406 = vpop.f32.mrf.mxu0
        %v4407 = vadd.f32 0.0, %v4406
        %v4408 = vpop.f32.mrf.mxu0
        %v4409 = vpop.f32.mrf.mxu0
        %v4410 = vadd.f32 0.0, %v4409
        %v4411 = vpop.f32.mrf.mxu0
        %4412 = vmatprep.mubr.bf16.mxu0 0
        %4413 = vmatmul.mubr.bf16.gmra.mxu0 %v4300
        %v4414 = vpop.f32.mrf.mxu0
        %v4415 = vadd.f32 0.0, %v4414
        %v4416 = vpop.f32.mrf.mxu0
        %v4417 = vpop.f32.mrf.mxu0
        %v4418 = vadd.f32 0.0, %v4417
        %v4419 = vpop.f32.mrf.mxu0
        %4420 = vmatprep.mubr.bf16.mxu0 0
        %4421 = vmatmul.mubr.bf16.gmra.mxu0 %v4302
        %v4422 = vpop.f32.mrf.mxu0
        %v4423 = vadd.f32 0.0, %v4422
        %v4424 = vpop.f32.mrf.mxu0
        %v4425 = vpop.f32.mrf.mxu0
        %v4426 = vadd.f32 0.0, %v4425
        %v4427 = vpop.f32.mrf.mxu0
        %4428 = vmatprep.mubr.bf16.mxu0 0
        %4429 = vmatmul.mubr.bf16.gmra.mxu0 %v4304
        %v4430 = vpop.f32.mrf.mxu0
        %v4431 = vadd.f32 0.0, %v4430
        %v4432 = vpop.f32.mrf.mxu0
        %v4433 = vpop.f32.mrf.mxu0
        %v4434 = vadd.f32 0.0, %v4433
        %v4435 = vpop.f32.mrf.mxu0
        %4436 = vmatprep.mubr.bf16.mxu0 0
        %4437 = vmatmul.mubr.bf16.gmra.mxu0 %v4306
        %v4438 = vpop.f32.mrf.mxu0
        %v4439 = vadd.f32 0.0, %v4438
        %v4440 = vpop.f32.mrf.mxu0
        %v4441 = vpop.f32.mrf.mxu0
        %v4442 = vadd.f32 0.0, %v4441
        %v4443 = vpop.f32.mrf.mxu0
        %4444 = vmatprep.mubr.bf16.mxu0 0
        %4445 = vmatmul.mubr.bf16.gmra.mxu0 %v4308
        %v4446 = vpop.f32.mrf.mxu0
        %v4447 = vadd.f32 0.0, %v4446
        %v4448 = vpop.f32.mrf.mxu0
        %v4449 = vpop.f32.mrf.mxu0
        %v4450 = vadd.f32 0.0, %v4449
        %v4451 = vpop.f32.mrf.mxu0
        %4452 = vmatprep.mubr.bf16.mxu0 0
        %4453 = vmatmul.mubr.bf16.gmra.mxu0 %v4310
        %v4454 = vpop.f32.mrf.mxu0
        %v4455 = vadd.f32 0.0, %v4454
        %v4456 = vpop.f32.mrf.mxu0
        %v4457 = vpop.f32.mrf.mxu0
        %v4458 = vadd.f32 0.0, %v4457
        %v4459 = vpop.f32.mrf.mxu0
        %4460 = vmatprep.mubr.bf16.mxu0 0
        %4461 = vmatmul.mubr.bf16.gmra.mxu0 %v4312
        %v4462 = vpop.f32.mrf.mxu0
        %v4463 = vadd.f32 0.0, %v4462
        %v4464 = vpop.f32.mrf.mxu0
        %v4465 = vpop.f32.mrf.mxu0
        %v4466 = vadd.f32 0.0, %v4465
        %v4467 = vpop.f32.mrf.mxu0
        %4468 = vmatprep.mubr.bf16.mxu0 0
        %4469 = vmatmul.mubr.bf16.gmra.mxu0 %v4314
        %v4470 = vpop.f32.mrf.mxu0
        %v4471 = vadd.f32 0.0, %v4470
        %v4472 = vpop.f32.mrf.mxu0
        %v4473 = vpop.f32.mrf.mxu0
        %v4474 = vadd.f32 0.0, %v4473
        %v4475 = vpop.f32.mrf.mxu0
        %4476 = vdwg.mxu0
        %v4477 = vadd.f32 %v4256, %v4407
        %v4478 = vadd.f32 %v4257, %v4410
        %v4479 = vadd.f32 %v4258, %v4415
        %v4480 = vadd.f32 %v4259, %v4418
        %v4481 = vadd.f32 %v4260, %v4423
        %v4482 = vadd.f32 %v4261, %v4426
        %v4483 = vadd.f32 %v4262, %v4431
        %v4484 = vadd.f32 %v4263, %v4434
        %v4485 = vadd.f32 %v4264, %v4439
        %v4486 = vadd.f32 %v4265, %v4442
        %v4487 = vadd.f32 %v4266, %v4447
        %v4488 = vadd.f32 %v4267, %v4450
        %v4489 = vadd.f32 %v4268, %v4455
        %v4490 = vadd.f32 %v4269, %v4458
        %v4491 = vadd.f32 %v4270, %v4463
        %v4492 = vadd.f32 %v4271, %v4466
        %v4493 = vadd.f32 %v4272, %v4471
        %v4494 = vadd.f32 %v4273, %v4474
        %v4495 = vld [vmem:[%s5] sm:$0x1]
        %v4497 = vlaneseq
        %v4498 = vshrl.u32 %v4497, 7
        %v4499 = vsub.s32 0, %v4498
        %v4500 = vrot.slane %v4495, %v4499
        %v4502 = vmul.f32 %v4477, %v4500
        %v4503 = vmul.f32 %v4478, %v4500
        %v4504 = vmul.f32 %v4479, %v4500
        %v4505 = vmul.f32 %v4480, %v4500
        %v4506 = vmul.f32 %v4481, %v4500
        %v4507 = vmul.f32 %v4482, %v4500
        %v4508 = vmul.f32 %v4483, %v4500
        %v4509 = vmul.f32 %v4484, %v4500
        %v4510 = vmul.f32 %v4485, %v4500
        %v4511 = vmul.f32 %v4486, %v4500
        %v4512 = vmul.f32 %v4487, %v4500
        %v4513 = vmul.f32 %v4488, %v4500
        %v4514 = vmul.f32 %v4489, %v4500
        %v4515 = vmul.f32 %v4490, %v4500
        %v4516 = vmul.f32 %v4491, %v4500
        %v4517 = vmul.f32 %v4492, %v4500
        %v4518 = vmul.f32 %v4493, %v4500
        %v4519 = vmul.f32 %v4494, %v4500
        %v4520 = vld [vmem:[%s6] sm:$0x1]
        %v4522 = vlaneseq
        %v4523 = vshrl.u32 %v4522, 7
        %v4524 = vsub.s32 0, %v4523
        %v4525 = vrot.slane %v4520, %v4524
        %v4527 = vadd.f32 %v4502, %v4525
        %v4528 = vadd.f32 %v4503, %v4525
        %v4529 = vadd.f32 %v4504, %v4525
        %v4530 = vadd.f32 %v4505, %v4525
        %v4531 = vadd.f32 %v4506, %v4525
        %v4532 = vadd.f32 %v4507, %v4525
        %v4533 = vadd.f32 %v4508, %v4525
        %v4534 = vadd.f32 %v4509, %v4525
        %v4535 = vadd.f32 %v4510, %v4525
        %v4536 = vadd.f32 %v4511, %v4525
        %v4537 = vadd.f32 %v4512, %v4525
        %v4538 = vadd.f32 %v4513, %v4525
        %v4539 = vadd.f32 %v4514, %v4525
        %v4540 = vadd.f32 %v4515, %v4525
        %v4541 = vadd.f32 %v4516, %v4525
        %v4542 = vadd.f32 %v4517, %v4525
        %v4543 = vadd.f32 %v4518, %v4525
        %v4544 = vadd.f32 %v4519, %v4525
        %v4545 = vmax.f32 %v4527, 0.0
        %v4546 = vmax.f32 %v4528, 0.0
        %v4547 = vmax.f32 %v4529, 0.0
        %v4548 = vmax.f32 %v4530, 0.0
        %v4549 = vmax.f32 %v4531, 0.0
        %v4550 = vmax.f32 %v4532, 0.0
        %v4551 = vmax.f32 %v4533, 0.0
        %v4552 = vmax.f32 %v4534, 0.0
        %v4553 = vmax.f32 %v4535, 0.0
        %v4554 = vmax.f32 %v4536, 0.0
        %v4555 = vmax.f32 %v4537, 0.0
        %v4556 = vmax.f32 %v4538, 0.0
        %v4557 = vmax.f32 %v4539, 0.0
        %v4558 = vmax.f32 %v4540, 0.0
        %v4559 = vmax.f32 %v4541, 0.0
        %v4560 = vmax.f32 %v4542, 0.0
        %v4561 = vmax.f32 %v4543, 0.0
        %v4562 = vmax.f32 %v4544, 0.0
        %v4563 = vpack.c.bf16 %v4546, %v4545
        %v4564 = vpack.c.bf16 %v4548, %v4547
        %v4565 = vpack.c.bf16 %v4550, %v4549
        %v4566 = vpack.c.bf16 %v4552, %v4551
        %v4567 = vpack.c.bf16 %v4554, %v4553
        %v4568 = vpack.c.bf16 %v4556, %v4555
        %v4569 = vpack.c.bf16 %v4558, %v4557
        %v4570 = vpack.c.bf16 %v4560, %v4559
        %v4571 = vpack.c.bf16 %v4562, %v4561
        %v4581 = vcombine.high %v4563, %v4563
        %v4583 = vunpack.c.l.s4 1966171168
        %v4584 = vunpack.c.0.s8 %v4583
        %v4585 = vlaneseq
        %v4586 = vshrl.u32 %v4585, 7
        %v4587 = vsub.s32 %v4584, %v4586
        %v4588 = vrot.slane %v4563, %v4587
        %v4590 = vunpack.c.l.s4 1966171168
        %v4591 = vunpack.c.0.s8 %v4590
        %v4592 = vlaneseq
        %v4593 = vshrl.u32 %v4592, 7
        %v4594 = vsub.s32 %v4591, %v4593
        %v4595 = vrot.slane %v4581, %v4594
        %v4596 = vcombine.high %v4588, %v4588
        %v4597 = vcombine.high %v4595, %v4595
        %v4599 = vunpack.c.l.s4 1966171168
        %v4600 = vunpack.c.0.s8 %v4599
        %v4601 = vlaneseq
        %v4602 = vshrl.u32 %v4601, 7
        %v4603 = vsub.s32 %v4600, %v4602
        %v4604 = vrot.slane %v4588, %v4603
        %v4606 = vunpack.c.l.s4 1966171168
        %v4607 = vunpack.c.0.s8 %v4606
        %v4608 = vlaneseq
        %v4609 = vshrl.u32 %v4608, 7
        %v4610 = vsub.s32 %v4607, %v4609
        %v4611 = vrot.slane %v4595, %v4610
        %v4613 = vunpack.c.l.s4 1966171168
        %v4614 = vunpack.c.0.s8 %v4613
        %v4615 = vlaneseq
        %v4616 = vshrl.u32 %v4615, 7
        %v4617 = vsub.s32 %v4614, %v4616
        %v4618 = vrot.slane %v4596, %v4617
        %v4620 = vunpack.c.l.s4 1966171168
        %v4621 = vunpack.c.0.s8 %v4620
        %v4622 = vlaneseq
        %v4623 = vshrl.u32 %v4622, 7
        %v4624 = vsub.s32 %v4621, %v4623
        %v4625 = vrot.slane %v4597, %v4624
        %v4626 = vcombine.high %v4604, %v4604
        %v4627 = vcombine.high %v4611, %v4611
        %v4628 = vcombine.high %v4618, %v4618
        %v4629 = vcombine.high %v4625, %v4625
        %v4630 = vcombine.high %v4564, %v4564
        %v4632 = vunpack.c.l.s4 1966171168
        %v4633 = vunpack.c.0.s8 %v4632
        %v4634 = vlaneseq
        %v4635 = vshrl.u32 %v4634, 7
        %v4636 = vsub.s32 %v4633, %v4635
        %v4637 = vrot.slane %v4564, %v4636
        %v4639 = vunpack.c.l.s4 1966171168
        %v4640 = vunpack.c.0.s8 %v4639
        %v4641 = vlaneseq
        %v4642 = vshrl.u32 %v4641, 7
        %v4643 = vsub.s32 %v4640, %v4642
        %v4644 = vrot.slane %v4630, %v4643
        %v4645 = vcombine.high %v4637, %v4637
        %v4646 = vcombine.high %v4644, %v4644
        %v4648 = vunpack.c.l.s4 1966171168
        %v4649 = vunpack.c.0.s8 %v4648
        %v4650 = vlaneseq
        %v4651 = vshrl.u32 %v4650, 7
        %v4652 = vsub.s32 %v4649, %v4651
        %v4653 = vrot.slane %v4637, %v4652
        %v4655 = vunpack.c.l.s4 1966171168
        %v4656 = vunpack.c.0.s8 %v4655
        %v4657 = vlaneseq
        %v4658 = vshrl.u32 %v4657, 7
        %v4659 = vsub.s32 %v4656, %v4658
        %v4660 = vrot.slane %v4644, %v4659
        %v4662 = vunpack.c.l.s4 1966171168
        %v4663 = vunpack.c.0.s8 %v4662
        %v4664 = vlaneseq
        %v4665 = vshrl.u32 %v4664, 7
        %v4666 = vsub.s32 %v4663, %v4665
        %v4667 = vrot.slane %v4645, %v4666
        %v4669 = vunpack.c.l.s4 1966171168
        %v4670 = vunpack.c.0.s8 %v4669
        %v4671 = vlaneseq
        %v4672 = vshrl.u32 %v4671, 7
        %v4673 = vsub.s32 %v4670, %v4672
        %v4674 = vrot.slane %v4646, %v4673
        %v4675 = vcombine.high %v4653, %v4653
        %v4676 = vcombine.high %v4660, %v4660
        %v4677 = vcombine.high %v4667, %v4667
        %v4678 = vcombine.high %v4674, %v4674
        %v4679 = vcombine.high %v4565, %v4565
        %v4681 = vunpack.c.l.s4 1966171168
        %v4682 = vunpack.c.0.s8 %v4681
        %v4683 = vlaneseq
        %v4684 = vshrl.u32 %v4683, 7
        %v4685 = vsub.s32 %v4682, %v4684
        %v4686 = vrot.slane %v4565, %v4685
        %v4688 = vunpack.c.l.s4 1966171168
        %v4689 = vunpack.c.0.s8 %v4688
        %v4690 = vlaneseq
        %v4691 = vshrl.u32 %v4690, 7
        %v4692 = vsub.s32 %v4689, %v4691
        %v4693 = vrot.slane %v4679, %v4692
        %v4694 = vcombine.high %v4686, %v4686
        %v4695 = vcombine.high %v4693, %v4693
        %v4697 = vunpack.c.l.s4 1966171168
        %v4698 = vunpack.c.0.s8 %v4697
        %v4699 = vlaneseq
        %v4700 = vshrl.u32 %v4699, 7
        %v4701 = vsub.s32 %v4698, %v4700
        %v4702 = vrot.slane %v4686, %v4701
        %v4704 = vunpack.c.l.s4 1966171168
        %v4705 = vunpack.c.0.s8 %v4704
        %v4706 = vlaneseq
        %v4707 = vshrl.u32 %v4706, 7
        %v4708 = vsub.s32 %v4705, %v4707
        %v4709 = vrot.slane %v4693, %v4708
        %v4711 = vunpack.c.l.s4 1966171168
        %v4712 = vunpack.c.0.s8 %v4711
        %v4713 = vlaneseq
        %v4714 = vshrl.u32 %v4713, 7
        %v4715 = vsub.s32 %v4712, %v4714
        %v4716 = vrot.slane %v4694, %v4715
        %v4718 = vunpack.c.l.s4 1966171168
        %v4719 = vunpack.c.0.s8 %v4718
        %v4720 = vlaneseq
        %v4721 = vshrl.u32 %v4720, 7
        %v4722 = vsub.s32 %v4719, %v4721
        %v4723 = vrot.slane %v4695, %v4722
        %v4724 = vcombine.high %v4702, %v4702
        %v4725 = vcombine.high %v4709, %v4709
        %v4726 = vcombine.high %v4716, %v4716
        %v4727 = vcombine.high %v4723, %v4723
        %v4728 = vcombine.high %v4566, %v4566
        %v4730 = vunpack.c.l.s4 1966171168
        %v4731 = vunpack.c.0.s8 %v4730
        %v4732 = vlaneseq
        %v4733 = vshrl.u32 %v4732, 7
        %v4734 = vsub.s32 %v4731, %v4733
        %v4735 = vrot.slane %v4566, %v4734
        %v4737 = vunpack.c.l.s4 1966171168
        %v4738 = vunpack.c.0.s8 %v4737
        %v4739 = vlaneseq
        %v4740 = vshrl.u32 %v4739, 7
        %v4741 = vsub.s32 %v4738, %v4740
        %v4742 = vrot.slane %v4728, %v4741
        %v4743 = vcombine.high %v4735, %v4735
        %v4744 = vcombine.high %v4742, %v4742
        %v4746 = vunpack.c.l.s4 1966171168
        %v4747 = vunpack.c.0.s8 %v4746
        %v4748 = vlaneseq
        %v4749 = vshrl.u32 %v4748, 7
        %v4750 = vsub.s32 %v4747, %v4749
        %v4751 = vrot.slane %v4735, %v4750
        %v4753 = vunpack.c.l.s4 1966171168
        %v4754 = vunpack.c.0.s8 %v4753
        %v4755 = vlaneseq
        %v4756 = vshrl.u32 %v4755, 7
        %v4757 = vsub.s32 %v4754, %v4756
        %v4758 = vrot.slane %v4742, %v4757
        %v4760 = vunpack.c.l.s4 1966171168
        %v4761 = vunpack.c.0.s8 %v4760
        %v4762 = vlaneseq
        %v4763 = vshrl.u32 %v4762, 7
        %v4764 = vsub.s32 %v4761, %v4763
        %v4765 = vrot.slane %v4743, %v4764
        %v4767 = vunpack.c.l.s4 1966171168
        %v4768 = vunpack.c.0.s8 %v4767
        %v4769 = vlaneseq
        %v4770 = vshrl.u32 %v4769, 7
        %v4771 = vsub.s32 %v4768, %v4770
        %v4772 = vrot.slane %v4744, %v4771
        %v4773 = vcombine.high %v4758, %v4758
        %v4774 = vcombine.high %v4765, %v4765
        %v4775 = vcombine.high %v4772, %v4772
        %v4776 = vcombine.high %v4567, %v4567
        %v4778 = vunpack.c.l.s4 1966171168
        %v4779 = vunpack.c.0.s8 %v4778
        %v4780 = vlaneseq
        %v4781 = vshrl.u32 %v4780, 7
        %v4782 = vsub.s32 %v4779, %v4781
        %v4783 = vrot.slane %v4567, %v4782
        %v4785 = vunpack.c.l.s4 1966171168
        %v4786 = vunpack.c.0.s8 %v4785
        %v4787 = vlaneseq
        %v4788 = vshrl.u32 %v4787, 7
        %v4789 = vsub.s32 %v4786, %v4788
        %v4790 = vrot.slane %v4776, %v4789
        %v4791 = vcombine.high %v4783, %v4783
        %v4792 = vcombine.high %v4790, %v4790
        %v4794 = vunpack.c.l.s4 1966171168
        %v4795 = vunpack.c.0.s8 %v4794
        %v4796 = vlaneseq
        %v4797 = vshrl.u32 %v4796, 7
        %v4798 = vsub.s32 %v4795, %v4797
        %v4799 = vrot.slane %v4783, %v4798
        %v4801 = vunpack.c.l.s4 1966171168
        %v4802 = vunpack.c.0.s8 %v4801
        %v4803 = vlaneseq
        %v4804 = vshrl.u32 %v4803, 7
        %v4805 = vsub.s32 %v4802, %v4804
        %v4806 = vrot.slane %v4790, %v4805
        %v4808 = vunpack.c.l.s4 1966171168
        %v4809 = vunpack.c.0.s8 %v4808
        %v4810 = vlaneseq
        %v4811 = vshrl.u32 %v4810, 7
        %v4812 = vsub.s32 %v4809, %v4811
        %v4813 = vrot.slane %v4791, %v4812
        %v4815 = vunpack.c.l.s4 1966171168
        %v4816 = vunpack.c.0.s8 %v4815
        %v4817 = vlaneseq
        %v4818 = vshrl.u32 %v4817, 7
        %v4819 = vsub.s32 %v4816, %v4818
        %v4820 = vrot.slane %v4792, %v4819
        %v4821 = vcombine.high %v4799, %v4799
        %v4822 = vcombine.high %v4806, %v4806
        %v4823 = vcombine.high %v4820, %v4820
        %v4824 = vcombine.high %v4568, %v4568
        %v4826 = vunpack.c.l.s4 1966171168
        %v4827 = vunpack.c.0.s8 %v4826
        %v4828 = vlaneseq
        %v4829 = vshrl.u32 %v4828, 7
        %v4830 = vsub.s32 %v4827, %v4829
        %v4831 = vrot.slane %v4568, %v4830
        %v4833 = vunpack.c.l.s4 1966171168
        %v4834 = vunpack.c.0.s8 %v4833
        %v4835 = vlaneseq
        %v4836 = vshrl.u32 %v4835, 7
        %v4837 = vsub.s32 %v4834, %v4836
        %v4838 = vrot.slane %v4824, %v4837
        %v4839 = vcombine.high %v4831, %v4831
        %v4840 = vcombine.high %v4838, %v4838
        %v4842 = vunpack.c.l.s4 1966171168
        %v4843 = vunpack.c.0.s8 %v4842
        %v4844 = vlaneseq
        %v4845 = vshrl.u32 %v4844, 7
        %v4846 = vsub.s32 %v4843, %v4845
        %v4847 = vrot.slane %v4831, %v4846
        %v4849 = vunpack.c.l.s4 1966171168
        %v4850 = vunpack.c.0.s8 %v4849
        %v4851 = vlaneseq
        %v4852 = vshrl.u32 %v4851, 7
        %v4853 = vsub.s32 %v4850, %v4852
        %v4854 = vrot.slane %v4838, %v4853
        %v4856 = vunpack.c.l.s4 1966171168
        %v4857 = vunpack.c.0.s8 %v4856
        %v4858 = vlaneseq
        %v4859 = vshrl.u32 %v4858, 7
        %v4860 = vsub.s32 %v4857, %v4859
        %v4861 = vrot.slane %v4839, %v4860
        %v4863 = vunpack.c.l.s4 1966171168
        %v4864 = vunpack.c.0.s8 %v4863
        %v4865 = vlaneseq
        %v4866 = vshrl.u32 %v4865, 7
        %v4867 = vsub.s32 %v4864, %v4866
        %v4868 = vrot.slane %v4840, %v4867
        %v4869 = vcombine.high %v4847, %v4847
        %v4870 = vcombine.high %v4854, %v4854
        %v4871 = vcombine.high %v4861, %v4861
        %v4872 = vcombine.high %v4868, %v4868
        %v4873 = vcombine.high %v4569, %v4569
        %v4875 = vunpack.c.l.s4 1966171168
        %v4876 = vunpack.c.0.s8 %v4875
        %v4877 = vlaneseq
        %v4878 = vshrl.u32 %v4877, 7
        %v4879 = vsub.s32 %v4876, %v4878
        %v4880 = vrot.slane %v4569, %v4879
        %v4882 = vunpack.c.l.s4 1966171168
        %v4883 = vunpack.c.0.s8 %v4882
        %v4884 = vlaneseq
        %v4885 = vshrl.u32 %v4884, 7
        %v4886 = vsub.s32 %v4883, %v4885
        %v4887 = vrot.slane %v4873, %v4886
        %v4888 = vcombine.high %v4880, %v4880
        %v4889 = vcombine.high %v4887, %v4887
        %v4891 = vunpack.c.l.s4 1966171168
        %v4892 = vunpack.c.0.s8 %v4891
        %v4893 = vlaneseq
        %v4894 = vshrl.u32 %v4893, 7
        %v4895 = vsub.s32 %v4892, %v4894
        %v4896 = vrot.slane %v4880, %v4895
        %v4898 = vunpack.c.l.s4 1966171168
        %v4899 = vunpack.c.0.s8 %v4898
        %v4900 = vlaneseq
        %v4901 = vshrl.u32 %v4900, 7
        %v4902 = vsub.s32 %v4899, %v4901
        %v4903 = vrot.slane %v4887, %v4902
        %v4905 = vunpack.c.l.s4 1966171168
        %v4906 = vunpack.c.0.s8 %v4905
        %v4907 = vlaneseq
        %v4908 = vshrl.u32 %v4907, 7
        %v4909 = vsub.s32 %v4906, %v4908
        %v4910 = vrot.slane %v4888, %v4909
        %v4912 = vunpack.c.l.s4 1966171168
        %v4913 = vunpack.c.0.s8 %v4912
        %v4914 = vlaneseq
        %v4915 = vshrl.u32 %v4914, 7
        %v4916 = vsub.s32 %v4913, %v4915
        %v4917 = vrot.slane %v4889, %v4916
        %v4918 = vcombine.high %v4896, %v4896
        %v4919 = vcombine.high %v4903, %v4903
        %v4920 = vcombine.high %v4910, %v4910
        %v4921 = vcombine.high %v4917, %v4917
        %v4922 = vcombine.high %v4570, %v4570
        %v4924 = vunpack.c.l.s4 1966171168
        %v4925 = vunpack.c.0.s8 %v4924
        %v4926 = vlaneseq
        %v4927 = vshrl.u32 %v4926, 7
        %v4928 = vsub.s32 %v4925, %v4927
        %v4929 = vrot.slane %v4570, %v4928
        %v4931 = vunpack.c.l.s4 1966171168
        %v4932 = vunpack.c.0.s8 %v4931
        %v4933 = vlaneseq
        %v4934 = vshrl.u32 %v4933, 7
        %v4935 = vsub.s32 %v4932, %v4934
        %v4936 = vrot.slane %v4922, %v4935
        %v4937 = vcombine.high %v4929, %v4929
        %v4938 = vcombine.high %v4936, %v4936
        %v4940 = vunpack.c.l.s4 1966171168
        %v4941 = vunpack.c.0.s8 %v4940
        %v4942 = vlaneseq
        %v4943 = vshrl.u32 %v4942, 7
        %v4944 = vsub.s32 %v4941, %v4943
        %v4945 = vrot.slane %v4929, %v4944
        %v4947 = vunpack.c.l.s4 1966171168
        %v4948 = vunpack.c.0.s8 %v4947
        %v4949 = vlaneseq
        %v4950 = vshrl.u32 %v4949, 7
        %v4951 = vsub.s32 %v4948, %v4950
        %v4952 = vrot.slane %v4936, %v4951
        %v4954 = vunpack.c.l.s4 1966171168
        %v4955 = vunpack.c.0.s8 %v4954
        %v4956 = vlaneseq
        %v4957 = vshrl.u32 %v4956, 7
        %v4958 = vsub.s32 %v4955, %v4957
        %v4959 = vrot.slane %v4937, %v4958
        %v4961 = vunpack.c.l.s4 1966171168
        %v4962 = vunpack.c.0.s8 %v4961
        %v4963 = vlaneseq
        %v4964 = vshrl.u32 %v4963, 7
        %v4965 = vsub.s32 %v4962, %v4964
        %v4966 = vrot.slane %v4938, %v4965
        %v4967 = vcombine.high %v4945, %v4945
        %v4968 = vcombine.high %v4959, %v4959
        %v4969 = vcombine.high %v4966, %v4966
        %v4970 = vcombine.high %v4571, %v4571
        %v4972 = vunpack.c.l.s4 1966171168
        %v4973 = vunpack.c.0.s8 %v4972
        %v4974 = vlaneseq
        %v4975 = vshrl.u32 %v4974, 7
        %v4976 = vsub.s32 %v4973, %v4975
        %v4977 = vrot.slane %v4571, %v4976
        %v4979 = vunpack.c.l.s4 1966171168
        %v4980 = vunpack.c.0.s8 %v4979
        %v4981 = vlaneseq
        %v4982 = vshrl.u32 %v4981, 7
        %v4983 = vsub.s32 %v4980, %v4982
        %v4984 = vrot.slane %v4970, %v4983
        %v4985 = vcombine.high %v4977, %v4977
        %v4986 = vcombine.high %v4984, %v4984
        %v4988 = vunpack.c.l.s4 1966171168
        %v4989 = vunpack.c.0.s8 %v4988
        %v4990 = vlaneseq
        %v4991 = vshrl.u32 %v4990, 7
        %v4992 = vsub.s32 %v4989, %v4991
        %v4993 = vrot.slane %v4977, %v4992
        %v4995 = vunpack.c.l.s4 1966171168
        %v4996 = vunpack.c.0.s8 %v4995
        %v4997 = vlaneseq
        %v4998 = vshrl.u32 %v4997, 7
        %v4999 = vsub.s32 %v4996, %v4998
        %v5000 = vrot.slane %v4984, %v4999
        %v5002 = vunpack.c.l.s4 1966171168
        %v5003 = vunpack.c.0.s8 %v5002
        %v5004 = vlaneseq
        %v5005 = vshrl.u32 %v5004, 7
        %v5006 = vsub.s32 %v5003, %v5005
        %v5007 = vrot.slane %v4985, %v5006
        %v5009 = vunpack.c.l.s4 1966171168
        %v5010 = vunpack.c.0.s8 %v5009
        %v5011 = vlaneseq
        %v5012 = vshrl.u32 %v5011, 7
        %v5013 = vsub.s32 %v5010, %v5012
        %v5014 = vrot.slane %v4986, %v5013
        %v5015 = vcombine.high %v4993, %v4993
        %v5016 = vcombine.high %v5000, %v5000
        %v5017 = vcombine.high %v5007, %v5007
        %v5018 = vld [vmem:[%s7] sm:$0xf]
        %v5019 = vld [vmem:[%s7 + $0x4] sm:$0xf]
        %v5020 = vld [vmem:[%s7 + $0x8] sm:$0xf]
        %v5021 = vld [vmem:[%s7 + $0xc] sm:$0xf]
        %v5022 = vld [vmem:[%s7 + $0x10] sm:$0xf]
        %v5023 = vld [vmem:[%s7 + $0x14] sm:$0xf]
        %v5024 = vld [vmem:[%s7 + $0x18] sm:$0xf]
        %v5025 = vld [vmem:[%s7 + $0x1c] sm:$0xf]
        %v5026 = vld [vmem:[%s7 + $0x20] sm:$0xf]
        %v5027 = vld [vmem:[%s7 + $0x24] sm:$0xf]
        %v5028 = vld [vmem:[%s7 + $0x28] sm:$0xf]
        %v5029 = vld [vmem:[%s7 + $0x2c] sm:$0xf]
        %v5030 = vld [vmem:[%s7 + $0x30] sm:$0xf]
        %v5031 = vld [vmem:[%s7 + $0x34] sm:$0xf]
        %v5032 = vld [vmem:[%s7 + $0x38] sm:$0xf]
        %v5033 = vld [vmem:[%s7 + $0x3c] sm:$0xf]
        %v5034 = vcombine.low %v4604, %v4618
        %v5035 = vcombine.low %v4626, %v4628
        %v5036 = vcombine.low %v4611, %v4625
        %v5037 = vcombine.low %v4627, %v4629
        %v5039 = vunpack.c.l.s4 1966171168
        %v5040 = vunpack.c.0.s8 %v5039
        %v5041 = vlaneseq
        %v5042 = vshrl.u32 %v5041, 7
        %v5043 = vsub.s32 %v5040, %v5042
        %v5044 = vrot.slane %v5034, %v5043
        %v5046 = vunpack.c.l.s4 1966171168
        %v5047 = vunpack.c.0.s8 %v5046
        %v5048 = vlaneseq
        %v5049 = vshrl.u32 %v5048, 7
        %v5050 = vsub.s32 %v5047, %v5049
        %v5051 = vrot.slane %v5035, %v5050
        %v5053 = vunpack.c.l.s4 1966171168
        %v5054 = vunpack.c.0.s8 %v5053
        %v5055 = vlaneseq
        %v5056 = vshrl.u32 %v5055, 7
        %v5057 = vsub.s32 %v5054, %v5056
        %v5058 = vrot.slane %v5036, %v5057
        %v5060 = vunpack.c.l.s4 1966171168
        %v5061 = vunpack.c.0.s8 %v5060
        %v5062 = vlaneseq
        %v5063 = vshrl.u32 %v5062, 7
        %v5064 = vsub.s32 %v5061, %v5063
        %v5065 = vrot.slane %v5037, %v5064
        %v5066 = vcombine.low %v5044, %v5051
        %v5067 = vcombine.low %v5058, %v5065
        %v5069 = vunpack.c.l.s4 1966171168
        %v5070 = vunpack.c.0.s8 %v5069
        %v5071 = vlaneseq
        %v5072 = vshrl.u32 %v5071, 7
        %v5073 = vsub.s32 %v5070, %v5072
        %v5074 = vrot.slane %v5066, %v5073
        %v5076 = vunpack.c.l.s4 1966171168
        %v5077 = vunpack.c.0.s8 %v5076
        %v5078 = vlaneseq
        %v5079 = vshrl.u32 %v5078, 7
        %v5080 = vsub.s32 %v5077, %v5079
        %v5081 = vrot.slane %v5067, %v5080
        %v5082 = vcombine.low %v5074, %v5081
        %v5083 = vcombine.low %v4667, %v4675
        %v5084 = vcombine.low %v4677, %v4660
        %v5085 = vcombine.low %v4674, %v4676
        %v5086 = vcombine.low %v4678, %v4702
        %v5088 = vunpack.c.l.s4 1966171168
        %v5089 = vunpack.c.0.s8 %v5088
        %v5090 = vlaneseq
        %v5091 = vshrl.u32 %v5090, 7
        %v5092 = vsub.s32 %v5089, %v5091
        %v5093 = vrot.slane %v5083, %v5092
        %v5095 = vunpack.c.l.s4 1966171168
        %v5096 = vunpack.c.0.s8 %v5095
        %v5097 = vlaneseq
        %v5098 = vshrl.u32 %v5097, 7
        %v5099 = vsub.s32 %v5096, %v5098
        %v5100 = vrot.slane %v5084, %v5099
        %v5102 = vunpack.c.l.s4 1966171168
        %v5103 = vunpack.c.0.s8 %v5102
        %v5104 = vlaneseq
        %v5105 = vshrl.u32 %v5104, 7
        %v5106 = vsub.s32 %v5103, %v5105
        %v5107 = vrot.slane %v5085, %v5106
        %v5109 = vunpack.c.l.s4 1966171168
        %v5110 = vunpack.c.0.s8 %v5109
        %v5111 = vlaneseq
        %v5112 = vshrl.u32 %v5111, 7
        %v5113 = vsub.s32 %v5110, %v5112
        %v5114 = vrot.slane %v5086, %v5113
        %v5115 = vcombine.low %v5093, %v5100
        %v5116 = vcombine.low %v5107, %v5114
        %v5118 = vunpack.c.l.s4 1966171168
        %v5119 = vunpack.c.0.s8 %v5118
        %v5120 = vlaneseq
        %v5121 = vshrl.u32 %v5120, 7
        %v5122 = vsub.s32 %v5119, %v5121
        %v5123 = vrot.slane %v5115, %v5122
        %v5125 = vunpack.c.l.s4 1966171168
        %v5126 = vunpack.c.0.s8 %v5125
        %v5127 = vlaneseq
        %v5128 = vshrl.u32 %v5127, 7
        %v5129 = vsub.s32 %v5126, %v5128
        %v5130 = vrot.slane %v5116, %v5129
        %v5131 = vcombine.low %v5123, %v5130
        %v5132 = vcombine.low %v4724, %v4726
        %v5133 = vcombine.low %v4709, %v4723
        %v5134 = vcombine.low %v4725, %v4727
        %v5135 = vcombine.low %v4751, %v4765
        %v5137 = vunpack.c.l.s4 1966171168
        %v5138 = vunpack.c.0.s8 %v5137
        %v5139 = vlaneseq
        %v5140 = vshrl.u32 %v5139, 7
        %v5141 = vsub.s32 %v5138, %v5140
        %v5142 = vrot.slane %v5132, %v5141
        %v5144 = vunpack.c.l.s4 1966171168
        %v5145 = vunpack.c.0.s8 %v5144
        %v5146 = vlaneseq
        %v5147 = vshrl.u32 %v5146, 7
        %v5148 = vsub.s32 %v5145, %v5147
        %v5149 = vrot.slane %v5133, %v5148
        %v5151 = vunpack.c.l.s4 1966171168
        %v5152 = vunpack.c.0.s8 %v5151
        %v5153 = vlaneseq
        %v5154 = vshrl.u32 %v5153, 7
        %v5155 = vsub.s32 %v5152, %v5154
        %v5156 = vrot.slane %v5134, %v5155
        %v5158 = vunpack.c.l.s4 1966171168
        %v5159 = vunpack.c.0.s8 %v5158
        %v5160 = vlaneseq
        %v5161 = vshrl.u32 %v5160, 7
        %v5162 = vsub.s32 %v5159, %v5161
        %v5163 = vrot.slane %v5135, %v5162
        %v5164 = vcombine.low %v5142, %v5149
        %v5165 = vcombine.low %v5156, %v5163
        %v5167 = vunpack.c.l.s4 1966171168
        %v5168 = vunpack.c.0.s8 %v5167
        %v5169 = vlaneseq
        %v5170 = vshrl.u32 %v5169, 7
        %v5171 = vsub.s32 %v5168, %v5170
        %v5172 = vrot.slane %v5164, %v5171
        %v5174 = vunpack.c.l.s4 1966171168
        %v5175 = vunpack.c.0.s8 %v5174
        %v5176 = vlaneseq
        %v5177 = vshrl.u32 %v5176, 7
        %v5178 = vsub.s32 %v5175, %v5177
        %v5179 = vrot.slane %v5165, %v5178
        %v5180 = vcombine.low %v5172, %v5179
        %v5181 = vcombine.low %v4774, %v4758
        %v5182 = vcombine.low %v4772, %v4773
        %v5183 = vcombine.low %v4775, %v4799
        %v5184 = vcombine.low %v4813, %v4821
        %v5186 = vunpack.c.l.s4 1966171168
        %v5187 = vunpack.c.0.s8 %v5186
        %v5188 = vlaneseq
        %v5189 = vshrl.u32 %v5188, 7
        %v5190 = vsub.s32 %v5187, %v5189
        %v5191 = vrot.slane %v5181, %v5190
        %v5193 = vunpack.c.l.s4 1966171168
        %v5194 = vunpack.c.0.s8 %v5193
        %v5195 = vlaneseq
        %v5196 = vshrl.u32 %v5195, 7
        %v5197 = vsub.s32 %v5194, %v5196
        %v5198 = vrot.slane %v5182, %v5197
        %v5200 = vunpack.c.l.s4 1966171168
        %v5201 = vunpack.c.0.s8 %v5200
        %v5202 = vlaneseq
        %v5203 = vshrl.u32 %v5202, 7
        %v5204 = vsub.s32 %v5201, %v5203
        %v5205 = vrot.slane %v5183, %v5204
        %v5207 = vunpack.c.l.s4 1966171168
        %v5208 = vunpack.c.0.s8 %v5207
        %v5209 = vlaneseq
        %v5210 = vshrl.u32 %v5209, 7
        %v5211 = vsub.s32 %v5208, %v5210
        %v5212 = vrot.slane %v5184, %v5211
        %v5213 = vcombine.low %v5191, %v5198
        %v5214 = vcombine.low %v5205, %v5212
        %v5216 = vunpack.c.l.s4 1966171168
        %v5217 = vunpack.c.0.s8 %v5216
        %v5218 = vlaneseq
        %v5219 = vshrl.u32 %v5218, 7
        %v5220 = vsub.s32 %v5217, %v5219
        %v5221 = vrot.slane %v5213, %v5220
        %v5223 = vunpack.c.l.s4 1966171168
        %v5224 = vunpack.c.0.s8 %v5223
        %v5225 = vlaneseq
        %v5226 = vshrl.u32 %v5225, 7
        %v5227 = vsub.s32 %v5224, %v5226
        %v5228 = vrot.slane %v5214, %v5227
        %v5229 = vcombine.low %v5221, %v5228
        %v5230 = vcombine.low %v4806, %v4820
        %v5231 = vcombine.low %v4822, %v4823
        %v5232 = vcombine.low %v4847, %v4861
        %v5233 = vcombine.low %v4869, %v4871
        %v5235 = vunpack.c.l.s4 1966171168
        %v5236 = vunpack.c.0.s8 %v5235
        %v5237 = vlaneseq
        %v5238 = vshrl.u32 %v5237, 7
        %v5239 = vsub.s32 %v5236, %v5238
        %v5240 = vrot.slane %v5230, %v5239
        %v5242 = vunpack.c.l.s4 1966171168
        %v5243 = vunpack.c.0.s8 %v5242
        %v5244 = vlaneseq
        %v5245 = vshrl.u32 %v5244, 7
        %v5246 = vsub.s32 %v5243, %v5245
        %v5247 = vrot.slane %v5231, %v5246
        %v5249 = vunpack.c.l.s4 1966171168
        %v5250 = vunpack.c.0.s8 %v5249
        %v5251 = vlaneseq
        %v5252 = vshrl.u32 %v5251, 7
        %v5253 = vsub.s32 %v5250, %v5252
        %v5254 = vrot.slane %v5232, %v5253
        %v5256 = vunpack.c.l.s4 1966171168
        %v5257 = vunpack.c.0.s8 %v5256
        %v5258 = vlaneseq
        %v5259 = vshrl.u32 %v5258, 7
        %v5260 = vsub.s32 %v5257, %v5259
        %v5261 = vrot.slane %v5233, %v5260
        %v5262 = vcombine.low %v5240, %v5247
        %v5263 = vcombine.low %v5254, %v5261
        %v5265 = vunpack.c.l.s4 1966171168
        %v5266 = vunpack.c.0.s8 %v5265
        %v5267 = vlaneseq
        %v5268 = vshrl.u32 %v5267, 7
        %v5269 = vsub.s32 %v5266, %v5268
        %v5270 = vrot.slane %v5262, %v5269
        %v5272 = vunpack.c.l.s4 1966171168
        %v5273 = vunpack.c.0.s8 %v5272
        %v5274 = vlaneseq
        %v5275 = vshrl.u32 %v5274, 7
        %v5276 = vsub.s32 %v5273, %v5275
        %v5277 = vrot.slane %v5263, %v5276
        %v5278 = vcombine.low %v5270, %v5277
        %v5279 = vcombine.low %v4868, %v4870
        %v5280 = vcombine.low %v4872, %v4896
        %v5281 = vcombine.low %v4910, %v4918
        %v5282 = vcombine.low %v4920, %v4903
        %v5284 = vunpack.c.l.s4 1966171168
        %v5285 = vunpack.c.0.s8 %v5284
        %v5286 = vlaneseq
        %v5287 = vshrl.u32 %v5286, 7
        %v5288 = vsub.s32 %v5285, %v5287
        %v5289 = vrot.slane %v5279, %v5288
        %v5291 = vunpack.c.l.s4 1966171168
        %v5292 = vunpack.c.0.s8 %v5291
        %v5293 = vlaneseq
        %v5294 = vshrl.u32 %v5293, 7
        %v5295 = vsub.s32 %v5292, %v5294
        %v5296 = vrot.slane %v5280, %v5295
        %v5298 = vunpack.c.l.s4 1966171168
        %v5299 = vunpack.c.0.s8 %v5298
        %v5300 = vlaneseq
        %v5301 = vshrl.u32 %v5300, 7
        %v5302 = vsub.s32 %v5299, %v5301
        %v5303 = vrot.slane %v5281, %v5302
        %v5305 = vunpack.c.l.s4 1966171168
        %v5306 = vunpack.c.0.s8 %v5305
        %v5307 = vlaneseq
        %v5308 = vshrl.u32 %v5307, 7
        %v5309 = vsub.s32 %v5306, %v5308
        %v5310 = vrot.slane %v5282, %v5309
        %v5311 = vcombine.low %v5289, %v5296
        %v5312 = vcombine.low %v5303, %v5310
        %v5314 = vunpack.c.l.s4 1966171168
        %v5315 = vunpack.c.0.s8 %v5314
        %v5316 = vlaneseq
        %v5317 = vshrl.u32 %v5316, 7
        %v5318 = vsub.s32 %v5315, %v5317
        %v5319 = vrot.slane %v5311, %v5318
        %v5321 = vunpack.c.l.s4 1966171168
        %v5322 = vunpack.c.0.s8 %v5321
        %v5323 = vlaneseq
        %v5324 = vshrl.u32 %v5323, 7
        %v5325 = vsub.s32 %v5322, %v5324
        %v5326 = vrot.slane %v5312, %v5325
        %v5327 = vcombine.low %v5319, %v5326
        %v5328 = vcombine.low %v4919, %v4921
        %v5329 = vcombine.low %v4945, %v4959
        %v5330 = vcombine.low %v4967, %v4968
        %v5331 = vcombine.low %v4952, %v4966
        %v5333 = vunpack.c.l.s4 1966171168
        %v5334 = vunpack.c.0.s8 %v5333
        %v5335 = vlaneseq
        %v5336 = vshrl.u32 %v5335, 7
        %v5337 = vsub.s32 %v5334, %v5336
        %v5338 = vrot.slane %v5328, %v5337
        %v5340 = vunpack.c.l.s4 1966171168
        %v5341 = vunpack.c.0.s8 %v5340
        %v5342 = vlaneseq
        %v5343 = vshrl.u32 %v5342, 7
        %v5344 = vsub.s32 %v5341, %v5343
        %v5345 = vrot.slane %v5329, %v5344
        %v5347 = vunpack.c.l.s4 1966171168
        %v5348 = vunpack.c.0.s8 %v5347
        %v5349 = vlaneseq
        %v5350 = vshrl.u32 %v5349, 7
        %v5351 = vsub.s32 %v5348, %v5350
        %v5352 = vrot.slane %v5330, %v5351
        %v5354 = vunpack.c.l.s4 1966171168
        %v5355 = vunpack.c.0.s8 %v5354
        %v5356 = vlaneseq
        %v5357 = vshrl.u32 %v5356, 7
        %v5358 = vsub.s32 %v5355, %v5357
        %v5359 = vrot.slane %v5331, %v5358
        %v5360 = vcombine.low %v5338, %v5345
        %v5361 = vcombine.low %v5352, %v5359
        %v5363 = vunpack.c.l.s4 1966171168
        %v5364 = vunpack.c.0.s8 %v5363
        %v5365 = vlaneseq
        %v5366 = vshrl.u32 %v5365, 7
        %v5367 = vsub.s32 %v5364, %v5366
        %v5368 = vrot.slane %v5360, %v5367
        %v5370 = vunpack.c.l.s4 1966171168
        %v5371 = vunpack.c.0.s8 %v5370
        %v5372 = vlaneseq
        %v5373 = vshrl.u32 %v5372, 7
        %v5374 = vsub.s32 %v5371, %v5373
        %v5375 = vrot.slane %v5361, %v5374
        %v5376 = vcombine.low %v5368, %v5375
        %v5377 = vcombine.low %v4969, %v4993
        %v5378 = vcombine.low %v5007, %v5015
        %v5379 = vcombine.low %v5017, %v5000
        %v5380 = vcombine.low %v5014, %v5016
        %v5382 = vunpack.c.l.s4 1966171168
        %v5383 = vunpack.c.0.s8 %v5382
        %v5384 = vlaneseq
        %v5385 = vshrl.u32 %v5384, 7
        %v5386 = vsub.s32 %v5383, %v5385
        %v5387 = vrot.slane %v5377, %v5386
        %v5389 = vunpack.c.l.s4 1966171168
        %v5390 = vunpack.c.0.s8 %v5389
        %v5391 = vlaneseq
        %v5392 = vshrl.u32 %v5391, 7
        %v5393 = vsub.s32 %v5390, %v5392
        %v5394 = vrot.slane %v5378, %v5393
        %v5396 = vunpack.c.l.s4 1966171168
        %v5397 = vunpack.c.0.s8 %v5396
        %v5398 = vlaneseq
        %v5399 = vshrl.u32 %v5398, 7
        %v5400 = vsub.s32 %v5397, %v5399
        %v5401 = vrot.slane %v5379, %v5400
        %v5403 = vunpack.c.l.s4 1966171168
        %v5404 = vunpack.c.0.s8 %v5403
        %v5405 = vlaneseq
        %v5406 = vshrl.u32 %v5405, 7
        %v5407 = vsub.s32 %v5404, %v5406
        %v5408 = vrot.slane %v5380, %v5407
        %v5409 = vcombine.low %v5387, %v5394
        %v5410 = vcombine.low %v5401, %v5408
        %v5412 = vunpack.c.l.s4 1966171168
        %v5413 = vunpack.c.0.s8 %v5412
        %v5414 = vlaneseq
        %v5415 = vshrl.u32 %v5414, 7
        %v5416 = vsub.s32 %v5413, %v5415
        %v5417 = vrot.slane %v5409, %v5416
        %v5419 = vunpack.c.l.s4 1966171168
        %v5420 = vunpack.c.0.s8 %v5419
        %v5421 = vlaneseq
        %v5422 = vshrl.u32 %v5421, 7
        %v5423 = vsub.s32 %v5420, %v5422
        %v5424 = vrot.slane %v5410, %v5423
        %v5425 = vcombine.low %v5417, %v5424
        %v5450 = vunpack.c.l.b16 %v5018
        %v5451 = vunpack.c.l.b16 %v5019
        %v5452 = vunpack.c.l.b16 %v5020
        %v5453 = vunpack.c.l.b16 %v5021
        %v5454 = vunpack.c.l.b16 %v5022
        %v5455 = vunpack.c.l.b16 %v5023
        %v5456 = vunpack.c.l.b16 %v5024
        %v5457 = vunpack.c.l.b16 %v5025
        %v5458 = vunpack.c.l.b16 %v5026
        %v5459 = vunpack.c.l.b16 %v5027
        %v5460 = vunpack.c.l.b16 %v5028
        %v5461 = vunpack.c.l.b16 %v5029
        %v5462 = vunpack.c.l.b16 %v5030
        %v5463 = vunpack.c.l.b16 %v5031
        %v5464 = vunpack.c.l.b16 %v5032
        %v5465 = vunpack.c.l.b16 %v5033
        %v5466 = vpack.c.b16 %v5451, %v5450
        %v5467 = vpack.c.b16 %v5453, %v5452
        %v5468 = vpack.c.b16 %v5455, %v5454
        %v5469 = vpack.c.b16 %v5457, %v5456
        %v5470 = vpack.c.b16 %v5459, %v5458
        %v5471 = vpack.c.b16 %v5461, %v5460
        %v5472 = vpack.c.b16 %v5463, %v5462
        %v5473 = vpack.c.b16 %v5465, %v5464
        %5482 = vmatprep.subr.bf16.mxu0 0
        %5483 = vmatpush1.bf16.msra.mxu0 %v5473
        %5484 = vmatprep.subr.bf16.mxu0 0
        %5485 = vmatpush1.bf16.msra.mxu0 %v5472
        %5486 = vmatprep.subr.bf16.mxu0 0
        %5487 = vmatpush1.bf16.msra.mxu0 %v5471
        %5488 = vmatprep.subr.bf16.mxu0 0
        %5489 = vmatpush1.bf16.msra.mxu0 %v5470
        %5490 = vmatprep.subr.bf16.mxu0 0
        %5491 = vmatpush1.bf16.msra.mxu0 %v5469
        %5492 = vmatprep.subr.bf16.mxu0 0
        %5493 = vmatpush1.bf16.msra.mxu0 %v5468
        %5494 = vmatprep.subr.bf16.mxu0 0
        %5495 = vmatpush1.bf16.msra.mxu0 %v5467
        %5496 = vmatprep.subr.bf16.mxu0 0
        %5497 = vmatpush1.bf16.msra.mxu0 %v5466
        %5498 = vmatprep.subr.bf16.mxu0 0
        %5499 = vmatpush2.bf16.msra.mxu0 0
        %5500 = vmatprep.subr.bf16.mxu0 0
        %5501 = vmatpush2.bf16.msra.mxu0 0
        %5502 = vmatprep.subr.bf16.mxu0 0
        %5503 = vmatpush2.bf16.msra.mxu0 0
        %5504 = vmatprep.subr.bf16.mxu0 0
        %5505 = vmatpush2.bf16.msra.mxu0 0
        %5506 = vmatprep.subr.bf16.mxu0 0
        %5507 = vmatpush2.bf16.msra.mxu0 0
        %5508 = vmatprep.subr.bf16.mxu0 0
        %5509 = vmatpush2.bf16.msra.mxu0 0
        %5510 = vmatprep.subr.bf16.mxu0 0
        %5511 = vmatpush2.bf16.msra.mxu0 0
        %5512 = vmatprep.subr.bf16.mxu0 0
        %5513 = vmatpush2.bf16.msra.mxu0 0
        %5514 = vmatprep.mubr.bf16.mxu0 0
        %5515 = vmatmul.mubr.bf16.gmra.mxu0 %v5082
        %v5516 = vpop.f32.mrf.mxu0
        %v5517 = vadd.f32 0.0, %v5516
        %v5518 = vpop.f32.mrf.mxu0
        %v5519 = vpop.f32.mrf.mxu0
        %v5520 = vadd.f32 0.0, %v5519
        %v5521 = vpop.f32.mrf.mxu0
        %5522 = vmatprep.mubr.bf16.mxu0 0
        %5523 = vmatmul.mubr.bf16.gmra.mxu0 %v5131
        %v5524 = vpop.f32.mrf.mxu0
        %v5525 = vadd.f32 0.0, %v5524
        %v5526 = vpop.f32.mrf.mxu0
        %v5527 = vpop.f32.mrf.mxu0
        %v5528 = vadd.f32 0.0, %v5527
        %v5529 = vpop.f32.mrf.mxu0
        %5530 = vmatprep.mubr.bf16.mxu0 0
        %5531 = vmatmul.mubr.bf16.gmra.mxu0 %v5180
        %v5532 = vpop.f32.mrf.mxu0
        %v5533 = vadd.f32 0.0, %v5532
        %v5534 = vpop.f32.mrf.mxu0
        %v5535 = vpop.f32.mrf.mxu0
        %v5536 = vadd.f32 0.0, %v5535
        %v5537 = vpop.f32.mrf.mxu0
        %5538 = vmatprep.mubr.bf16.mxu0 0
        %5539 = vmatmul.mubr.bf16.gmra.mxu0 %v5229
        %v5540 = vpop.f32.mrf.mxu0
        %v5541 = vadd.f32 0.0, %v5540
        %v5542 = vpop.f32.mrf.mxu0
        %v5543 = vpop.f32.mrf.mxu0
        %v5544 = vadd.f32 0.0, %v5543
        %v5545 = vpop.f32.mrf.mxu0
        %5546 = vmatprep.mubr.bf16.mxu0 0
        %5547 = vmatmul.mubr.bf16.gmra.mxu0 %v5278
        %v5548 = vpop.f32.mrf.mxu0
        %v5549 = vadd.f32 0.0, %v5548
        %v5550 = vpop.f32.mrf.mxu0
        %v5551 = vpop.f32.mrf.mxu0
        %v5552 = vadd.f32 0.0, %v5551
        %v5553 = vpop.f32.mrf.mxu0
        %5554 = vmatprep.mubr.bf16.mxu0 0
        %5555 = vmatmul.mubr.bf16.gmra.mxu0 %v5327
        %v5556 = vpop.f32.mrf.mxu0
        %v5557 = vadd.f32 0.0, %v5556
        %v5558 = vpop.f32.mrf.mxu0
        %v5559 = vpop.f32.mrf.mxu0
        %v5560 = vadd.f32 0.0, %v5559
        %v5561 = vpop.f32.mrf.mxu0
        %5562 = vmatprep.mubr.bf16.mxu0 0
        %5563 = vmatmul.mubr.bf16.gmra.mxu0 %v5376
        %v5564 = vpop.f32.mrf.mxu0
        %v5565 = vadd.f32 0.0, %v5564
        %v5566 = vpop.f32.mrf.mxu0
        %v5567 = vpop.f32.mrf.mxu0
        %v5568 = vadd.f32 0.0, %v5567
        %v5569 = vpop.f32.mrf.mxu0
        %5570 = vmatprep.mubr.bf16.mxu0 0
        %5571 = vmatmul.mubr.bf16.gmra.mxu0 %v5425
        %v5572 = vpop.f32.mrf.mxu0
        %v5573 = vadd.f32 0.0, %v5572
        %v5574 = vpop.f32.mrf.mxu0
        %v5575 = vpop.f32.mrf.mxu0
        %v5576 = vadd.f32 0.0, %v5575
        %v5577 = vpop.f32.mrf.mxu0
        %5578 = vdwg.mxu0
        %v5579 = vld [vmem:[%s8] sm:$0x1]
        %v5581 = vlaneseq
        %v5582 = vshrl.u32 %v5581, 7
        %v5583 = vsub.s32 0, %v5582
        %v5584 = vrot.slane %v5579, %v5583
        %v5586 = vmul.f32 %v5517, %v5584
        %v5587 = vmul.f32 %v5520, %v5584
        %v5588 = vmul.f32 %v5525, %v5584
        %v5589 = vmul.f32 %v5528, %v5584
        %v5590 = vmul.f32 %v5533, %v5584
        %v5591 = vmul.f32 %v5536, %v5584
        %v5592 = vmul.f32 %v5541, %v5584
        %v5593 = vmul.f32 %v5544, %v5584
        %v5594 = vmul.f32 %v5549, %v5584
        %v5595 = vmul.f32 %v5552, %v5584
        %v5596 = vmul.f32 %v5557, %v5584
        %v5597 = vmul.f32 %v5560, %v5584
        %v5598 = vmul.f32 %v5565, %v5584
        %v5599 = vmul.f32 %v5568, %v5584
        %v5600 = vmul.f32 %v5573, %v5584
        %v5601 = vmul.f32 %v5576, %v5584
        %v5602 = vld [vmem:[%s9] sm:$0x1]
        %v5604 = vlaneseq
        %v5605 = vshrl.u32 %v5604, 7
        %v5606 = vsub.s32 0, %v5605
        %v5607 = vrot.slane %v5602, %v5606
        %v5609 = vadd.f32 %v5586, %v5607
        %v5610 = vadd.f32 %v5587, %v5607
        %v5611 = vadd.f32 %v5588, %v5607
        %v5612 = vadd.f32 %v5589, %v5607
        %v5613 = vadd.f32 %v5590, %v5607
        %v5614 = vadd.f32 %v5591, %v5607
        %v5615 = vadd.f32 %v5592, %v5607
        %v5616 = vadd.f32 %v5593, %v5607
        %v5617 = vadd.f32 %v5594, %v5607
        %v5618 = vadd.f32 %v5595, %v5607
        %v5619 = vadd.f32 %v5596, %v5607
        %v5620 = vadd.f32 %v5597, %v5607
        %v5621 = vadd.f32 %v5598, %v5607
        %v5622 = vadd.f32 %v5599, %v5607
        %v5623 = vadd.f32 %v5600, %v5607
        %v5624 = vadd.f32 %v5601, %v5607
        %v5625 = vadd.f32 %v5609, %v422
        %v5626 = vadd.f32 %v5610, %v423
        %v5627 = vadd.f32 %v5611, %v424
        %v5628 = vadd.f32 %v5612, %v425
        %v5629 = vadd.f32 %v5613, %v426
        %v5630 = vadd.f32 %v5614, %v427
        %v5631 = vadd.f32 %v5615, %v428
        %v5632 = vadd.f32 %v5616, %v429
        %v5633 = vadd.f32 %v5617, %v430
        %v5634 = vadd.f32 %v5618, %v431
        %v5635 = vadd.f32 %v5619, %v432
        %v5636 = vadd.f32 %v5620, %v433
        %v5637 = vadd.f32 %v5621, %v434
        %v5638 = vadd.f32 %v5622, %v435
        %v5639 = vadd.f32 %v5623, %v436
        %v5640 = vadd.f32 %v5624, %v437
        %v5641 = vmax.f32 %v5625, 0.0
        %v5642 = vmax.f32 %v5626, 0.0
        %v5643 = vmax.f32 %v5627, 0.0
        %v5644 = vmax.f32 %v5628, 0.0
        %v5645 = vmax.f32 %v5629, 0.0
        %v5646 = vmax.f32 %v5630, 0.0
        %v5647 = vmax.f32 %v5631, 0.0
        %v5648 = vmax.f32 %v5632, 0.0
        %v5649 = vmax.f32 %v5633, 0.0
        %v5650 = vmax.f32 %v5634, 0.0
        %v5651 = vmax.f32 %v5635, 0.0
        %v5652 = vmax.f32 %v5636, 0.0
        %v5653 = vmax.f32 %v5637, 0.0
        %v5654 = vmax.f32 %v5638, 0.0
        %v5655 = vmax.f32 %v5639, 0.0
        %v5656 = vmax.f32 %v5640, 0.0
        %5657 = vst.msk [vmem:[%s406] sm:$0xff] %vm449, %v5641
        %5658 = vst.msk [vmem:[%s406 + $0x8] sm:$0xff] %vm449, %v5642
        %5659 = vst.msk [vmem:[%s406 + $0x10] sm:$0xff] %vm449, %v5643
        %5660 = vst.msk [vmem:[%s406 + $0x18] sm:$0xff] %vm449, %v5644
        %5661 = vst.msk [vmem:[%s406 + $0x20] sm:$0xff] %vm449, %v5645
        %5662 = vst.msk [vmem:[%s406 + $0x28] sm:$0xff] %vm449, %v5646
        %5663 = vst.msk [vmem:[%s406 + $0x30] sm:$0xff] %vm449, %v5647
        %5664 = vst.msk [vmem:[%s406 + $0x38] sm:$0xff] %vm449, %v5648
        %5665 = vst.msk [vmem:[%s406 + $0x40] sm:$0xff] %vm449, %v5649
        %5666 = vst.msk [vmem:[%s406 + $0x48] sm:$0xff] %vm449, %v5650
        %5667 = vst.msk [vmem:[%s406 + $0x50] sm:$0xff] %vm449, %v5651
        %5668 = vst.msk [vmem:[%s406 + $0x58] sm:$0xff] %vm449, %v5652
        %5669 = vst.msk [vmem:[%s406 + $0x60] sm:$0xff] %vm449, %v5653
        %5670 = vst.msk [vmem:[%s406 + $0x68] sm:$0xff] %vm449, %v5654
        %5671 = vst.msk [vmem:[%s406 + $0x70] sm:$0xff] %vm449, %v5655
        %5672 = vst.msk [vmem:[%s406 + $0x78] sm:$0xff] %vm449, %v5656
        %s5673 = sand.u32 %s265, 1
        %s5674 = scalar_lea.sflag [#allocation5], %s5673
        %s5675 = sand.u32 %s265, 1
        %s5676 = smul.addr %s5675, 128
        %s5677 = scalar_lea.vmem [#allocation8], %s5676
        // Predicated region
        $region69: #{tpu_custom_call.1} parent=59 // pred_check
          %p5678 = pneg %p275
        $region70: #{tpu_custom_call.1} parent=59 // pred_check_branch
          %5680 = sbr.rel (%p5678) target = $region72
        $region71: #{tpu_custom_call.1} parent=59 // pred_region
          %s5681 = smul.u32 8, %s33
          %s5683 = ssub.s32 2048, 2048
          %5684 = vsyncadd %s5674, %s5683
          %s5685 = smul.addr %s5681, 2
          %s5686 = smul.addr %s32, 32
          %s5687 = sadd.s32 %s5685, %s5686
          %s5688 = smul.addr %s5687, 128
          %s5689 = scalar_lea.hbm %s10, %s5688
          %s5690 = sshll.u32 %s5677, 4
          %s5691 = int_to_ptr.vmem [resolvable:$true] %s5690
          %5696 = dma.vmem_to_hbm [thread:$0]  %s5691, 2048, %s5689, %s5674, 128, 128, 8
        $region72: #{tpu_custom_call.1} parent=59 // pred_fallthru
          _
      $region60: #{tpu_custom_call.1} parent=5 // pred_fallthru
        _
      %p5697 = scmp.le.s32.totalorder 2, %s23
      // Predicated region
      $region73: #{tpu_custom_call.1} parent=5 // pred_check
        %p5698 = pneg %p5697
      $region74: #{tpu_custom_call.1} parent=5 // pred_check_branch
        %5700 = sbr.rel (%p5698) target = $region76
      $region75: #{tpu_custom_call.1} parent=5 // pred_region
        %s5701 = ssub.s32 %s23, 2
        // Predicated region
        $region77: #{tpu_custom_call.1} parent=75 // pred_check
          %p5702 = pneg %p281
        $region78: #{tpu_custom_call.1} parent=75 // pred_check_branch
          %5704 = sbr.rel (%p5702) target = $region80
        $region79: #{tpu_custom_call.1} parent=75 // pred_region
          %s5705 = sand.u32 %s266, 1
          %s5706 = scalar_lea.sflag [#allocation5], %s5705
          %s5707 = sand.u32 %s266, 1
          %s5708 = smul.addr %s5707, 128
          %s5709 = scalar_lea.vmem [#allocation8], %s5708
          %5710 = dma.done %s5706, 2048
        $region80: #{tpu_custom_call.1} parent=75 // pred_fallthru
          _
      $region76: #{tpu_custom_call.1} parent=5 // pred_fallthru
        _
    $region6: #{tpu_custom_call.1} parent=1 // loop_footer
      %s27 = sadd.s32 1, %s23
    $region7: #{tpu_custom_call.1} parent=1 // loop_footer_branch
      %22 = sbr.rel target = $region3
    $region8: #{tpu_custom_call.1} parent=1 // loop_exit
      _
    %5711 = vsyncpa [#allocation4], 1
    %s5712 = scalar_lea.sflag [#allocation4], 1
    %5713 = vsyncpa %s5712, 1
    %5714 = vsyncpa [#allocation7], 1
    %5715 = vsyncpa [#allocation5], 1
    %s5716 = scalar_lea.sflag [#allocation5], 1
    %5717 = vsyncpa %s5716, 1

</llo_original>
